<compile_context>
chip_gen: v6e
topology: v6e:2x2x1
jax: 0.10.0
libtpu: 0.0.40
codegen_flags: <defaults>
</compile_context>

<pallas_src>
import jax
import jax.numpy as jnp
from jax.experimental import pallas as pl
from jax.experimental.pallas import tpu as pltpu

_LANE = 128
_EPS = 1e-5


def _double_conv_kernel(x_ref, w1_ref, b1_ref, w2_ref, b2_ref, o_ref, padA, padB):
    # x_ref : (1, H, W, Cin)         bf16
    # w1_ref: (9*Cin, Cmid)          bf16  (BN1 scale folded in)
    # b1_ref: (1, Cmid)              f32   (conv1 bias + BN1 shift folded)
    # w2_ref: (9*Cmid, Cop)          bf16  (BN2 scale folded, zero-padded to Cop)
    # b2_ref: (1, Cop)               f32
    # o_ref : (1, H*W, Cop)          f32   lane-dense output (Cop multiple of 128)
    # padA  : VMEM (H+2, W+2, Cin)   bf16  zero-padded conv1 input
    # padB  : VMEM (H+2, W+2, Cmid)  bf16  zero-padded conv2 input
    _, H, W, _ = x_ref.shape
    Cmid = padB.shape[-1]

    def zero_border(pad):
        # Only the 1-pixel border; the interior is fully overwritten each step.
        C = pad.shape[-1]
        z_row = jnp.zeros((1, W + 2, C), pad.dtype)
        z_col = jnp.zeros((H + 2, 1, C), pad.dtype)
        pad[0:1, :, :] = z_row
        pad[H + 1:H + 2, :, :] = z_row
        pad[:, 0:1, :] = z_col
        pad[:, W + 1:W + 2, :] = z_col

    def im2col(pad):
        # (H, W, 9*C) -> (H*W, 9*C); tap order (dy, dx, c) matches the
        # (3, 3, C, Cout) -> (9*C, Cout) weight reshape done in the wrapper.
        C = pad.shape[-1]
        patches = jnp.concatenate(
            [pad[dy:dy + H, dx:dx + W, :] for dy in range(3) for dx in range(3)],
            axis=-1)
        return patches.reshape(H * W, 9 * C)

    # ---- conv1 (3x3, pad 1) + folded BN1 + ReLU : one bf16 matmul, K = 9*Cin ----
    zero_border(padA)
    padA[1:H + 1, 1:W + 1, :] = x_ref[0]
    acc1 = jnp.dot(im2col(padA), w1_ref[...], preferred_element_type=jnp.float32)
    y1 = jnp.maximum(acc1 + b1_ref[...], 0.0)                       # (H*W, Cmid) f32

    # ---- conv2 (3x3, pad 1) + folded BN2 + ReLU : one bf16 matmul, K = 9*Cmid ----
    zero_border(padB)
    padB[1:H + 1, 1:W + 1, :] = y1.reshape(H, W, Cmid).astype(padB.dtype)
    acc2 = jnp.dot(im2col(padB), w2_ref[...], preferred_element_type=jnp.float32)
    o_ref[0] = jnp.maximum(acc2 + b2_ref[...], 0.0).astype(o_ref.dtype)


def double_conv_forward(x_nchw, params):
    """DoubleConv.forward. Input NCHW (like PyTorch), output NCHW."""
    N, Cin, H, W = x_nchw.shape
    Cout = params["w1_hwio"].shape[-1]
    Cop = pl.cdiv(Cout, _LANE) * _LANE          # lane-dense padded output channels

    # Single layout/cast op: NCHW -> NHWC, bf16 operands for the MXU.
    x = jnp.transpose(x_nchw, (0, 2, 3, 1)).astype(jnp.bfloat16)

    # Fold eval-mode BN scale into the conv weights (trace time, tiny tensors);
    # pad conv2's output channels so the kernel's output block is lane-dense.
    w1 = (params["w1_hwio"] * params["s1"]).reshape(9 * Cin, Cout).astype(jnp.bfloat16)
    w2 = (params["w2_hwio"] * params["s2"]).reshape(9 * Cout, Cout)
    w2 = jnp.pad(w2, ((0, 0), (0, Cop - Cout))).astype(jnp.bfloat16)
    b1 = params["b1"].reshape(1, Cout).astype(jnp.float32)
    b2 = jnp.pad(params["b2"].reshape(1, Cout), ((0, 0), (0, Cop - Cout))).astype(jnp.float32)

    out = pl.pallas_call(
        _double_conv_kernel,
        out_shape=jax.ShapeDtypeStruct((N, H * W, Cop), jnp.float32),
        grid=(N,),
        in_specs=[
            pl.BlockSpec((1, H, W, Cin), lambda n: (n, 0, 0, 0)),
            pl.BlockSpec((9 * Cin, Cout), lambda n: (0, 0)),
            pl.BlockSpec((1, Cout), lambda n: (0, 0)),
            pl.BlockSpec((9 * Cout, Cop), lambda n: (0, 0)),
            pl.BlockSpec((1, Cop), lambda n: (0, 0)),
        ],
        out_specs=pl.BlockSpec((1, H * W, Cop), lambda n: (n, 0, 0)),
        scratch_shapes=[
            pltpu.VMEM((H + 2, W + 2, Cin), jnp.bfloat16),
            pltpu.VMEM((H + 2, W + 2, Cout), jnp.bfloat16),
        ],
        compiler_params=pltpu.CompilerParams(
            dimension_semantics=("parallel",),
            vmem_limit_bytes=32 * 1024 * 1024),
    )(x, w1, b1, w2, b2)

    out = out[:, :, :Cout].reshape(N, H, W, Cout)
    return jnp.transpose(out, (0, 3, 1, 2))                          # NCHW


# ---------------- deterministic parameter construction + reference ----------------


def make_params(key, in_channels, out_channels):
    ks = jax.random.split(key, 12)

    def u(k, shape, lo, hi):
        return jax.random.uniform(k, shape, jnp.float32, lo, hi)

    p = {}
    # conv weights in HWIO layout (PyTorch OIHW would be transposed to this)
    p["w1_hwio"] = 0.2 * jax.random.normal(ks[0], (3, 3, in_channels, out_channels), jnp.float32)
    p["cb1"] = 0.1 * jax.random.normal(ks[1], (out_channels,), jnp.float32)
    p["g1"] = u(ks[2], (out_channels,), 0.5, 1.5)
    p["be1"] = 0.1 * jax.random.normal(ks[3], (out_channels,), jnp.float32)
    p["m1"] = 0.1 * jax.random.normal(ks[4], (out_channels,), jnp.float32)
    p["v1"] = u(ks[5], (out_channels,), 0.5, 1.5)

    p["w2_hwio"] = 0.2 * jax.random.normal(ks[6], (3, 3, out_channels, out_channels), jnp.float32)
    p["cb2"] = 0.1 * jax.random.normal(ks[7], (out_channels,), jnp.float32)
    p["g2"] = u(ks[8], (out_channels,), 0.5, 1.5)
    p["be2"] = 0.1 * jax.random.normal(ks[9], (out_channels,), jnp.float32)
    p["m2"] = 0.1 * jax.random.normal(ks[10], (out_channels,), jnp.float32)
    p["v2"] = u(ks[11], (out_channels,), 0.5, 1.5)

    # fold conv-bias + BatchNorm (eval mode) into per-channel scale / bias
    s1 = p["g1"] / jnp.sqrt(p["v1"] + _EPS)
    s2 = p["g2"] / jnp.sqrt(p["v2"] + _EPS)
    p["s1"] = s1
    p["b1"] = s1 * (p["cb1"] - p["m1"]) + p["be1"]
    p["s2"] = s2
    p["b2"] = s2 * (p["cb2"] - p["m2"]) + p["be2"]
    return p


def ref_forward(x_nchw, p):
    """Pure-JAX reference matching PyTorch DoubleConv (eval-mode BN)."""
    x = jnp.transpose(x_nchw, (0, 2, 3, 1))

    def conv_bn_relu(x, w_hwio, cb, g, be, m, v):
        y = jax.lax.conv_general_dilated(
            x, w_hwio, (1, 1), "SAME",
            dimension_numbers=("NHWC", "HWIO", "NHWC"))
        y = y + cb
        y = g * (y - m) / jnp.sqrt(v + _EPS) + be
        return jnp.maximum(y, 0.0)

    y = conv_bn_relu(x, p["w1_hwio"], p["cb1"], p["g1"], p["be1"], p["m1"], p["v1"])
    y = conv_bn_relu(y, p["w2_hwio"], p["cb2"], p["g2"], p["be2"], p["m2"], p["v2"])
    return jnp.transpose(y, (0, 3, 1, 2))


if __name__ == "__main__":
    key = jax.random.PRNGKey(0)
    kx, kp = jax.random.split(key)

    N, Cin, H, W = 2, 4, 16, 16
    Cout = 8

    x = jax.random.normal(kx, (N, Cin, H, W), jnp.float32)
    params = make_params(kp, Cin, Cout)

    fwd = jax.jit(double_conv_forward)   # fuse layout transposes / weight folding around the kernel
    out = fwd(x, params)
    out = jax.block_until_ready(out)

    ref = ref_forward(x, params)
    assert out.shape == (N, Cout, H, W), out.shape
    # bf16 matmul operands (f32 accumulation) -> slightly looser tolerance than pure f32
    if not bool(jnp.allclose(out, ref, rtol=1e-1, atol=1e-1)):
        err = float(jnp.max(jnp.abs(out - ref)))
        raise AssertionError(f"mismatch vs reference, max abs err = {err}")

    print("KERNEL_OK")
</pallas_src>

<mosaic_0001>
module attributes {stable_mosaic.version = 11 : i64} {
  func.func @_double_conv_kernel(%arg0: i32, %arg1: memref<1x16x16x4xbf16, #tpu.memory_space<vmem>>, %arg2: memref<36x8xbf16, #tpu.memory_space<vmem>>, %arg3: memref<1x8xf32, #tpu.memory_space<vmem>>, %arg4: memref<72x128xbf16, #tpu.memory_space<vmem>>, %arg5: memref<1x128xf32, #tpu.memory_space<vmem>>, %arg6: memref<1x256x128xf32, #tpu.memory_space<vmem>>, %arg7: memref<18x18x4xbf16, #tpu.memory_space<vmem>>, %arg8: memref<18x18x8xbf16, #tpu.memory_space<vmem>>) attributes {dimension_semantics = [#tpu.dimension_semantics<parallel>], iteration_bounds = array<i64: 2>, scalar_prefetch = 0 : i64, scratch_operands = 2 : i64, tpu.core_type = #tpu.core_type<tc>, window_params = [{transform_indices = @transform_0, window_bounds = array<i64: 1, 16, 16, 4>}, {pipeline_mode = #tpu.pipeline_mode<synchronous>, transform_indices = @transform_1, window_bounds = array<i64: 36, 8>}, {pipeline_mode = #tpu.pipeline_mode<synchronous>, transform_indices = @transform_2, window_bounds = array<i64: 1, 8>}, {pipeline_mode = #tpu.pipeline_mode<synchronous>, transform_indices = @transform_3, window_bounds = array<i64: 72, 128>}, {pipeline_mode = #tpu.pipeline_mode<synchronous>, transform_indices = @transform_4, window_bounds = array<i64: 1, 128>}, {transform_indices = @transform_5, window_bounds = array<i64: 1, 256, 128>}]} {
    %cst = arith.constant 0.000000e+00 : bf16
    %0 = vector.broadcast %cst : bf16 to vector<1x18x4xbf16>
    %cst_0 = arith.constant 0.000000e+00 : bf16
    %1 = vector.broadcast %cst_0 : bf16 to vector<18x1x4xbf16>
    %c0 = arith.constant 0 : index
    %c0_1 = arith.constant 0 : index
    %c0_2 = arith.constant 0 : index
    %2 = vector.load %arg7[%c0, %c0_1, %c0_2] : memref<18x18x4xbf16, #tpu.memory_space<vmem>>, vector<1x18x4xbf16>
    tpu.vector_store %arg7[%c0, %c0_1, %c0_2], %0 {strides = array<i32>} : memref<18x18x4xbf16, #tpu.memory_space<vmem>>, vector<1x18x4xbf16>,
    %c17 = arith.constant 17 : index
    %c0_3 = arith.constant 0 : index
    %c0_4 = arith.constant 0 : index
    %3 = vector.load %arg7[%c17, %c0_3, %c0_4] : memref<18x18x4xbf16, #tpu.memory_space<vmem>>, vector<1x18x4xbf16>
    tpu.vector_store %arg7[%c17, %c0_3, %c0_4], %0 {strides = array<i32>} : memref<18x18x4xbf16, #tpu.memory_space<vmem>>, vector<1x18x4xbf16>,
    %c0_5 = arith.constant 0 : index
    %c0_6 = arith.constant 0 : index
    %c0_7 = arith.constant 0 : index
    %4 = vector.load %arg7[%c0_5, %c0_6, %c0_7] : memref<18x18x4xbf16, #tpu.memory_space<vmem>>, vector<18x1x4xbf16>
    tpu.vector_store %arg7[%c0_5, %c0_6, %c0_7], %1 {strides = array<i32>} : memref<18x18x4xbf16, #tpu.memory_space<vmem>>, vector<18x1x4xbf16>,
    %c0_8 = arith.constant 0 : index
    %c17_9 = arith.constant 17 : index
    %c0_10 = arith.constant 0 : index
    %5 = vector.load %arg7[%c0_8, %c17_9, %c0_10] : memref<18x18x4xbf16, #tpu.memory_space<vmem>>, vector<18x1x4xbf16>
    tpu.vector_store %arg7[%c0_8, %c17_9, %c0_10], %1 {strides = array<i32>} : memref<18x18x4xbf16, #tpu.memory_space<vmem>>, vector<18x1x4xbf16>,
    %c0_11 = arith.constant 0 : index
    %c0_12 = arith.constant 0 : index
    %c0_13 = arith.constant 0 : index
    %c0_14 = arith.constant 0 : index
    %6 = vector.load %arg1[%c0_11, %c0_12, %c0_13, %c0_14] : memref<1x16x16x4xbf16, #tpu.memory_space<vmem>>, vector<1x16x16x4xbf16>
    %7 = vector.shape_cast %6 : vector<1x16x16x4xbf16> to vector<16x16x4xbf16>
    %c1 = arith.constant 1 : index
    %c1_15 = arith.constant 1 : index
    %c0_16 = arith.constant 0 : index
    %8 = vector.load %arg7[%c1, %c1_15, %c0_16] : memref<18x18x4xbf16, #tpu.memory_space<vmem>>, vector<16x16x4xbf16>
    tpu.vector_store %arg7[%c1, %c1_15, %c0_16], %7 {strides = array<i32>} : memref<18x18x4xbf16, #tpu.memory_space<vmem>>, vector<16x16x4xbf16>,
    %c0_17 = arith.constant 0 : index
    %c0_18 = arith.constant 0 : index
    %c0_19 = arith.constant 0 : index
    %9 = vector.load %arg7[%c0_17, %c0_18, %c0_19] : memref<18x18x4xbf16, #tpu.memory_space<vmem>>, vector<16x16x4xbf16>
    %c0_20 = arith.constant 0 : index
    %c1_21 = arith.constant 1 : index
    %c0_22 = arith.constant 0 : index
    %10 = vector.load %arg7[%c0_20, %c1_21, %c0_22] : memref<18x18x4xbf16, #tpu.memory_space<vmem>>, vector<16x16x4xbf16>
    %c0_23 = arith.constant 0 : index
    %c2 = arith.constant 2 : index
    %c0_24 = arith.constant 0 : index
    %11 = vector.load %arg7[%c0_23, %c2, %c0_24] : memref<18x18x4xbf16, #tpu.memory_space<vmem>>, vector<16x16x4xbf16>
    %c1_25 = arith.constant 1 : index
    %c0_26 = arith.constant 0 : index
    %c0_27 = arith.constant 0 : index
    %12 = vector.load %arg7[%c1_25, %c0_26, %c0_27] : memref<18x18x4xbf16, #tpu.memory_space<vmem>>, vector<16x16x4xbf16>
    %c1_28 = arith.constant 1 : index
    %c1_29 = arith.constant 1 : index
    %c0_30 = arith.constant 0 : index
    %13 = vector.load %arg7[%c1_28, %c1_29, %c0_30] : memref<18x18x4xbf16, #tpu.memory_space<vmem>>, vector<16x16x4xbf16>
    %c1_31 = arith.constant 1 : index
    %c2_32 = arith.constant 2 : index
    %c0_33 = arith.constant 0 : index
    %14 = vector.load %arg7[%c1_31, %c2_32, %c0_33] : memref<18x18x4xbf16, #tpu.memory_space<vmem>>, vector<16x16x4xbf16>
    %c2_34 = arith.constant 2 : index
    %c0_35 = arith.constant 0 : index
    %c0_36 = arith.constant 0 : index
    %15 = vector.load %arg7[%c2_34, %c0_35, %c0_36] : memref<18x18x4xbf16, #tpu.memory_space<vmem>>, vector<16x16x4xbf16>
    %c2_37 = arith.constant 2 : index
    %c1_38 = arith.constant 1 : index
    %c0_39 = arith.constant 0 : index
    %16 = vector.load %arg7[%c2_37, %c1_38, %c0_39] : memref<18x18x4xbf16, #tpu.memory_space<vmem>>, vector<16x16x4xbf16>
    %c2_40 = arith.constant 2 : index
    %c2_41 = arith.constant 2 : index
    %c0_42 = arith.constant 0 : index
    %17 = vector.load %arg7[%c2_40, %c2_41, %c0_42] : memref<18x18x4xbf16, #tpu.memory_space<vmem>>, vector<16x16x4xbf16>
    %18 = tpu.concatenate %9, %10, %11, %12, %13, %14, %15, %16, %17 in 2 : vector<16x16x4xbf16>, vector<16x16x4xbf16>, vector<16x16x4xbf16>, vector<16x16x4xbf16>, vector<16x16x4xbf16>, vector<16x16x4xbf16>, vector<16x16x4xbf16>, vector<16x16x4xbf16>, vector<16x16x4xbf16> -> vector<16x16x36xbf16>
    %19 = vector.shape_cast %18 : vector<16x16x36xbf16> to vector<256x36xbf16>
    %c0_43 = arith.constant 0 : index
    %c0_44 = arith.constant 0 : index
    %20 = vector.load %arg2[%c0_43, %c0_44] : memref<36x8xbf16, #tpu.memory_space<vmem>>, vector<36x8xbf16>
    %cst_45 = arith.constant dense<0.000000e+00> : vector<256x8xf32>
    %21 = tpu.matmul %19, %20, %cst_45 {dimension_numbers = #tpu.dot_dimension_numbers<[1], [0], [0], [1], [0, 0, 1, 1], [], []>} : vector<256x36xbf16>, vector<36x8xbf16>, vector<256x8xf32> -> vector<256x8xf32>
    %c0_46 = arith.constant 0 : index
    %c0_47 = arith.constant 0 : index
    %22 = vector.load %arg3[%c0_46, %c0_47] : memref<1x8xf32, #tpu.memory_space<vmem>>, vector<1x8xf32>
    %23 = vector.broadcast %22 : vector<1x8xf32> to vector<256x8xf32>
    %24 = arith.addf %21, %23 : vector<256x8xf32>
    %cst_48 = arith.constant 0.000000e+00 : f32
    %25 = vector.broadcast %cst_48 : f32 to vector<256x8xf32>
    %26 = arith.maximumf %24, %25 : vector<256x8xf32>
    %cst_49 = arith.constant 0.000000e+00 : bf16
    %27 = vector.broadcast %cst_49 : bf16 to vector<1x18x8xbf16>
    %cst_50 = arith.constant 0.000000e+00 : bf16
    %28 = vector.broadcast %cst_50 : bf16 to vector<18x1x8xbf16>
    %c0_51 = arith.constant 0 : index
    %c0_52 = arith.constant 0 : index
    %c0_53 = arith.constant 0 : index
    %29 = vector.load %arg8[%c0_51, %c0_52, %c0_53] : memref<18x18x8xbf16, #tpu.memory_space<vmem>>, vector<1x18x8xbf16>
    tpu.vector_store %arg8[%c0_51, %c0_52, %c0_53], %27 {strides = array<i32>} : memref<18x18x8xbf16, #tpu.memory_space<vmem>>, vector<1x18x8xbf16>,
    %c17_54 = arith.constant 17 : index
    %c0_55 = arith.constant 0 : index
    %c0_56 = arith.constant 0 : index
    %30 = vector.load %arg8[%c17_54, %c0_55, %c0_56] : memref<18x18x8xbf16, #tpu.memory_space<vmem>>, vector<1x18x8xbf16>
    tpu.vector_store %arg8[%c17_54, %c0_55, %c0_56], %27 {strides = array<i32>} : memref<18x18x8xbf16, #tpu.memory_space<vmem>>, vector<1x18x8xbf16>,
    %c0_57 = arith.constant 0 : index
    %c0_58 = arith.constant 0 : index
    %c0_59 = arith.constant 0 : index
    %31 = vector.load %arg8[%c0_57, %c0_58, %c0_59] : memref<18x18x8xbf16, #tpu.memory_space<vmem>>, vector<18x1x8xbf16>
    tpu.vector_store %arg8[%c0_57, %c0_58, %c0_59], %28 {strides = array<i32>} : memref<18x18x8xbf16, #tpu.memory_space<vmem>>, vector<18x1x8xbf16>,
    %c0_60 = arith.constant 0 : index
    %c17_61 = arith.constant 17 : index
    %c0_62 = arith.constant 0 : index
    %32 = vector.load %arg8[%c0_60, %c17_61, %c0_62] : memref<18x18x8xbf16, #tpu.memory_space<vmem>>, vector<18x1x8xbf16>
    tpu.vector_store %arg8[%c0_60, %c17_61, %c0_62], %28 {strides = array<i32>} : memref<18x18x8xbf16, #tpu.memory_space<vmem>>, vector<18x1x8xbf16>,
    %33 = vector.shape_cast %26 : vector<256x8xf32> to vector<16x16x8xf32>
    %34 = arith.truncf %33 : vector<16x16x8xf32> to vector<16x16x8xbf16>
    %c1_63 = arith.constant 1 : index
    %c1_64 = arith.constant 1 : index
    %c0_65 = arith.constant 0 : index
    %35 = vector.load %arg8[%c1_63, %c1_64, %c0_65] : memref<18x18x8xbf16, #tpu.memory_space<vmem>>, vector<16x16x8xbf16>
    tpu.vector_store %arg8[%c1_63, %c1_64, %c0_65], %34 {strides = array<i32>} : memref<18x18x8xbf16, #tpu.memory_space<vmem>>, vector<16x16x8xbf16>,
    %c0_66 = arith.constant 0 : index
    %c0_67 = arith.constant 0 : index
    %c0_68 = arith.constant 0 : index
    %36 = vector.load %arg8[%c0_66, %c0_67, %c0_68] : memref<18x18x8xbf16, #tpu.memory_space<vmem>>, vector<16x16x8xbf16>
    %c0_69 = arith.constant 0 : index
    %c1_70 = arith.constant 1 : index
    %c0_71 = arith.constant 0 : index
    %37 = vector.load %arg8[%c0_69, %c1_70, %c0_71] : memref<18x18x8xbf16, #tpu.memory_space<vmem>>, vector<16x16x8xbf16>
    %c0_72 = arith.constant 0 : index
    %c2_73 = arith.constant 2 : index
    %c0_74 = arith.constant 0 : index
    %38 = vector.load %arg8[%c0_72, %c2_73, %c0_74] : memref<18x18x8xbf16, #tpu.memory_space<vmem>>, vector<16x16x8xbf16>
    %c1_75 = arith.constant 1 : index
    %c0_76 = arith.constant 0 : index
    %c0_77 = arith.constant 0 : index
    %39 = vector.load %arg8[%c1_75, %c0_76, %c0_77] : memref<18x18x8xbf16, #tpu.memory_space<vmem>>, vector<16x16x8xbf16>
    %c1_78 = arith.constant 1 : index
    %c1_79 = arith.constant 1 : index
    %c0_80 = arith.constant 0 : index
    %40 = vector.load %arg8[%c1_78, %c1_79, %c0_80] : memref<18x18x8xbf16, #tpu.memory_space<vmem>>, vector<16x16x8xbf16>
    %c1_81 = arith.constant 1 : index
    %c2_82 = arith.constant 2 : index
    %c0_83 = arith.constant 0 : index
    %41 = vector.load %arg8[%c1_81, %c2_82, %c0_83] : memref<18x18x8xbf16, #tpu.memory_space<vmem>>, vector<16x16x8xbf16>
    %c2_84 = arith.constant 2 : index
    %c0_85 = arith.constant 0 : index
    %c0_86 = arith.constant 0 : index
    %42 = vector.load %arg8[%c2_84, %c0_85, %c0_86] : memref<18x18x8xbf16, #tpu.memory_space<vmem>>, vector<16x16x8xbf16>
    %c2_87 = arith.constant 2 : index
    %c1_88 = arith.constant 1 : index
    %c0_89 = arith.constant 0 : index
    %43 = vector.load %arg8[%c2_87, %c1_88, %c0_89] : memref<18x18x8xbf16, #tpu.memory_space<vmem>>, vector<16x16x8xbf16>
    %c2_90 = arith.constant 2 : index
    %c2_91 = arith.constant 2 : index
    %c0_92 = arith.constant 0 : index
    %44 = vector.load %arg8[%c2_90, %c2_91, %c0_92] : memref<18x18x8xbf16, #tpu.memory_space<vmem>>, vector<16x16x8xbf16>
    %45 = tpu.concatenate %36, %37, %38, %39, %40, %41, %42, %43, %44 in 2 : vector<16x16x8xbf16>, vector<16x16x8xbf16>, vector<16x16x8xbf16>, vector<16x16x8xbf16>, vector<16x16x8xbf16>, vector<16x16x8xbf16>, vector<16x16x8xbf16>, vector<16x16x8xbf16>, vector<16x16x8xbf16> -> vector<16x16x72xbf16>
    %46 = vector.shape_cast %45 : vector<16x16x72xbf16> to vector<256x72xbf16>
    %c0_93 = arith.constant 0 : index
    %c0_94 = arith.constant 0 : index
    %47 = vector.load %arg4[%c0_93, %c0_94] : memref<72x128xbf16, #tpu.memory_space<vmem>>, vector<72x128xbf16>
    %cst_95 = arith.constant dense<0.000000e+00> : vector<256x128xf32>
    %48 = tpu.matmul %46, %47, %cst_95 {dimension_numbers = #tpu.dot_dimension_numbers<[1], [0], [0], [1], [0, 0, 1, 1], [], []>} : vector<256x72xbf16>, vector<72x128xbf16>, vector<256x128xf32> -> vector<256x128xf32>
    %c0_96 = arith.constant 0 : index
    %c0_97 = arith.constant 0 : index
    %49 = vector.load %arg5[%c0_96, %c0_97] : memref<1x128xf32, #tpu.memory_space<vmem>>, vector<1x128xf32>
    %50 = vector.broadcast %49 : vector<1x128xf32> to vector<256x128xf32>
    %51 = arith.addf %48, %50 : vector<256x128xf32>
    %cst_98 = arith.constant 0.000000e+00 : f32
    %52 = vector.broadcast %cst_98 : f32 to vector<256x128xf32>
    %53 = arith.maximumf %51, %52 : vector<256x128xf32>
    %c0_99 = arith.constant 0 : index
    %c0_100 = arith.constant 0 : index
    %c0_101 = arith.constant 0 : index
    %54 = vector.load %arg6[%c0_99, %c0_100, %c0_101] : memref<1x256x128xf32, #tpu.memory_space<vmem>>, vector<1x256x128xf32>
    %55 = vector.shape_cast %54 : vector<1x256x128xf32> to vector<256x128xf32>
    %56 = vector.shape_cast %53 : vector<256x128xf32> to vector<1x256x128xf32>
    tpu.vector_store %arg6[%c0_99, %c0_100, %c0_101], %56 {strides = array<i32>} : memref<1x256x128xf32, #tpu.memory_space<vmem>>, vector<1x256x128xf32>,
    return
  }
  func.func @transform_0(%arg0: i32) -> (i32, i32, i32, i32) {
    %c0_i32 = arith.constant 0 : i32
    %c0_i32_0 = arith.constant 0 : i32
    %c0_i32_1 = arith.constant 0 : i32
    %c0_i32_2 = arith.constant 0 : i32
    return %arg0, %c0_i32, %c0_i32_0, %c0_i32_1 : i32, i32, i32, i32
  }
  func.func @transform_1(%arg0: i32) -> (i32, i32) {
    %c0_i32 = arith.constant 0 : i32
    %c0_i32_0 = arith.constant 0 : i32
    %c0_i32_1 = arith.constant 0 : i32
    return %c0_i32, %c0_i32_0 : i32, i32
  }
  func.func @transform_2(%arg0: i32) -> (i32, i32) {
    %c0_i32 = arith.constant 0 : i32
    %c0_i32_0 = arith.constant 0 : i32
    %c0_i32_1 = arith.constant 0 : i32
    return %c0_i32, %c0_i32_0 : i32, i32
  }
  func.func @transform_3(%arg0: i32) -> (i32, i32) {
    %c0_i32 = arith.constant 0 : i32
    %c0_i32_0 = arith.constant 0 : i32
    %c0_i32_1 = arith.constant 0 : i32
    return %c0_i32, %c0_i32_0 : i32, i32
  }
  func.func @transform_4(%arg0: i32) -> (i32, i32) {
    %c0_i32 = arith.constant 0 : i32
    %c0_i32_0 = arith.constant 0 : i32
    %c0_i32_1 = arith.constant 0 : i32
    return %c0_i32, %c0_i32_0 : i32, i32
  }
  func.func @transform_5(%arg0: i32) -> (i32, i32, i32) {
    %c0_i32 = arith.constant 0 : i32
    %c0_i32_0 = arith.constant 0 : i32
    %c0_i32_1 = arith.constant 0 : i32
    return %arg0, %c0_i32, %c0_i32_0 : i32, i32, i32
  }
}

</mosaic_0001>

<llo_original>
// kernel: double_conv_forward.1
$region0: #{double_conv_forward.1}
  #allocation0 [shape = 'u32[]', space=smem, size = 0x4, offset = 0x4, fixed_abs, tag = 'smem constant byte address 0x4 - core index']
  #allocation1 [shape = 'u32[144,128]{1,0:T(1,128)}', space=vmem, size = 0x12000, scoped, tag = 'internal scratch']
  #allocation2 [shape = 'bf16[18,18,4]{2,1,0:T(8,128)(2,1)}', space=vmem, size = 0x1b000, scoped, tag = 'scratch operand']
  #allocation3 [shape = 'bf16[18,18,8]{2,1,0:T(8,128)(2,1)}', space=vmem, size = 0x1b000, scoped, tag = 'scratch operand']
  %s0 = inlined_call_operand.vmem [shape: bf16[2,16,16,4], index: 0, kind: input, shape index: {}]
  %s1 = inlined_call_operand.vmem [shape: bf16[36,8], index: 1, kind: input, shape index: {}]
  %s2 = inlined_call_operand.vmem [shape: f32[1,8], index: 2, kind: input, shape index: {}]
  %s3 = inlined_call_operand.vmem [shape: bf16[72,128], index: 3, kind: input, shape index: {}]
  %s4 = inlined_call_operand.vmem [shape: f32[1,128], index: 4, kind: input, shape index: {}]
  %s5 = inlined_call_operand.vmem [shape: f32[2,256,128], index: 5, kind: output, shape index: {}]
  %s6 = sld [smem:[#allocation0]]
  $region53: #{double_conv_forward.1} parent=0
    _
  %s8 = ssub.s32 1, %s6
  %s9 = scalar_select 0, %s8, %s6
  loop: start=0, step=1, limit=4
  $region2: #{double_conv_forward.1} parent=0 // loop_pre_header
    _
  $region3: #{double_conv_forward.1} parent=0 // loop_header
    %s11 = sphi 0, %s15
    %p12 = scmp.ge.s32.totalorder %s11, 4
    %s21 = sphi 0, %s23
    %s24 = sphi 0, %s21
    %s25 = sphi 0, %s24
    %s41 = sphi 0, %s25
    %s45 = sphi 0, %s45
    %s47 = sphi 0, %s45
    %s48 = sphi 0, %s47
    %s62 = sphi 0, %s48
    %s66 = sphi 0, %s66
    %s68 = sphi 0, %s66
    %s69 = sphi 0, %s68
    %s83 = sphi 0, %s69
    %s87 = sphi 0, %s87
    %s89 = sphi 0, %s87
    %s90 = sphi 0, %s89
    %s104 = sphi 0, %s90
    %s108 = sphi 0, %s108
    %s110 = sphi 0, %s108
    %s111 = sphi 0, %s110
    %s125 = sphi 0, %s111
    %s131 = sphi 0, %s133
    %s134 = sphi 0, %s131
    %s135 = sphi 0, %s134
    %s151 = sphi 0, %s135
  $region4: #{double_conv_forward.1} parent=0 // loop_header_branch
    %14 = sbr.rel (%p12) target = $region8
  $region5: #{double_conv_forward.1} parent=0 // loop_body
    %s16 = ssub.s32 %s11, 1
    %s17 = ssub.s32 %s11, 2
    %s18 = sadd.s32 %s11, 1
    %s19 = ssub.s32 %s11, %s18
    %p20 = scmp.eq.s32.totalorder %s19, 0
    %s22 = sadd.s32 %s21, 1
    %s23 = scalar_select %p20, %s21, %s22
    %p26 = pneg %p20
    %p27 = scmp.eq.s32.totalorder %s11, 1
    %p28 = por %p26, %p27
    %p29 = scmp.ne.s32.totalorder %s21, %s24
    %p30 = scmp.eq.s32.totalorder %s11, 0
    %p31 = por %p29, %p30
    %p32 = scmp.ne.s32.totalorder %s21, %s24
    %p33 = scmp.eq.s32.totalorder %s16, 1
    %p34 = por %p32, %p33
    %p35 = scmp.ne.s32.totalorder %s24, %s25
    %p36 = scmp.eq.s32.totalorder %s16, 0
    %p37 = por %p35, %p36
    %p38 = scmp.ne.s32.totalorder %s24, %s25
    %p39 = scmp.eq.s32.totalorder %s17, 1
    %p40 = por %p38, %p39
    %p42 = scmp.ne.s32.totalorder %s25, %s41
    %p43 = scmp.eq.s32.totalorder %s17, 0
    %p44 = por %p42, %p43
    %s46 = sadd.s32 %s45, 1
    %p49 = scmp.eq.s32.totalorder %s11, 1
    %p50 = scmp.ne.s32.totalorder %s45, %s47
    %p51 = scmp.eq.s32.totalorder %s11, 0
    %p52 = por %p50, %p51
    %p53 = scmp.ne.s32.totalorder %s45, %s47
    %p54 = scmp.eq.s32.totalorder %s16, 1
    %p55 = por %p53, %p54
    %p56 = scmp.ne.s32.totalorder %s47, %s48
    %p57 = scmp.eq.s32.totalorder %s16, 0
    %p58 = por %p56, %p57
    %p59 = scmp.ne.s32.totalorder %s47, %s48
    %p60 = scmp.eq.s32.totalorder %s17, 1
    %p61 = por %p59, %p60
    %p63 = scmp.ne.s32.totalorder %s48, %s62
    %p64 = scmp.eq.s32.totalorder %s17, 0
    %p65 = por %p63, %p64
    %s67 = sadd.s32 %s66, 1
    %p70 = scmp.eq.s32.totalorder %s11, 1
    %p71 = scmp.ne.s32.totalorder %s66, %s68
    %p72 = scmp.eq.s32.totalorder %s11, 0
    %p73 = por %p71, %p72
    %p74 = scmp.ne.s32.totalorder %s66, %s68
    %p75 = scmp.eq.s32.totalorder %s16, 1
    %p76 = por %p74, %p75
    %p77 = scmp.ne.s32.totalorder %s68, %s69
    %p78 = scmp.eq.s32.totalorder %s16, 0
    %p79 = por %p77, %p78
    %p80 = scmp.ne.s32.totalorder %s68, %s69
    %p81 = scmp.eq.s32.totalorder %s17, 1
    %p82 = por %p80, %p81
    %p84 = scmp.ne.s32.totalorder %s69, %s83
    %p85 = scmp.eq.s32.totalorder %s17, 0
    %p86 = por %p84, %p85
    %s88 = sadd.s32 %s87, 1
    %p91 = scmp.eq.s32.totalorder %s11, 1
    %p92 = scmp.ne.s32.totalorder %s87, %s89
    %p93 = scmp.eq.s32.totalorder %s11, 0
    %p94 = por %p92, %p93
    %p95 = scmp.ne.s32.totalorder %s87, %s89
    %p96 = scmp.eq.s32.totalorder %s16, 1
    %p97 = por %p95, %p96
    %p98 = scmp.ne.s32.totalorder %s89, %s90
    %p99 = scmp.eq.s32.totalorder %s16, 0
    %p100 = por %p98, %p99
    %p101 = scmp.ne.s32.totalorder %s89, %s90
    %p102 = scmp.eq.s32.totalorder %s17, 1
    %p103 = por %p101, %p102
    %p105 = scmp.ne.s32.totalorder %s90, %s104
    %p106 = scmp.eq.s32.totalorder %s17, 0
    %p107 = por %p105, %p106
    %s109 = sadd.s32 %s108, 1
    %p112 = scmp.eq.s32.totalorder %s11, 1
    %p113 = scmp.ne.s32.totalorder %s108, %s110
    %p114 = scmp.eq.s32.totalorder %s11, 0
    %p115 = por %p113, %p114
    %p116 = scmp.ne.s32.totalorder %s108, %s110
    %p117 = scmp.eq.s32.totalorder %s16, 1
    %p118 = por %p116, %p117
    %p119 = scmp.ne.s32.totalorder %s110, %s111
    %p120 = scmp.eq.s32.totalorder %s16, 0
    %p121 = por %p119, %p120
    %p122 = scmp.ne.s32.totalorder %s110, %s111
    %p123 = scmp.eq.s32.totalorder %s17, 1
    %p124 = por %p122, %p123
    %p126 = scmp.ne.s32.totalorder %s111, %s125
    %p127 = scmp.eq.s32.totalorder %s17, 0
    %p128 = por %p126, %p127
    %s129 = ssub.s32 %s11, %s18
    %p130 = scmp.eq.s32.totalorder %s129, 0
    %s132 = sadd.s32 %s131, 1
    %s133 = scalar_select %p130, %s131, %s132
    %p136 = pneg %p130
    %p137 = scmp.eq.s32.totalorder %s11, 1
    %p138 = por %p136, %p137
    %p139 = scmp.ne.s32.totalorder %s131, %s134
    %p140 = scmp.eq.s32.totalorder %s11, 0
    %p141 = por %p139, %p140
    %p142 = scmp.ne.s32.totalorder %s131, %s134
    %p143 = scmp.eq.s32.totalorder %s16, 1
    %p144 = por %p142, %p143
    %p145 = scmp.ne.s32.totalorder %s134, %s135
    %p146 = scmp.eq.s32.totalorder %s16, 0
    %p147 = por %p145, %p146
    %p148 = scmp.ne.s32.totalorder %s134, %s135
    %p149 = scmp.eq.s32.totalorder %s17, 1
    %p150 = por %p148, %p149
    %p152 = scmp.ne.s32.totalorder %s135, %s151
    %p153 = scmp.eq.s32.totalorder %s17, 0
    %p154 = por %p152, %p153
    %p155 = scmp.le.s32.totalorder 1, %s11
    %p156 = scmp.lt.s32.totalorder %s11, 3
    %p157 = pnand %p155, %p156
    %p158 = pneg %p157
    // Predicated region
    $region9: #{double_conv_forward.1} parent=5 // pred_check
      _
    $region10: #{double_conv_forward.1} parent=5 // pred_check_branch
      %160 = sbr.rel (%p157) target = $region12
    $region11: #{double_conv_forward.1} parent=5 // pred_region
      %s161 = ssub.s32 %s11, 1
      // Predicated region
      $region13: #{double_conv_forward.1} parent=11 // pred_check
        %p162 = pneg %p58
      $region14: #{double_conv_forward.1} parent=11 // pred_check_branch
        %164 = sbr.rel (%p162) target = $region16
      $region15: #{double_conv_forward.1} parent=11 // pred_region
        _
      $region16: #{double_conv_forward.1} parent=11 // pred_fallthru
        _
      // Predicated region
      $region17: #{double_conv_forward.1} parent=11 // pred_check
        %p165 = pneg %p79
      $region18: #{double_conv_forward.1} parent=11 // pred_check_branch
        %167 = sbr.rel (%p165) target = $region20
      $region19: #{double_conv_forward.1} parent=11 // pred_region
        _
      $region20: #{double_conv_forward.1} parent=11 // pred_fallthru
        _
      // Predicated region
      $region21: #{double_conv_forward.1} parent=11 // pred_check
        %p168 = pneg %p100
      $region22: #{double_conv_forward.1} parent=11 // pred_check_branch
        %170 = sbr.rel (%p168) target = $region24
      $region23: #{double_conv_forward.1} parent=11 // pred_region
        _
      $region24: #{double_conv_forward.1} parent=11 // pred_fallthru
        _
      // Predicated region
      $region25: #{double_conv_forward.1} parent=11 // pred_check
        %p171 = pneg %p121
      $region26: #{double_conv_forward.1} parent=11 // pred_check_branch
        %173 = sbr.rel (%p171) target = $region28
      $region27: #{double_conv_forward.1} parent=11 // pred_region
        _
      $region28: #{double_conv_forward.1} parent=11 // pred_fallthru
        _
    $region12: #{double_conv_forward.1} parent=5 // pred_fallthru
      _
    %p174 = scmp.lt.s32.totalorder %s11, 2
    // Predicated region
    $region29: #{double_conv_forward.1} parent=5 // pred_check
      %p175 = pneg %p174
    $region30: #{double_conv_forward.1} parent=5 // pred_check_branch
      %177 = sbr.rel (%p175) target = $region32
    $region31: #{double_conv_forward.1} parent=5 // pred_region
      // Predicated region
      $region33: #{double_conv_forward.1} parent=31 // pred_check
        %p178 = pneg %p31
      $region34: #{double_conv_forward.1} parent=31 // pred_check_branch
        %180 = sbr.rel (%p178) target = $region36
      $region35: #{double_conv_forward.1} parent=31 // pred_region
        %p181 = scmp.lt.s32.totalorder %s11, 1
        %s182 = scalar_select %p181, %s11, 1
        %s183 = smul.addr %s182, 32
        %s184 = smul.addr %s183, 4
        %s185 = scalar_lea.vmem %s0, %s184
      $region36: #{double_conv_forward.1} parent=31 // pred_fallthru
        _
    $region32: #{double_conv_forward.1} parent=5 // pred_fallthru
      _
    %p186 = scmp.le.s32.totalorder 1, %s11
    %p187 = scmp.lt.s32.totalorder %s11, 3
    %p188 = pnand %p186, %p187
    %p189 = pneg %p188
    // Predicated region
    $region37: #{double_conv_forward.1} parent=5 // pred_check
      _
    $region38: #{double_conv_forward.1} parent=5 // pred_check_branch
      %191 = sbr.rel (%p188) target = $region40
    $region39: #{double_conv_forward.1} parent=5 // pred_region
      %s192 = ssub.s32 %s11, 1
      %p193 = scmp.lt.s32.totalorder %s16, 1
      %s194 = scalar_select %p193, %s16, 1
      %s195 = smul.addr %s194, 32
      %s196 = smul.addr %s195, 4
      %s197 = scalar_lea.vmem %s0, %s196
      %p198 = pneg %p37
      %p199 = pneg %p34
      %p200 = pneg %p58
      %p201 = pneg %p55
      %p202 = pneg %p79
      %p203 = pneg %p76
      %p204 = pneg %p100
      %p205 = pneg %p97
      %p206 = pneg %p121
      %p207 = pneg %p118
      %p208 = pneg %p147
      %p209 = pneg %p144
      %p210 = scmp.lt.s32.totalorder %s16, 1
      %s211 = scalar_select %p210, %s16, 1
      %s212 = smul.addr %s211, 32
      %s213 = smul.addr %s212, 8
      %s214 = scalar_lea.vmem %s5, %s213
      %p215 = scmp.lt.s32.totalorder %s16, 1
      %s216 = scalar_select %p215, %s16, 1
      %s217 = smul.addr %s216, 32
      %s218 = smul.addr %s217, 4
      %s219 = scalar_lea.vmem %s0, %s218
      %p220 = scmp.lt.s32.totalorder %s16, 1
      %s221 = scalar_select %p220, %s16, 1
      %s222 = smul.addr %s221, 32
      %s223 = smul.addr %s222, 8
      %s224 = scalar_lea.vmem %s5, %s223
      %vm226 = vcmask 27648
      %227 = vst.msk [vmem:[#allocation2] sm:$0xf] %vm226, 0
      %228 = vst.msk [vmem:[#allocation2 + $0x4] sm:$0xf] %vm226, 0
      %vm229 = vcmask 24576
      %230 = vst.msk [vmem:[#allocation2 + $0x8] sm:$0x1] %vm229, 0
      %s231 = scalar_lea.vmem [#allocation2], 204
      %232 = vst.msk [vmem:[%s231] sm:$0xf] %vm226, 0
      %233 = vst.msk [vmem:[%s231 + $0x4] sm:$0xf] %vm226, 0
      %234 = vst.msk [vmem:[%s231 + $0x8] sm:$0x1] %vm229, 0
      %vm235 = vcmask 24576
      %vm236 = vsmask.f32 256
      %vm237 = vmand %vm235, %vm236
      %v238 = vld [vmem:[#allocation2] sm:$0x1]
      %v239 = vsel %vm237, 0, %v238
      %240 = vst [vmem:[#allocation2] sm:$0x1] %v239
      %v241 = vld [vmem:[#allocation2 + $0xc] sm:$0x1]
      %v242 = vsel %vm237, 0, %v241
      %243 = vst [vmem:[#allocation2 + $0xc] sm:$0x1] %v242
      %v244 = vld [vmem:[#allocation2 + $0x18] sm:$0x1]
      %v245 = vsel %vm237, 0, %v244
      %246 = vst [vmem:[#allocation2 + $0x18] sm:$0x1] %v245
      %v247 = vld [vmem:[#allocation2 + $0x24] sm:$0x1]
      %v248 = vsel %vm237, 0, %v247
      %249 = vst [vmem:[#allocation2 + $0x24] sm:$0x1] %v248
      %v250 = vld [vmem:[#allocation2 + $0x30] sm:$0x1]
      %v251 = vsel %vm237, 0, %v250
      %252 = vst [vmem:[#allocation2 + $0x30] sm:$0x1] %v251
      %v253 = vld [vmem:[#allocation2 + $0x3c] sm:$0x1]
      %v254 = vsel %vm237, 0, %v253
      %255 = vst [vmem:[#allocation2 + $0x3c] sm:$0x1] %v254
      %v256 = vld [vmem:[#allocation2 + $0x48] sm:$0x1]
      %v257 = vsel %vm237, 0, %v256
      %258 = vst [vmem:[#allocation2 + $0x48] sm:$0x1] %v257
      %v259 = vld [vmem:[#allocation2 + $0x54] sm:$0x1]
      %v260 = vsel %vm237, 0, %v259
      %261 = vst [vmem:[#allocation2 + $0x54] sm:$0x1] %v260
      %v262 = vld [vmem:[#allocation2 + $0x60] sm:$0x1]
      %v263 = vsel %vm237, 0, %v262
      %264 = vst [vmem:[#allocation2 + $0x60] sm:$0x1] %v263
      %v265 = vld [vmem:[#allocation2 + $0x6c] sm:$0x1]
      %v266 = vsel %vm237, 0, %v265
      %267 = vst [vmem:[#allocation2 + $0x6c] sm:$0x1] %v266
      %v268 = vld [vmem:[#allocation2 + $0x78] sm:$0x1]
      %v269 = vsel %vm237, 0, %v268
      %270 = vst [vmem:[#allocation2 + $0x78] sm:$0x1] %v269
      %v271 = vld [vmem:[#allocation2 + $0x84] sm:$0x1]
      %v272 = vsel %vm237, 0, %v271
      %273 = vst [vmem:[#allocation2 + $0x84] sm:$0x1] %v272
      %v274 = vld [vmem:[#allocation2 + $0x90] sm:$0x1]
      %v275 = vsel %vm237, 0, %v274
      %276 = vst [vmem:[#allocation2 + $0x90] sm:$0x1] %v275
      %v277 = vld [vmem:[#allocation2 + $0x9c] sm:$0x1]
      %v278 = vsel %vm237, 0, %v277
      %279 = vst [vmem:[#allocation2 + $0x9c] sm:$0x1] %v278
      %v280 = vld [vmem:[#allocation2 + $0xa8] sm:$0x1]
      %v281 = vsel %vm237, 0, %v280
      %282 = vst [vmem:[#allocation2 + $0xa8] sm:$0x1] %v281
      %v283 = vld [vmem:[#allocation2 + $0xb4] sm:$0x1]
      %v284 = vsel %vm237, 0, %v283
      %285 = vst [vmem:[#allocation2 + $0xb4] sm:$0x1] %v284
      %v286 = vld [vmem:[#allocation2 + $0xc0] sm:$0x1]
      %v287 = vsel %vm237, 0, %v286
      %288 = vst [vmem:[#allocation2 + $0xc0] sm:$0x1] %v287
      %v289 = vld [vmem:[#allocation2 + $0xcc] sm:$0x1]
      %v290 = vsel %vm237, 0, %v289
      %291 = vst [vmem:[#allocation2 + $0xcc] sm:$0x1] %v290
      %vm292 = vsmask.f32 7938
      %vm293 = vmand %vm235, %vm292
      %v294 = vld [vmem:[#allocation2 + $0x8] sm:$0x1]
      %v295 = vsel %vm293, 0, %v294
      %296 = vst [vmem:[#allocation2 + $0x8] sm:$0x1] %v295
      %v297 = vld [vmem:[#allocation2 + $0x14] sm:$0x1]
      %v298 = vsel %vm293, 0, %v297
      %299 = vst [vmem:[#allocation2 + $0x14] sm:$0x1] %v298
      %v300 = vld [vmem:[#allocation2 + $0x20] sm:$0x1]
      %v301 = vsel %vm293, 0, %v300
      %302 = vst [vmem:[#allocation2 + $0x20] sm:$0x1] %v301
      %v303 = vld [vmem:[#allocation2 + $0x2c] sm:$0x1]
      %v304 = vsel %vm293, 0, %v303
      %305 = vst [vmem:[#allocation2 + $0x2c] sm:$0x1] %v304
      %v306 = vld [vmem:[#allocation2 + $0x38] sm:$0x1]
      %v307 = vsel %vm293, 0, %v306
      %308 = vst [vmem:[#allocation2 + $0x38] sm:$0x1] %v307
      %v309 = vld [vmem:[#allocation2 + $0x44] sm:$0x1]
      %v310 = vsel %vm293, 0, %v309
      %311 = vst [vmem:[#allocation2 + $0x44] sm:$0x1] %v310
      %v312 = vld [vmem:[#allocation2 + $0x50] sm:$0x1]
      %v313 = vsel %vm293, 0, %v312
      %314 = vst [vmem:[#allocation2 + $0x50] sm:$0x1] %v313
      %v315 = vld [vmem:[#allocation2 + $0x5c] sm:$0x1]
      %v316 = vsel %vm293, 0, %v315
      %317 = vst [vmem:[#allocation2 + $0x5c] sm:$0x1] %v316
      %v318 = vld [vmem:[#allocation2 + $0x68] sm:$0x1]
      %v319 = vsel %vm293, 0, %v318
      %320 = vst [vmem:[#allocation2 + $0x68] sm:$0x1] %v319
      %v321 = vld [vmem:[#allocation2 + $0x74] sm:$0x1]
      %v322 = vsel %vm293, 0, %v321
      %323 = vst [vmem:[#allocation2 + $0x74] sm:$0x1] %v322
      %v324 = vld [vmem:[#allocation2 + $0x80] sm:$0x1]
      %v325 = vsel %vm293, 0, %v324
      %326 = vst [vmem:[#allocation2 + $0x80] sm:$0x1] %v325
      %v327 = vld [vmem:[#allocation2 + $0x8c] sm:$0x1]
      %v328 = vsel %vm293, 0, %v327
      %329 = vst [vmem:[#allocation2 + $0x8c] sm:$0x1] %v328
      %v330 = vld [vmem:[#allocation2 + $0x98] sm:$0x1]
      %v331 = vsel %vm293, 0, %v330
      %332 = vst [vmem:[#allocation2 + $0x98] sm:$0x1] %v331
      %v333 = vld [vmem:[#allocation2 + $0xa4] sm:$0x1]
      %v334 = vsel %vm293, 0, %v333
      %335 = vst [vmem:[#allocation2 + $0xa4] sm:$0x1] %v334
      %v336 = vld [vmem:[#allocation2 + $0xb0] sm:$0x1]
      %v337 = vsel %vm293, 0, %v336
      %338 = vst [vmem:[#allocation2 + $0xb0] sm:$0x1] %v337
      %v339 = vld [vmem:[#allocation2 + $0xbc] sm:$0x1]
      %v340 = vsel %vm293, 0, %v339
      %341 = vst [vmem:[#allocation2 + $0xbc] sm:$0x1] %v340
      %v342 = vld [vmem:[#allocation2 + $0xc8] sm:$0x1]
      %v343 = vsel %vm293, 0, %v342
      %344 = vst [vmem:[#allocation2 + $0xc8] sm:$0x1] %v343
      %v345 = vld [vmem:[#allocation2 + $0xd4] sm:$0x1]
      %v346 = vsel %vm293, 0, %v345
      %347 = vst [vmem:[#allocation2 + $0xd4] sm:$0x1] %v346
      %v348 = vld [vmem:[%s219] sm:$0xf]
      %v349 = vld [vmem:[%s219 + $0x4] sm:$0xf]
      %v350 = vld [vmem:[%s219 + $0x8] sm:$0xf]
      %v351 = vld [vmem:[%s219 + $0xc] sm:$0xf]
      %v352 = vld [vmem:[%s219 + $0x10] sm:$0xf]
      %v353 = vld [vmem:[%s219 + $0x14] sm:$0xf]
      %v354 = vld [vmem:[%s219 + $0x18] sm:$0xf]
      %v355 = vld [vmem:[%s219 + $0x1c] sm:$0xf]
      %v356 = vld [vmem:[%s219 + $0x20] sm:$0xf]
      %v357 = vld [vmem:[%s219 + $0x24] sm:$0xf]
      %v358 = vld [vmem:[%s219 + $0x28] sm:$0xf]
      %v359 = vld [vmem:[%s219 + $0x2c] sm:$0xf]
      %v360 = vld [vmem:[%s219 + $0x30] sm:$0xf]
      %v361 = vld [vmem:[%s219 + $0x34] sm:$0xf]
      %v362 = vld [vmem:[%s219 + $0x38] sm:$0xf]
      %v363 = vld [vmem:[%s219 + $0x3c] sm:$0xf]
      %v364 = vld [vmem:[%s219 + $0x40] sm:$0xf]
      %v365 = vld [vmem:[%s219 + $0x44] sm:$0xf]
      %v366 = vld [vmem:[%s219 + $0x48] sm:$0xf]
      %v367 = vld [vmem:[%s219 + $0x4c] sm:$0xf]
      %v368 = vld [vmem:[%s219 + $0x50] sm:$0xf]
      %v369 = vld [vmem:[%s219 + $0x54] sm:$0xf]
      %v370 = vld [vmem:[%s219 + $0x58] sm:$0xf]
      %v371 = vld [vmem:[%s219 + $0x5c] sm:$0xf]
      %v372 = vld [vmem:[%s219 + $0x60] sm:$0xf]
      %v373 = vld [vmem:[%s219 + $0x64] sm:$0xf]
      %v374 = vld [vmem:[%s219 + $0x68] sm:$0xf]
      %v375 = vld [vmem:[%s219 + $0x6c] sm:$0xf]
      %v376 = vld [vmem:[%s219 + $0x70] sm:$0xf]
      %v377 = vld [vmem:[%s219 + $0x74] sm:$0xf]
      %v378 = vld [vmem:[%s219 + $0x78] sm:$0xf]
      %v379 = vld [vmem:[%s219 + $0x7c] sm:$0xf]
      %vm380 = vsmask.f32 4368
      %vm381 = vmor %vm236, %vm380
      %v383 = vshrl.u32 %v348, 16
      %v385 = vrot.slane %v383, 7
      %v386 = vshll.u32 %v348, 16
      %v388 = vor.u32 %v385, %v386
      %v389 = vrot.slane %v385, 4
      %v391 = vshrl.u32 %v349, 16
      %v393 = vrot.slane %v391, 7
      %v394 = vshll.u32 %v349, 16
      %v396 = vor.u32 %v393, %v394
      %v397 = vsel %vm381, %v389, %v396
      %v398 = vrot.slane %v393, 4
      %v400 = vshrl.u32 %v350, 16
      %v402 = vrot.slane %v400, 7
      %v403 = vshll.u32 %v350, 16
      %v405 = vor.u32 %v402, %v403
      %v406 = vrot.slane %v402, 4
      %v408 = vshrl.u32 %v351, 16
      %v410 = vrot.slane %v408, 7
      %v411 = vshll.u32 %v351, 16
      %v413 = vor.u32 %v410, %v411
      %v414 = vsel %vm381, %v406, %v413
      %v415 = vrot.slane %v410, 4
      %v417 = vshrl.u32 %v352, 16
      %v419 = vrot.slane %v417, 7
      %v420 = vshll.u32 %v352, 16
      %v422 = vor.u32 %v419, %v420
      %v423 = vrot.slane %v419, 4
      %v425 = vshrl.u32 %v353, 16
      %v427 = vrot.slane %v425, 7
      %v428 = vshll.u32 %v353, 16
      %v430 = vor.u32 %v427, %v428
      %v431 = vsel %vm381, %v423, %v430
      %v432 = vrot.slane %v427, 4
      %v434 = vshrl.u32 %v354, 16
      %v436 = vrot.slane %v434, 7
      %v437 = vshll.u32 %v354, 16
      %v439 = vor.u32 %v436, %v437
      %v440 = vrot.slane %v436, 4
      %v442 = vshrl.u32 %v355, 16
      %v444 = vrot.slane %v442, 7
      %v445 = vshll.u32 %v355, 16
      %v447 = vor.u32 %v444, %v445
      %v448 = vsel %vm381, %v440, %v447
      %v449 = vrot.slane %v444, 4
      %v451 = vshrl.u32 %v356, 16
      %v453 = vrot.slane %v451, 7
      %v454 = vshll.u32 %v356, 16
      %v456 = vor.u32 %v453, %v454
      %v457 = vrot.slane %v453, 4
      %v459 = vshrl.u32 %v357, 16
      %v461 = vrot.slane %v459, 7
      %v462 = vshll.u32 %v357, 16
      %v464 = vor.u32 %v461, %v462
      %v465 = vsel %vm381, %v457, %v464
      %v466 = vrot.slane %v461, 4
      %v468 = vshrl.u32 %v358, 16
      %v470 = vrot.slane %v468, 7
      %v471 = vshll.u32 %v358, 16
      %v473 = vor.u32 %v470, %v471
      %v474 = vrot.slane %v470, 4
      %v476 = vshrl.u32 %v359, 16
      %v478 = vrot.slane %v476, 7
      %v479 = vshll.u32 %v359, 16
      %v481 = vor.u32 %v478, %v479
      %v482 = vsel %vm381, %v474, %v481
      %v483 = vrot.slane %v478, 4
      %v485 = vshrl.u32 %v360, 16
      %v487 = vrot.slane %v485, 7
      %v488 = vshll.u32 %v360, 16
      %v490 = vor.u32 %v487, %v488
      %v491 = vrot.slane %v487, 4
      %v493 = vshrl.u32 %v361, 16
      %v495 = vrot.slane %v493, 7
      %v496 = vshll.u32 %v361, 16
      %v498 = vor.u32 %v495, %v496
      %v499 = vsel %vm381, %v491, %v498
      %v500 = vrot.slane %v495, 4
      %v502 = vshrl.u32 %v362, 16
      %v504 = vrot.slane %v502, 7
      %v505 = vshll.u32 %v362, 16
      %v507 = vor.u32 %v504, %v505
      %v508 = vrot.slane %v504, 4
      %v510 = vshrl.u32 %v363, 16
      %v512 = vrot.slane %v510, 7
      %v513 = vshll.u32 %v363, 16
      %v515 = vor.u32 %v512, %v513
      %v516 = vsel %vm381, %v508, %v515
      %v517 = vrot.slane %v512, 4
      %v519 = vshrl.u32 %v364, 16
      %v521 = vrot.slane %v519, 7
      %v522 = vshll.u32 %v364, 16
      %v524 = vor.u32 %v521, %v522
      %v525 = vrot.slane %v521, 4
      %v527 = vshrl.u32 %v365, 16
      %v529 = vrot.slane %v527, 7
      %v530 = vshll.u32 %v365, 16
      %v532 = vor.u32 %v529, %v530
      %v533 = vsel %vm381, %v525, %v532
      %v534 = vrot.slane %v529, 4
      %v536 = vshrl.u32 %v366, 16
      %v538 = vrot.slane %v536, 7
      %v539 = vshll.u32 %v366, 16
      %v541 = vor.u32 %v538, %v539
      %v542 = vrot.slane %v538, 4
      %v544 = vshrl.u32 %v367, 16
      %v546 = vrot.slane %v544, 7
      %v547 = vshll.u32 %v367, 16
      %v549 = vor.u32 %v546, %v547
      %v550 = vsel %vm381, %v542, %v549
      %v551 = vrot.slane %v546, 4
      %v553 = vshrl.u32 %v368, 16
      %v555 = vrot.slane %v553, 7
      %v556 = vshll.u32 %v368, 16
      %v558 = vor.u32 %v555, %v556
      %v559 = vrot.slane %v555, 4
      %v561 = vshrl.u32 %v369, 16
      %v563 = vrot.slane %v561, 7
      %v564 = vshll.u32 %v369, 16
      %v566 = vor.u32 %v563, %v564
      %v567 = vsel %vm381, %v559, %v566
      %v568 = vrot.slane %v563, 4
      %v570 = vshrl.u32 %v370, 16
      %v572 = vrot.slane %v570, 7
      %v573 = vshll.u32 %v370, 16
      %v575 = vor.u32 %v572, %v573
      %v576 = vrot.slane %v572, 4
      %v578 = vshrl.u32 %v371, 16
      %v580 = vrot.slane %v578, 7
      %v581 = vshll.u32 %v371, 16
      %v583 = vor.u32 %v580, %v581
      %v584 = vsel %vm381, %v576, %v583
      %v585 = vrot.slane %v580, 4
      %v587 = vshrl.u32 %v372, 16
      %v589 = vrot.slane %v587, 7
      %v590 = vshll.u32 %v372, 16
      %v592 = vor.u32 %v589, %v590
      %v593 = vrot.slane %v589, 4
      %v595 = vshrl.u32 %v373, 16
      %v597 = vrot.slane %v595, 7
      %v598 = vshll.u32 %v373, 16
      %v600 = vor.u32 %v597, %v598
      %v601 = vsel %vm381, %v593, %v600
      %v602 = vrot.slane %v597, 4
      %v604 = vshrl.u32 %v374, 16
      %v606 = vrot.slane %v604, 7
      %v607 = vshll.u32 %v374, 16
      %v609 = vor.u32 %v606, %v607
      %v610 = vrot.slane %v606, 4
      %v612 = vshrl.u32 %v375, 16
      %v614 = vrot.slane %v612, 7
      %v615 = vshll.u32 %v375, 16
      %v617 = vor.u32 %v614, %v615
      %v618 = vsel %vm381, %v610, %v617
      %v619 = vrot.slane %v614, 4
      %v621 = vshrl.u32 %v376, 16
      %v623 = vrot.slane %v621, 7
      %v624 = vshll.u32 %v376, 16
      %v626 = vor.u32 %v623, %v624
      %v627 = vrot.slane %v623, 4
      %v629 = vshrl.u32 %v377, 16
      %v631 = vrot.slane %v629, 7
      %v632 = vshll.u32 %v377, 16
      %v634 = vor.u32 %v631, %v632
      %v635 = vsel %vm381, %v627, %v634
      %v636 = vrot.slane %v631, 4
      %v638 = vshrl.u32 %v378, 16
      %v640 = vrot.slane %v638, 7
      %v641 = vshll.u32 %v378, 16
      %v643 = vor.u32 %v640, %v641
      %v644 = vrot.slane %v640, 4
      %v646 = vshrl.u32 %v379, 16
      %v648 = vrot.slane %v646, 7
      %v649 = vshll.u32 %v379, 16
      %v651 = vor.u32 %v648, %v649
      %v652 = vsel %vm381, %v644, %v651
      %v653 = vrot.slane %v648, 4
      %s702 = scalar_lea.vmem [#allocation2], 12
      %vm703 = vcmask 27648
      %vm704 = vmand %vm703, %vm292
      %v705 = vld [vmem:[%s702] sm:$0xf]
      %v706 = vsel %vm704, %v388, %v705
      %707 = vst [vmem:[%s702] sm:$0xf] %v706
      %708 = vst.msk [vmem:[%s702 + $0x4] sm:$0xf] %vm226, %v397
      %v709 = vld [vmem:[%s702 + $0x8] sm:$0x1]
      %v710 = vsel %vm237, %v398, %v709
      %711 = vst [vmem:[%s702 + $0x8] sm:$0x1] %v710
      %v712 = vld [vmem:[%s702 + $0xc] sm:$0xf]
      %v713 = vsel %vm704, %v405, %v712
      %714 = vst [vmem:[%s702 + $0xc] sm:$0xf] %v713
      %715 = vst.msk [vmem:[%s702 + $0x10] sm:$0xf] %vm226, %v414
      %v716 = vld [vmem:[%s702 + $0x14] sm:$0x1]
      %v717 = vsel %vm237, %v415, %v716
      %718 = vst [vmem:[%s702 + $0x14] sm:$0x1] %v717
      %v719 = vld [vmem:[%s702 + $0x18] sm:$0xf]
      %v720 = vsel %vm704, %v422, %v719
      %721 = vst [vmem:[%s702 + $0x18] sm:$0xf] %v720
      %722 = vst.msk [vmem:[%s702 + $0x1c] sm:$0xf] %vm226, %v431
      %v723 = vld [vmem:[%s702 + $0x20] sm:$0x1]
      %v724 = vsel %vm237, %v432, %v723
      %725 = vst [vmem:[%s702 + $0x20] sm:$0x1] %v724
      %v726 = vld [vmem:[%s702 + $0x24] sm:$0xf]
      %v727 = vsel %vm704, %v439, %v726
      %728 = vst [vmem:[%s702 + $0x24] sm:$0xf] %v727
      %729 = vst.msk [vmem:[%s702 + $0x28] sm:$0xf] %vm226, %v448
      %v730 = vld [vmem:[%s702 + $0x2c] sm:$0x1]
      %v731 = vsel %vm237, %v449, %v730
      %732 = vst [vmem:[%s702 + $0x2c] sm:$0x1] %v731
      %v733 = vld [vmem:[%s702 + $0x30] sm:$0xf]
      %v734 = vsel %vm704, %v456, %v733
      %735 = vst [vmem:[%s702 + $0x30] sm:$0xf] %v734
      %736 = vst.msk [vmem:[%s702 + $0x34] sm:$0xf] %vm226, %v465
      %v737 = vld [vmem:[%s702 + $0x38] sm:$0x1]
      %v738 = vsel %vm237, %v466, %v737
      %739 = vst [vmem:[%s702 + $0x38] sm:$0x1] %v738
      %v740 = vld [vmem:[%s702 + $0x3c] sm:$0xf]
      %v741 = vsel %vm704, %v473, %v740
      %742 = vst [vmem:[%s702 + $0x3c] sm:$0xf] %v741
      %743 = vst.msk [vmem:[%s702 + $0x40] sm:$0xf] %vm226, %v482
      %v744 = vld [vmem:[%s702 + $0x44] sm:$0x1]
      %v745 = vsel %vm237, %v483, %v744
      %746 = vst [vmem:[%s702 + $0x44] sm:$0x1] %v745
      %v747 = vld [vmem:[%s702 + $0x48] sm:$0xf]
      %v748 = vsel %vm704, %v490, %v747
      %749 = vst [vmem:[%s702 + $0x48] sm:$0xf] %v748
      %750 = vst.msk [vmem:[%s702 + $0x4c] sm:$0xf] %vm226, %v499
      %v751 = vld [vmem:[%s702 + $0x50] sm:$0x1]
      %v752 = vsel %vm237, %v500, %v751
      %753 = vst [vmem:[%s702 + $0x50] sm:$0x1] %v752
      %v754 = vld [vmem:[%s702 + $0x54] sm:$0xf]
      %v755 = vsel %vm704, %v507, %v754
      %756 = vst [vmem:[%s702 + $0x54] sm:$0xf] %v755
      %757 = vst.msk [vmem:[%s702 + $0x58] sm:$0xf] %vm226, %v516
      %v758 = vld [vmem:[%s702 + $0x5c] sm:$0x1]
      %v759 = vsel %vm237, %v517, %v758
      %760 = vst [vmem:[%s702 + $0x5c] sm:$0x1] %v759
      %v761 = vld [vmem:[%s702 + $0x60] sm:$0xf]
      %v762 = vsel %vm704, %v524, %v761
      %763 = vst [vmem:[%s702 + $0x60] sm:$0xf] %v762
      %764 = vst.msk [vmem:[%s702 + $0x64] sm:$0xf] %vm226, %v533
      %v765 = vld [vmem:[%s702 + $0x68] sm:$0x1]
      %v766 = vsel %vm237, %v534, %v765
      %767 = vst [vmem:[%s702 + $0x68] sm:$0x1] %v766
      %v768 = vld [vmem:[%s702 + $0x6c] sm:$0xf]
      %v769 = vsel %vm704, %v541, %v768
      %770 = vst [vmem:[%s702 + $0x6c] sm:$0xf] %v769
      %771 = vst.msk [vmem:[%s702 + $0x70] sm:$0xf] %vm226, %v550
      %v772 = vld [vmem:[%s702 + $0x74] sm:$0x1]
      %v773 = vsel %vm237, %v551, %v772
      %774 = vst [vmem:[%s702 + $0x74] sm:$0x1] %v773
      %v775 = vld [vmem:[%s702 + $0x78] sm:$0xf]
      %v776 = vsel %vm704, %v558, %v775
      %777 = vst [vmem:[%s702 + $0x78] sm:$0xf] %v776
      %778 = vst.msk [vmem:[%s702 + $0x7c] sm:$0xf] %vm226, %v567
      %v779 = vld [vmem:[%s702 + $0x80] sm:$0x1]
      %v780 = vsel %vm237, %v568, %v779
      %781 = vst [vmem:[%s702 + $0x80] sm:$0x1] %v780
      %v782 = vld [vmem:[%s702 + $0x84] sm:$0xf]
      %v783 = vsel %vm704, %v575, %v782
      %784 = vst [vmem:[%s702 + $0x84] sm:$0xf] %v783
      %785 = vst.msk [vmem:[%s702 + $0x88] sm:$0xf] %vm226, %v584
      %v786 = vld [vmem:[%s702 + $0x8c] sm:$0x1]
      %v787 = vsel %vm237, %v585, %v786
      %788 = vst [vmem:[%s702 + $0x8c] sm:$0x1] %v787
      %v789 = vld [vmem:[%s702 + $0x90] sm:$0xf]
      %v790 = vsel %vm704, %v592, %v789
      %791 = vst [vmem:[%s702 + $0x90] sm:$0xf] %v790
      %792 = vst.msk [vmem:[%s702 + $0x94] sm:$0xf] %vm226, %v601
      %v793 = vld [vmem:[%s702 + $0x98] sm:$0x1]
      %v794 = vsel %vm237, %v602, %v793
      %795 = vst [vmem:[%s702 + $0x98] sm:$0x1] %v794
      %v796 = vld [vmem:[%s702 + $0x9c] sm:$0xf]
      %v797 = vsel %vm704, %v609, %v796
      %798 = vst [vmem:[%s702 + $0x9c] sm:$0xf] %v797
      %799 = vst.msk [vmem:[%s702 + $0xa0] sm:$0xf] %vm226, %v618
      %v800 = vld [vmem:[%s702 + $0xa4] sm:$0x1]
      %v801 = vsel %vm237, %v619, %v800
      %802 = vst [vmem:[%s702 + $0xa4] sm:$0x1] %v801
      %v803 = vld [vmem:[%s702 + $0xa8] sm:$0xf]
      %v804 = vsel %vm704, %v626, %v803
      %805 = vst [vmem:[%s702 + $0xa8] sm:$0xf] %v804
      %806 = vst.msk [vmem:[%s702 + $0xac] sm:$0xf] %vm226, %v635
      %v807 = vld [vmem:[%s702 + $0xb0] sm:$0x1]
      %v808 = vsel %vm237, %v636, %v807
      %809 = vst [vmem:[%s702 + $0xb0] sm:$0x1] %v808
      %v810 = vld [vmem:[%s702 + $0xb4] sm:$0xf]
      %v811 = vsel %vm704, %v643, %v810
      %812 = vst [vmem:[%s702 + $0xb4] sm:$0xf] %v811
      %813 = vst.msk [vmem:[%s702 + $0xb8] sm:$0xf] %vm226, %v652
      %v814 = vld [vmem:[%s702 + $0xbc] sm:$0x1]
      %v815 = vsel %vm237, %v653, %v814
      %816 = vst [vmem:[%s702 + $0xbc] sm:$0x1] %v815
      %v817 = vld [vmem:[#allocation2] sm:$0xf]
      %v818 = vld [vmem:[#allocation2 + $0x4] sm:$0xf]
      %v819 = vld [vmem:[#allocation2 + $0xc] sm:$0xf]
      %v820 = vld [vmem:[#allocation2 + $0x10] sm:$0xf]
      %v821 = vld [vmem:[#allocation2 + $0x18] sm:$0xf]
      %v822 = vld [vmem:[#allocation2 + $0x1c] sm:$0xf]
      %v823 = vld [vmem:[#allocation2 + $0x24] sm:$0xf]
      %v824 = vld [vmem:[#allocation2 + $0x28] sm:$0xf]
      %v825 = vld [vmem:[#allocation2 + $0x30] sm:$0xf]
      %v826 = vld [vmem:[#allocation2 + $0x34] sm:$0xf]
      %v827 = vld [vmem:[#allocation2 + $0x3c] sm:$0xf]
      %v828 = vld [vmem:[#allocation2 + $0x40] sm:$0xf]
      %v829 = vld [vmem:[#allocation2 + $0x48] sm:$0xf]
      %v830 = vld [vmem:[#allocation2 + $0x4c] sm:$0xf]
      %v831 = vld [vmem:[#allocation2 + $0x54] sm:$0xf]
      %v832 = vld [vmem:[#allocation2 + $0x58] sm:$0xf]
      %v833 = vld [vmem:[#allocation2 + $0x60] sm:$0xf]
      %v834 = vld [vmem:[#allocation2 + $0x64] sm:$0xf]
      %v835 = vld [vmem:[#allocation2 + $0x6c] sm:$0xf]
      %v836 = vld [vmem:[#allocation2 + $0x70] sm:$0xf]
      %v837 = vld [vmem:[#allocation2 + $0x78] sm:$0xf]
      %v838 = vld [vmem:[#allocation2 + $0x7c] sm:$0xf]
      %v839 = vld [vmem:[#allocation2 + $0x84] sm:$0xf]
      %v840 = vld [vmem:[#allocation2 + $0x88] sm:$0xf]
      %v841 = vld [vmem:[#allocation2 + $0x90] sm:$0xf]
      %v842 = vld [vmem:[#allocation2 + $0x94] sm:$0xf]
      %v843 = vld [vmem:[#allocation2 + $0x9c] sm:$0xf]
      %v844 = vld [vmem:[#allocation2 + $0xa0] sm:$0xf]
      %v845 = vld [vmem:[#allocation2 + $0xa8] sm:$0xf]
      %v846 = vld [vmem:[#allocation2 + $0xac] sm:$0xf]
      %v847 = vld [vmem:[#allocation2 + $0xb4] sm:$0xf]
      %v848 = vld [vmem:[#allocation2 + $0xb8] sm:$0xf]
      %v849 = vld [vmem:[#allocation2 + $0x8] sm:$0x1]
      %v850 = vld [vmem:[#allocation2 + $0x14] sm:$0x1]
      %v851 = vld [vmem:[#allocation2 + $0x20] sm:$0x1]
      %v852 = vld [vmem:[#allocation2 + $0x2c] sm:$0x1]
      %v853 = vld [vmem:[#allocation2 + $0x38] sm:$0x1]
      %v854 = vld [vmem:[#allocation2 + $0x44] sm:$0x1]
      %v855 = vld [vmem:[#allocation2 + $0x50] sm:$0x1]
      %v856 = vld [vmem:[#allocation2 + $0x5c] sm:$0x1]
      %v857 = vld [vmem:[#allocation2 + $0x68] sm:$0x1]
      %v858 = vld [vmem:[#allocation2 + $0x74] sm:$0x1]
      %v859 = vld [vmem:[#allocation2 + $0x80] sm:$0x1]
      %v860 = vld [vmem:[#allocation2 + $0x8c] sm:$0x1]
      %v861 = vld [vmem:[#allocation2 + $0x98] sm:$0x1]
      %v862 = vld [vmem:[#allocation2 + $0xa4] sm:$0x1]
      %v863 = vld [vmem:[#allocation2 + $0xb0] sm:$0x1]
      %v864 = vld [vmem:[#allocation2 + $0xbc] sm:$0x1]
      %v865 = vld [vmem:[#allocation2] sm:$0xe]
      %v866 = vld [vmem:[#allocation2 + $0xc] sm:$0xe]
      %v867 = vld [vmem:[#allocation2 + $0x18] sm:$0xe]
      %v868 = vld [vmem:[#allocation2 + $0x24] sm:$0xe]
      %v869 = vld [vmem:[#allocation2 + $0x30] sm:$0xe]
      %v870 = vld [vmem:[#allocation2 + $0x3c] sm:$0xe]
      %v871 = vld [vmem:[#allocation2 + $0x48] sm:$0xe]
      %v872 = vld [vmem:[#allocation2 + $0x54] sm:$0xe]
      %v873 = vld [vmem:[#allocation2 + $0x60] sm:$0xe]
      %v874 = vld [vmem:[#allocation2 + $0x6c] sm:$0xe]
      %v875 = vld [vmem:[#allocation2 + $0x78] sm:$0xe]
      %v876 = vld [vmem:[#allocation2 + $0x84] sm:$0xe]
      %v877 = vld [vmem:[#allocation2 + $0x90] sm:$0xe]
      %v878 = vld [vmem:[#allocation2 + $0x9c] sm:$0xe]
      %v879 = vld [vmem:[#allocation2 + $0xa8] sm:$0xe]
      %v880 = vld [vmem:[#allocation2 + $0xb4] sm:$0xe]
      %v881 = vld [vmem:[%s702] sm:$0xf]
      %v882 = vld [vmem:[%s702 + $0x4] sm:$0xf]
      %v883 = vld [vmem:[%s702 + $0xc] sm:$0xf]
      %v884 = vld [vmem:[%s702 + $0x10] sm:$0xf]
      %v885 = vld [vmem:[%s702 + $0x18] sm:$0xf]
      %v886 = vld [vmem:[%s702 + $0x1c] sm:$0xf]
      %v887 = vld [vmem:[%s702 + $0x24] sm:$0xf]
      %v888 = vld [vmem:[%s702 + $0x28] sm:$0xf]
      %v889 = vld [vmem:[%s702 + $0x30] sm:$0xf]
      %v890 = vld [vmem:[%s702 + $0x34] sm:$0xf]
      %v891 = vld [vmem:[%s702 + $0x3c] sm:$0xf]
      %v892 = vld [vmem:[%s702 + $0x40] sm:$0xf]
      %v893 = vld [vmem:[%s702 + $0x48] sm:$0xf]
      %v894 = vld [vmem:[%s702 + $0x4c] sm:$0xf]
      %v895 = vld [vmem:[%s702 + $0x54] sm:$0xf]
      %v896 = vld [vmem:[%s702 + $0x58] sm:$0xf]
      %v897 = vld [vmem:[%s702 + $0x60] sm:$0xf]
      %v898 = vld [vmem:[%s702 + $0x64] sm:$0xf]
      %v899 = vld [vmem:[%s702 + $0x6c] sm:$0xf]
      %v900 = vld [vmem:[%s702 + $0x70] sm:$0xf]
      %v901 = vld [vmem:[%s702 + $0x78] sm:$0xf]
      %v902 = vld [vmem:[%s702 + $0x7c] sm:$0xf]
      %v903 = vld [vmem:[%s702 + $0x84] sm:$0xf]
      %v904 = vld [vmem:[%s702 + $0x88] sm:$0xf]
      %v905 = vld [vmem:[%s702 + $0x90] sm:$0xf]
      %v906 = vld [vmem:[%s702 + $0x94] sm:$0xf]
      %v907 = vld [vmem:[%s702 + $0x9c] sm:$0xf]
      %v908 = vld [vmem:[%s702 + $0xa0] sm:$0xf]
      %v909 = vld [vmem:[%s702 + $0xa8] sm:$0xf]
      %v910 = vld [vmem:[%s702 + $0xac] sm:$0xf]
      %v911 = vld [vmem:[%s702 + $0xb4] sm:$0xf]
      %v912 = vld [vmem:[%s702 + $0xb8] sm:$0xf]
      %v913 = vld [vmem:[%s702 + $0x8] sm:$0x1]
      %v914 = vld [vmem:[%s702 + $0x14] sm:$0x1]
      %v915 = vld [vmem:[%s702 + $0x20] sm:$0x1]
      %v916 = vld [vmem:[%s702 + $0x2c] sm:$0x1]
      %v917 = vld [vmem:[%s702 + $0x38] sm:$0x1]
      %v918 = vld [vmem:[%s702 + $0x44] sm:$0x1]
      %v919 = vld [vmem:[%s702 + $0x50] sm:$0x1]
      %v920 = vld [vmem:[%s702 + $0x5c] sm:$0x1]
      %v921 = vld [vmem:[%s702 + $0x68] sm:$0x1]
      %v922 = vld [vmem:[%s702 + $0x74] sm:$0x1]
      %v923 = vld [vmem:[%s702 + $0x80] sm:$0x1]
      %v924 = vld [vmem:[%s702 + $0x8c] sm:$0x1]
      %v925 = vld [vmem:[%s702 + $0x98] sm:$0x1]
      %v926 = vld [vmem:[%s702 + $0xa4] sm:$0x1]
      %v927 = vld [vmem:[%s702 + $0xb0] sm:$0x1]
      %v928 = vld [vmem:[%s702 + $0xbc] sm:$0x1]
      %v929 = vld [vmem:[%s702] sm:$0xe]
      %v930 = vld [vmem:[%s702 + $0xc] sm:$0xe]
      %v931 = vld [vmem:[%s702 + $0x18] sm:$0xe]
      %v932 = vld [vmem:[%s702 + $0x24] sm:$0xe]
      %v933 = vld [vmem:[%s702 + $0x30] sm:$0xe]
      %v934 = vld [vmem:[%s702 + $0x3c] sm:$0xe]
      %v935 = vld [vmem:[%s702 + $0x48] sm:$0xe]
      %v936 = vld [vmem:[%s702 + $0x54] sm:$0xe]
      %v937 = vld [vmem:[%s702 + $0x60] sm:$0xe]
      %v938 = vld [vmem:[%s702 + $0x6c] sm:$0xe]
      %v939 = vld [vmem:[%s702 + $0x78] sm:$0xe]
      %v940 = vld [vmem:[%s702 + $0x84] sm:$0xe]
      %v941 = vld [vmem:[%s702 + $0x90] sm:$0xe]
      %v942 = vld [vmem:[%s702 + $0x9c] sm:$0xe]
      %v943 = vld [vmem:[%s702 + $0xa8] sm:$0xe]
      %v944 = vld [vmem:[%s702 + $0xb4] sm:$0xe]
      %s945 = scalar_lea.vmem [#allocation2], 24
      %v946 = vld [vmem:[%s945] sm:$0xf]
      %v947 = vld [vmem:[%s945 + $0x4] sm:$0xf]
      %v948 = vld [vmem:[%s945 + $0xc] sm:$0xf]
      %v949 = vld [vmem:[%s945 + $0x10] sm:$0xf]
      %v950 = vld [vmem:[%s945 + $0x18] sm:$0xf]
      %v951 = vld [vmem:[%s945 + $0x1c] sm:$0xf]
      %v952 = vld [vmem:[%s945 + $0x24] sm:$0xf]
      %v953 = vld [vmem:[%s945 + $0x28] sm:$0xf]
      %v954 = vld [vmem:[%s945 + $0x30] sm:$0xf]
      %v955 = vld [vmem:[%s945 + $0x34] sm:$0xf]
      %v956 = vld [vmem:[%s945 + $0x3c] sm:$0xf]
      %v957 = vld [vmem:[%s945 + $0x40] sm:$0xf]
      %v958 = vld [vmem:[%s945 + $0x48] sm:$0xf]
      %v959 = vld [vmem:[%s945 + $0x4c] sm:$0xf]
      %v960 = vld [vmem:[%s945 + $0x54] sm:$0xf]
      %v961 = vld [vmem:[%s945 + $0x58] sm:$0xf]
      %v962 = vld [vmem:[%s945 + $0x60] sm:$0xf]
      %v963 = vld [vmem:[%s945 + $0x64] sm:$0xf]
      %v964 = vld [vmem:[%s945 + $0x6c] sm:$0xf]
      %v965 = vld [vmem:[%s945 + $0x70] sm:$0xf]
      %v966 = vld [vmem:[%s945 + $0x78] sm:$0xf]
      %v967 = vld [vmem:[%s945 + $0x7c] sm:$0xf]
      %v968 = vld [vmem:[%s945 + $0x84] sm:$0xf]
      %v969 = vld [vmem:[%s945 + $0x88] sm:$0xf]
      %v970 = vld [vmem:[%s945 + $0x90] sm:$0xf]
      %v971 = vld [vmem:[%s945 + $0x94] sm:$0xf]
      %v972 = vld [vmem:[%s945 + $0x9c] sm:$0xf]
      %v973 = vld [vmem:[%s945 + $0xa0] sm:$0xf]
      %v974 = vld [vmem:[%s945 + $0xa8] sm:$0xf]
      %v975 = vld [vmem:[%s945 + $0xac] sm:$0xf]
      %v976 = vld [vmem:[%s945 + $0xb4] sm:$0xf]
      %v977 = vld [vmem:[%s945 + $0xb8] sm:$0xf]
      %v978 = vld [vmem:[%s945 + $0x8] sm:$0x1]
      %v979 = vld [vmem:[%s945 + $0x14] sm:$0x1]
      %v980 = vld [vmem:[%s945 + $0x20] sm:$0x1]
      %v981 = vld [vmem:[%s945 + $0x2c] sm:$0x1]
      %v982 = vld [vmem:[%s945 + $0x38] sm:$0x1]
      %v983 = vld [vmem:[%s945 + $0x44] sm:$0x1]
      %v984 = vld [vmem:[%s945 + $0x50] sm:$0x1]
      %v985 = vld [vmem:[%s945 + $0x5c] sm:$0x1]
      %v986 = vld [vmem:[%s945 + $0x68] sm:$0x1]
      %v987 = vld [vmem:[%s945 + $0x74] sm:$0x1]
      %v988 = vld [vmem:[%s945 + $0x80] sm:$0x1]
      %v989 = vld [vmem:[%s945 + $0x8c] sm:$0x1]
      %v990 = vld [vmem:[%s945 + $0x98] sm:$0x1]
      %v991 = vld [vmem:[%s945 + $0xa4] sm:$0x1]
      %v992 = vld [vmem:[%s945 + $0xb0] sm:$0x1]
      %v993 = vld [vmem:[%s945 + $0xbc] sm:$0x1]
      %v994 = vld [vmem:[%s945] sm:$0xe]
      %v995 = vld [vmem:[%s945 + $0xc] sm:$0xe]
      %v996 = vld [vmem:[%s945 + $0x18] sm:$0xe]
      %v997 = vld [vmem:[%s945 + $0x24] sm:$0xe]
      %v998 = vld [vmem:[%s945 + $0x30] sm:$0xe]
      %v999 = vld [vmem:[%s945 + $0x3c] sm:$0xe]
      %v1000 = vld [vmem:[%s945 + $0x48] sm:$0xe]
      %v1001 = vld [vmem:[%s945 + $0x54] sm:$0xe]
      %v1002 = vld [vmem:[%s945 + $0x60] sm:$0xe]
      %v1003 = vld [vmem:[%s945 + $0x6c] sm:$0xe]
      %v1004 = vld [vmem:[%s945 + $0x78] sm:$0xe]
      %v1005 = vld [vmem:[%s945 + $0x84] sm:$0xe]
      %v1006 = vld [vmem:[%s945 + $0x90] sm:$0xe]
      %v1007 = vld [vmem:[%s945 + $0x9c] sm:$0xe]
      %v1008 = vld [vmem:[%s945 + $0xa8] sm:$0xe]
      %v1009 = vld [vmem:[%s945 + $0xb4] sm:$0xe]
      %v1042 = vunpack.c.l.b16 %v817
      %v1043 = vunpack.c.l.b16 %v818
      %v1044 = vunpack.c.l.b16 %v819
      %v1045 = vunpack.c.l.b16 %v820
      %v1046 = vunpack.c.l.b16 %v821
      %v1047 = vunpack.c.l.b16 %v822
      %v1048 = vunpack.c.l.b16 %v823
      %v1049 = vunpack.c.l.b16 %v824
      %v1050 = vunpack.c.l.b16 %v825
      %v1051 = vunpack.c.l.b16 %v826
      %v1052 = vunpack.c.l.b16 %v827
      %v1053 = vunpack.c.l.b16 %v828
      %v1054 = vunpack.c.l.b16 %v829
      %v1055 = vunpack.c.l.b16 %v830
      %v1056 = vunpack.c.l.b16 %v831
      %v1057 = vunpack.c.l.b16 %v832
      %v1058 = vunpack.c.l.b16 %v833
      %v1059 = vunpack.c.l.b16 %v834
      %v1060 = vunpack.c.l.b16 %v835
      %v1061 = vunpack.c.l.b16 %v836
      %v1062 = vunpack.c.l.b16 %v837
      %v1063 = vunpack.c.l.b16 %v838
      %v1064 = vunpack.c.l.b16 %v839
      %v1065 = vunpack.c.l.b16 %v840
      %v1066 = vunpack.c.l.b16 %v841
      %v1067 = vunpack.c.l.b16 %v842
      %v1068 = vunpack.c.l.b16 %v843
      %v1069 = vunpack.c.l.b16 %v844
      %v1070 = vunpack.c.l.b16 %v845
      %v1071 = vunpack.c.l.b16 %v846
      %v1072 = vunpack.c.l.b16 %v847
      %v1073 = vunpack.c.l.b16 %v848
      %v1074 = vpack.c.b16 %v1043, %v1042
      %v1075 = vpack.c.b16 %v1045, %v1044
      %v1076 = vpack.c.b16 %v1047, %v1046
      %v1077 = vpack.c.b16 %v1049, %v1048
      %v1078 = vpack.c.b16 %v1051, %v1050
      %v1079 = vpack.c.b16 %v1053, %v1052
      %v1080 = vpack.c.b16 %v1055, %v1054
      %v1081 = vpack.c.b16 %v1057, %v1056
      %v1082 = vpack.c.b16 %v1059, %v1058
      %v1083 = vpack.c.b16 %v1061, %v1060
      %v1084 = vpack.c.b16 %v1063, %v1062
      %v1085 = vpack.c.b16 %v1065, %v1064
      %v1086 = vpack.c.b16 %v1067, %v1066
      %v1087 = vpack.c.b16 %v1069, %v1068
      %v1088 = vpack.c.b16 %v1071, %v1070
      %v1089 = vpack.c.b16 %v1073, %v1072
      %v1106 = vunpack.c.l.b16 %v849
      %v1107 = vunpack.c.l.b16 %v850
      %v1108 = vunpack.c.l.b16 %v851
      %v1109 = vunpack.c.l.b16 %v852
      %v1110 = vunpack.c.l.b16 %v853
      %v1111 = vunpack.c.l.b16 %v854
      %v1112 = vunpack.c.l.b16 %v855
      %v1113 = vunpack.c.l.b16 %v856
      %v1114 = vunpack.c.l.b16 %v857
      %v1115 = vunpack.c.l.b16 %v858
      %v1116 = vunpack.c.l.b16 %v859
      %v1117 = vunpack.c.l.b16 %v860
      %v1118 = vunpack.c.l.b16 %v861
      %v1119 = vunpack.c.l.b16 %v862
      %v1120 = vunpack.c.l.b16 %v863
      %v1121 = vunpack.c.l.b16 %v864
      %v1122 = vpack.c.b16 %v1106, %v1106
      %v1123 = vpack.c.b16 %v1107, %v1107
      %v1124 = vpack.c.b16 %v1108, %v1108
      %v1125 = vpack.c.b16 %v1109, %v1109
      %v1126 = vpack.c.b16 %v1110, %v1110
      %v1127 = vpack.c.b16 %v1111, %v1111
      %v1128 = vpack.c.b16 %v1112, %v1112
      %v1129 = vpack.c.b16 %v1113, %v1113
      %v1130 = vpack.c.b16 %v1114, %v1114
      %v1131 = vpack.c.b16 %v1115, %v1115
      %v1132 = vpack.c.b16 %v1116, %v1116
      %v1133 = vpack.c.b16 %v1117, %v1117
      %v1134 = vpack.c.b16 %v1118, %v1118
      %v1135 = vpack.c.b16 %v1119, %v1119
      %v1136 = vpack.c.b16 %v1120, %v1120
      %v1137 = vpack.c.b16 %v1121, %v1121
      %vm1138 = vsmask.f32 7424
      %v1140 = vshrl.u32 %v1074, 16
      %v1142 = vshll.u32 %v1074, 16
      %v1144 = vrot.slane %v1142, 1
      %v1145 = vor.u32 %v1140, %v1144
      %v1147 = vshll.u32 %v1122, 16
      %v1149 = vrot.slane %v1147, 1
      %v1150 = vsel %vm1138, %v1145, %v1149
      %v1152 = vshrl.u32 %v1075, 16
      %v1154 = vshll.u32 %v1075, 16
      %v1156 = vrot.slane %v1154, 1
      %v1157 = vor.u32 %v1152, %v1156
      %v1159 = vshll.u32 %v1123, 16
      %v1161 = vrot.slane %v1159, 1
      %v1162 = vsel %vm1138, %v1157, %v1161
      %v1164 = vshrl.u32 %v1076, 16
      %v1166 = vshll.u32 %v1076, 16
      %v1168 = vrot.slane %v1166, 1
      %v1169 = vor.u32 %v1164, %v1168
      %v1171 = vshll.u32 %v1124, 16
      %v1173 = vrot.slane %v1171, 1
      %v1174 = vsel %vm1138, %v1169, %v1173
      %v1176 = vshrl.u32 %v1077, 16
      %v1178 = vshll.u32 %v1077, 16
      %v1180 = vrot.slane %v1178, 1
      %v1181 = vor.u32 %v1176, %v1180
      %v1183 = vshll.u32 %v1125, 16
      %v1185 = vrot.slane %v1183, 1
      %v1186 = vsel %vm1138, %v1181, %v1185
      %v1188 = vshrl.u32 %v1078, 16
      %v1190 = vshll.u32 %v1078, 16
      %v1192 = vrot.slane %v1190, 1
      %v1193 = vor.u32 %v1188, %v1192
      %v1195 = vshll.u32 %v1126, 16
      %v1197 = vrot.slane %v1195, 1
      %v1198 = vsel %vm1138, %v1193, %v1197
      %v1200 = vshrl.u32 %v1079, 16
      %v1202 = vshll.u32 %v1079, 16
      %v1204 = vrot.slane %v1202, 1
      %v1205 = vor.u32 %v1200, %v1204
      %v1207 = vshll.u32 %v1127, 16
      %v1209 = vrot.slane %v1207, 1
      %v1210 = vsel %vm1138, %v1205, %v1209
      %v1212 = vshrl.u32 %v1080, 16
      %v1214 = vshll.u32 %v1080, 16
      %v1216 = vrot.slane %v1214, 1
      %v1217 = vor.u32 %v1212, %v1216
      %v1219 = vshll.u32 %v1128, 16
      %v1221 = vrot.slane %v1219, 1
      %v1222 = vsel %vm1138, %v1217, %v1221
      %v1224 = vshrl.u32 %v1081, 16
      %v1226 = vshll.u32 %v1081, 16
      %v1228 = vrot.slane %v1226, 1
      %v1229 = vor.u32 %v1224, %v1228
      %v1231 = vshll.u32 %v1129, 16
      %v1233 = vrot.slane %v1231, 1
      %v1234 = vsel %vm1138, %v1229, %v1233
      %v1236 = vshrl.u32 %v1082, 16
      %v1238 = vshll.u32 %v1082, 16
      %v1240 = vrot.slane %v1238, 1
      %v1241 = vor.u32 %v1236, %v1240
      %v1243 = vshll.u32 %v1130, 16
      %v1245 = vrot.slane %v1243, 1
      %v1246 = vsel %vm1138, %v1241, %v1245
      %v1248 = vshrl.u32 %v1083, 16
      %v1250 = vshll.u32 %v1083, 16
      %v1252 = vrot.slane %v1250, 1
      %v1253 = vor.u32 %v1248, %v1252
      %v1255 = vshll.u32 %v1131, 16
      %v1257 = vrot.slane %v1255, 1
      %v1258 = vsel %vm1138, %v1253, %v1257
      %v1260 = vshrl.u32 %v1084, 16
      %v1262 = vshll.u32 %v1084, 16
      %v1264 = vrot.slane %v1262, 1
      %v1265 = vor.u32 %v1260, %v1264
      %v1267 = vshll.u32 %v1132, 16
      %v1269 = vrot.slane %v1267, 1
      %v1270 = vsel %vm1138, %v1265, %v1269
      %v1272 = vshrl.u32 %v1085, 16
      %v1274 = vshll.u32 %v1085, 16
      %v1276 = vrot.slane %v1274, 1
      %v1277 = vor.u32 %v1272, %v1276
      %v1279 = vshll.u32 %v1133, 16
      %v1281 = vrot.slane %v1279, 1
      %v1282 = vsel %vm1138, %v1277, %v1281
      %v1284 = vshrl.u32 %v1086, 16
      %v1286 = vshll.u32 %v1086, 16
      %v1288 = vrot.slane %v1286, 1
      %v1289 = vor.u32 %v1284, %v1288
      %v1291 = vshll.u32 %v1134, 16
      %v1293 = vrot.slane %v1291, 1
      %v1294 = vsel %vm1138, %v1289, %v1293
      %v1296 = vshrl.u32 %v1087, 16
      %v1298 = vshll.u32 %v1087, 16
      %v1300 = vrot.slane %v1298, 1
      %v1301 = vor.u32 %v1296, %v1300
      %v1303 = vshll.u32 %v1135, 16
      %v1305 = vrot.slane %v1303, 1
      %v1306 = vsel %vm1138, %v1301, %v1305
      %v1308 = vshrl.u32 %v1088, 16
      %v1310 = vshll.u32 %v1088, 16
      %v1312 = vrot.slane %v1310, 1
      %v1313 = vor.u32 %v1308, %v1312
      %v1315 = vshll.u32 %v1136, 16
      %v1317 = vrot.slane %v1315, 1
      %v1318 = vsel %vm1138, %v1313, %v1317
      %v1320 = vshrl.u32 %v1089, 16
      %v1322 = vshll.u32 %v1089, 16
      %v1324 = vrot.slane %v1322, 1
      %v1325 = vor.u32 %v1320, %v1324
      %v1327 = vshll.u32 %v1137, 16
      %v1329 = vrot.slane %v1327, 1
      %v1330 = vsel %vm1138, %v1325, %v1329
      %1331 = vrot.lane.b32.xlu0 %v1150, 4
      %v1332 = vpop.permute.xlu0 %1331
      %1333 = vrot.lane.b32.xlu0 %v1162, 4
      %v1334 = vpop.permute.xlu0 %1333
      %1335 = vrot.lane.b32.xlu0 %v1174, 4
      %v1336 = vpop.permute.xlu0 %1335
      %1337 = vrot.lane.b32.xlu0 %v1186, 4
      %v1338 = vpop.permute.xlu0 %1337
      %1339 = vrot.lane.b32.xlu0 %v1198, 4
      %v1340 = vpop.permute.xlu0 %1339
      %1341 = vrot.lane.b32.xlu0 %v1210, 4
      %v1342 = vpop.permute.xlu0 %1341
      %1343 = vrot.lane.b32.xlu0 %v1222, 4
      %v1344 = vpop.permute.xlu0 %1343
      %1345 = vrot.lane.b32.xlu0 %v1234, 4
      %v1346 = vpop.permute.xlu0 %1345
      %1347 = vrot.lane.b32.xlu0 %v1246, 4
      %v1348 = vpop.permute.xlu0 %1347
      %1349 = vrot.lane.b32.xlu0 %v1258, 4
      %v1350 = vpop.permute.xlu0 %1349
      %1351 = vrot.lane.b32.xlu0 %v1270, 4
      %v1352 = vpop.permute.xlu0 %1351
      %1353 = vrot.lane.b32.xlu0 %v1282, 4
      %v1354 = vpop.permute.xlu0 %1353
      %1355 = vrot.lane.b32.xlu0 %v1294, 4
      %v1356 = vpop.permute.xlu0 %1355
      %1357 = vrot.lane.b32.xlu0 %v1306, 4
      %v1358 = vpop.permute.xlu0 %1357
      %1359 = vrot.lane.b32.xlu0 %v1318, 4
      %v1360 = vpop.permute.xlu0 %1359
      %1361 = vrot.lane.b32.xlu0 %v1330, 4
      %v1362 = vpop.permute.xlu0 %1361
      %v1379 = vunpack.c.l.b16 %v865
      %v1380 = vunpack.c.l.b16 %v866
      %v1381 = vunpack.c.l.b16 %v867
      %v1382 = vunpack.c.l.b16 %v868
      %v1383 = vunpack.c.l.b16 %v869
      %v1384 = vunpack.c.l.b16 %v870
      %v1385 = vunpack.c.l.b16 %v871
      %v1386 = vunpack.c.l.b16 %v872
      %v1387 = vunpack.c.l.b16 %v873
      %v1388 = vunpack.c.l.b16 %v874
      %v1389 = vunpack.c.l.b16 %v875
      %v1390 = vunpack.c.l.b16 %v876
      %v1391 = vunpack.c.l.b16 %v877
      %v1392 = vunpack.c.l.b16 %v878
      %v1393 = vunpack.c.l.b16 %v879
      %v1394 = vunpack.c.l.b16 %v880
      %v1395 = vpack.c.b16 %v1043, %v1379
      %v1396 = vpack.c.b16 %v1045, %v1380
      %v1397 = vpack.c.b16 %v1047, %v1381
      %v1398 = vpack.c.b16 %v1049, %v1382
      %v1399 = vpack.c.b16 %v1051, %v1383
      %v1400 = vpack.c.b16 %v1053, %v1384
      %v1401 = vpack.c.b16 %v1055, %v1385
      %v1402 = vpack.c.b16 %v1057, %v1386
      %v1403 = vpack.c.b16 %v1059, %v1387
      %v1404 = vpack.c.b16 %v1061, %v1388
      %v1405 = vpack.c.b16 %v1063, %v1389
      %v1406 = vpack.c.b16 %v1065, %v1390
      %v1407 = vpack.c.b16 %v1067, %v1391
      %v1408 = vpack.c.b16 %v1069, %v1392
      %v1409 = vpack.c.b16 %v1071, %v1393
      %v1410 = vpack.c.b16 %v1073, %v1394
      %vm1411 = vcmask 1046528
      %v1412 = vrot.slane %v1395, 1
      %v1413 = vrot.slane %v1122, 1
      %v1414 = vsel %vm1411, %v1412, %v1413
      %v1415 = vrot.slane %v1396, 1
      %v1416 = vrot.slane %v1123, 1
      %v1417 = vsel %vm1411, %v1415, %v1416
      %v1418 = vrot.slane %v1397, 1
      %v1419 = vrot.slane %v1124, 1
      %v1420 = vsel %vm1411, %v1418, %v1419
      %v1421 = vrot.slane %v1398, 1
      %v1422 = vrot.slane %v1125, 1
      %v1423 = vsel %vm1411, %v1421, %v1422
      %v1424 = vrot.slane %v1399, 1
      %v1425 = vrot.slane %v1126, 1
      %v1426 = vsel %vm1411, %v1424, %v1425
      %v1427 = vrot.slane %v1400, 1
      %v1428 = vrot.slane %v1127, 1
      %v1429 = vsel %vm1411, %v1427, %v1428
      %v1430 = vrot.slane %v1401, 1
      %v1431 = vrot.slane %v1128, 1
      %v1432 = vsel %vm1411, %v1430, %v1431
      %v1433 = vrot.slane %v1402, 1
      %v1434 = vrot.slane %v1129, 1
      %v1435 = vsel %vm1411, %v1433, %v1434
      %v1436 = vrot.slane %v1403, 1
      %v1437 = vrot.slane %v1130, 1
      %v1438 = vsel %vm1411, %v1436, %v1437
      %v1439 = vrot.slane %v1404, 1
      %v1440 = vrot.slane %v1131, 1
      %v1441 = vsel %vm1411, %v1439, %v1440
      %v1442 = vrot.slane %v1405, 1
      %v1443 = vrot.slane %v1132, 1
      %v1444 = vsel %vm1411, %v1442, %v1443
      %v1445 = vrot.slane %v1406, 1
      %v1446 = vrot.slane %v1133, 1
      %v1447 = vsel %vm1411, %v1445, %v1446
      %v1448 = vrot.slane %v1407, 1
      %v1449 = vrot.slane %v1134, 1
      %v1450 = vsel %vm1411, %v1448, %v1449
      %v1451 = vrot.slane %v1408, 1
      %v1452 = vrot.slane %v1135, 1
      %v1453 = vsel %vm1411, %v1451, %v1452
      %v1454 = vrot.slane %v1409, 1
      %v1455 = vrot.slane %v1136, 1
      %v1456 = vsel %vm1411, %v1454, %v1455
      %v1457 = vrot.slane %v1410, 1
      %v1458 = vrot.slane %v1137, 1
      %v1459 = vsel %vm1411, %v1457, %v1458
      %1460 = vrot.lane.b32.xlu0 %v1414, 8
      %v1461 = vpop.permute.xlu0 %1460
      %1462 = vrot.lane.b32.xlu0 %v1417, 8
      %v1463 = vpop.permute.xlu0 %1462
      %1464 = vrot.lane.b32.xlu0 %v1420, 8
      %v1465 = vpop.permute.xlu0 %1464
      %1466 = vrot.lane.b32.xlu0 %v1423, 8
      %v1467 = vpop.permute.xlu0 %1466
      %1468 = vrot.lane.b32.xlu0 %v1426, 8
      %v1469 = vpop.permute.xlu0 %1468
      %1470 = vrot.lane.b32.xlu0 %v1429, 8
      %v1471 = vpop.permute.xlu0 %1470
      %1472 = vrot.lane.b32.xlu0 %v1432, 8
      %v1473 = vpop.permute.xlu0 %1472
      %1474 = vrot.lane.b32.xlu0 %v1435, 8
      %v1475 = vpop.permute.xlu0 %1474
      %1476 = vrot.lane.b32.xlu0 %v1438, 8
      %v1477 = vpop.permute.xlu0 %1476
      %1478 = vrot.lane.b32.xlu0 %v1441, 8
      %v1479 = vpop.permute.xlu0 %1478
      %1480 = vrot.lane.b32.xlu0 %v1444, 8
      %v1481 = vpop.permute.xlu0 %1480
      %1482 = vrot.lane.b32.xlu0 %v1447, 8
      %v1483 = vpop.permute.xlu0 %1482
      %1484 = vrot.lane.b32.xlu0 %v1450, 8
      %v1485 = vpop.permute.xlu0 %1484
      %1486 = vrot.lane.b32.xlu0 %v1453, 8
      %v1487 = vpop.permute.xlu0 %1486
      %1488 = vrot.lane.b32.xlu0 %v1456, 8
      %v1489 = vpop.permute.xlu0 %1488
      %1490 = vrot.lane.b32.xlu0 %v1459, 8
      %v1491 = vpop.permute.xlu0 %1490
      %v1524 = vunpack.c.l.b16 %v881
      %v1525 = vunpack.c.l.b16 %v882
      %v1526 = vunpack.c.l.b16 %v883
      %v1527 = vunpack.c.l.b16 %v884
      %v1528 = vunpack.c.l.b16 %v885
      %v1529 = vunpack.c.l.b16 %v886
      %v1530 = vunpack.c.l.b16 %v887
      %v1531 = vunpack.c.l.b16 %v888
      %v1532 = vunpack.c.l.b16 %v889
      %v1533 = vunpack.c.l.b16 %v890
      %v1534 = vunpack.c.l.b16 %v891
      %v1535 = vunpack.c.l.b16 %v892
      %v1536 = vunpack.c.l.b16 %v893
      %v1537 = vunpack.c.l.b16 %v894
      %v1538 = vunpack.c.l.b16 %v895
      %v1539 = vunpack.c.l.b16 %v896
      %v1540 = vunpack.c.l.b16 %v897
      %v1541 = vunpack.c.l.b16 %v898
      %v1542 = vunpack.c.l.b16 %v899
      %v1543 = vunpack.c.l.b16 %v900
      %v1544 = vunpack.c.l.b16 %v901
      %v1545 = vunpack.c.l.b16 %v902
      %v1546 = vunpack.c.l.b16 %v903
      %v1547 = vunpack.c.l.b16 %v904
      %v1548 = vunpack.c.l.b16 %v905
      %v1549 = vunpack.c.l.b16 %v906
      %v1550 = vunpack.c.l.b16 %v907
      %v1551 = vunpack.c.l.b16 %v908
      %v1552 = vunpack.c.l.b16 %v909
      %v1553 = vunpack.c.l.b16 %v910
      %v1554 = vunpack.c.l.b16 %v911
      %v1555 = vunpack.c.l.b16 %v912
      %v1556 = vpack.c.b16 %v1525, %v1524
      %v1557 = vpack.c.b16 %v1527, %v1526
      %v1558 = vpack.c.b16 %v1529, %v1528
      %v1559 = vpack.c.b16 %v1531, %v1530
      %v1560 = vpack.c.b16 %v1533, %v1532
      %v1561 = vpack.c.b16 %v1535, %v1534
      %v1562 = vpack.c.b16 %v1537, %v1536
      %v1563 = vpack.c.b16 %v1539, %v1538
      %v1564 = vpack.c.b16 %v1541, %v1540
      %v1565 = vpack.c.b16 %v1543, %v1542
      %v1566 = vpack.c.b16 %v1545, %v1544
      %v1567 = vpack.c.b16 %v1547, %v1546
      %v1568 = vpack.c.b16 %v1549, %v1548
      %v1569 = vpack.c.b16 %v1551, %v1550
      %v1570 = vpack.c.b16 %v1553, %v1552
      %v1571 = vpack.c.b16 %v1555, %v1554
      %1572 = vrot.lane.b32.xlu0 %v1556, 12
      %v1573 = vpop.permute.xlu0 %1572
      %1574 = vrot.lane.b32.xlu0 %v1557, 12
      %v1575 = vpop.permute.xlu0 %1574
      %1576 = vrot.lane.b32.xlu0 %v1558, 12
      %v1577 = vpop.permute.xlu0 %1576
      %1578 = vrot.lane.b32.xlu0 %v1559, 12
      %v1579 = vpop.permute.xlu0 %1578
      %1580 = vrot.lane.b32.xlu0 %v1560, 12
      %v1581 = vpop.permute.xlu0 %1580
      %1582 = vrot.lane.b32.xlu0 %v1561, 12
      %v1583 = vpop.permute.xlu0 %1582
      %1584 = vrot.lane.b32.xlu0 %v1562, 12
      %v1585 = vpop.permute.xlu0 %1584
      %1586 = vrot.lane.b32.xlu0 %v1563, 12
      %v1587 = vpop.permute.xlu0 %1586
      %1588 = vrot.lane.b32.xlu0 %v1564, 12
      %v1589 = vpop.permute.xlu0 %1588
      %1590 = vrot.lane.b32.xlu0 %v1565, 12
      %v1591 = vpop.permute.xlu0 %1590
      %1592 = vrot.lane.b32.xlu0 %v1566, 12
      %v1593 = vpop.permute.xlu0 %1592
      %1594 = vrot.lane.b32.xlu0 %v1567, 12
      %v1595 = vpop.permute.xlu0 %1594
      %1596 = vrot.lane.b32.xlu0 %v1568, 12
      %v1597 = vpop.permute.xlu0 %1596
      %1598 = vrot.lane.b32.xlu0 %v1569, 12
      %v1599 = vpop.permute.xlu0 %1598
      %1600 = vrot.lane.b32.xlu0 %v1570, 12
      %v1601 = vpop.permute.xlu0 %1600
      %1602 = vrot.lane.b32.xlu0 %v1571, 12
      %v1603 = vpop.permute.xlu0 %1602
      %v1620 = vunpack.c.l.b16 %v913
      %v1621 = vunpack.c.l.b16 %v914
      %v1622 = vunpack.c.l.b16 %v915
      %v1623 = vunpack.c.l.b16 %v916
      %v1624 = vunpack.c.l.b16 %v917
      %v1625 = vunpack.c.l.b16 %v918
      %v1626 = vunpack.c.l.b16 %v919
      %v1627 = vunpack.c.l.b16 %v920
      %v1628 = vunpack.c.l.b16 %v921
      %v1629 = vunpack.c.l.b16 %v922
      %v1630 = vunpack.c.l.b16 %v923
      %v1631 = vunpack.c.l.b16 %v924
      %v1632 = vunpack.c.l.b16 %v925
      %v1633 = vunpack.c.l.b16 %v926
      %v1634 = vunpack.c.l.b16 %v927
      %v1635 = vunpack.c.l.b16 %v928
      %v1636 = vpack.c.b16 %v1620, %v1620
      %v1637 = vpack.c.b16 %v1621, %v1621
      %v1638 = vpack.c.b16 %v1622, %v1622
      %v1639 = vpack.c.b16 %v1623, %v1623
      %v1640 = vpack.c.b16 %v1624, %v1624
      %v1641 = vpack.c.b16 %v1625, %v1625
      %v1642 = vpack.c.b16 %v1626, %v1626
      %v1643 = vpack.c.b16 %v1627, %v1627
      %v1644 = vpack.c.b16 %v1628, %v1628
      %v1645 = vpack.c.b16 %v1629, %v1629
      %v1646 = vpack.c.b16 %v1630, %v1630
      %v1647 = vpack.c.b16 %v1631, %v1631
      %v1648 = vpack.c.b16 %v1632, %v1632
      %v1649 = vpack.c.b16 %v1633, %v1633
      %v1650 = vpack.c.b16 %v1634, %v1634
      %v1651 = vpack.c.b16 %v1635, %v1635
      %v1653 = vshrl.u32 %v1556, 16
      %v1655 = vshll.u32 %v1556, 16
      %v1657 = vrot.slane %v1655, 1
      %v1658 = vor.u32 %v1653, %v1657
      %v1660 = vshll.u32 %v1636, 16
      %v1662 = vrot.slane %v1660, 1
      %v1663 = vsel %vm1138, %v1658, %v1662
      %v1665 = vshrl.u32 %v1557, 16
      %v1667 = vshll.u32 %v1557, 16
      %v1669 = vrot.slane %v1667, 1
      %v1670 = vor.u32 %v1665, %v1669
      %v1672 = vshll.u32 %v1637, 16
      %v1674 = vrot.slane %v1672, 1
      %v1675 = vsel %vm1138, %v1670, %v1674
      %v1677 = vshrl.u32 %v1558, 16
      %v1679 = vshll.u32 %v1558, 16
      %v1681 = vrot.slane %v1679, 1
      %v1682 = vor.u32 %v1677, %v1681
      %v1684 = vshll.u32 %v1638, 16
      %v1686 = vrot.slane %v1684, 1
      %v1687 = vsel %vm1138, %v1682, %v1686
      %v1689 = vshrl.u32 %v1559, 16
      %v1691 = vshll.u32 %v1559, 16
      %v1693 = vrot.slane %v1691, 1
      %v1694 = vor.u32 %v1689, %v1693
      %v1696 = vshll.u32 %v1639, 16
      %v1698 = vrot.slane %v1696, 1
      %v1699 = vsel %vm1138, %v1694, %v1698
      %v1701 = vshrl.u32 %v1560, 16
      %v1703 = vshll.u32 %v1560, 16
      %v1705 = vrot.slane %v1703, 1
      %v1706 = vor.u32 %v1701, %v1705
      %v1708 = vshll.u32 %v1640, 16
      %v1710 = vrot.slane %v1708, 1
      %v1711 = vsel %vm1138, %v1706, %v1710
      %v1713 = vshrl.u32 %v1561, 16
      %v1715 = vshll.u32 %v1561, 16
      %v1717 = vrot.slane %v1715, 1
      %v1718 = vor.u32 %v1713, %v1717
      %v1720 = vshll.u32 %v1641, 16
      %v1722 = vrot.slane %v1720, 1
      %v1723 = vsel %vm1138, %v1718, %v1722
      %v1725 = vshrl.u32 %v1562, 16
      %v1727 = vshll.u32 %v1562, 16
      %v1729 = vrot.slane %v1727, 1
      %v1730 = vor.u32 %v1725, %v1729
      %v1732 = vshll.u32 %v1642, 16
      %v1734 = vrot.slane %v1732, 1
      %v1735 = vsel %vm1138, %v1730, %v1734
      %v1737 = vshrl.u32 %v1563, 16
      %v1739 = vshll.u32 %v1563, 16
      %v1741 = vrot.slane %v1739, 1
      %v1742 = vor.u32 %v1737, %v1741
      %v1744 = vshll.u32 %v1643, 16
      %v1746 = vrot.slane %v1744, 1
      %v1747 = vsel %vm1138, %v1742, %v1746
      %v1749 = vshrl.u32 %v1564, 16
      %v1751 = vshll.u32 %v1564, 16
      %v1753 = vrot.slane %v1751, 1
      %v1754 = vor.u32 %v1749, %v1753
      %v1756 = vshll.u32 %v1644, 16
      %v1758 = vrot.slane %v1756, 1
      %v1759 = vsel %vm1138, %v1754, %v1758
      %v1761 = vshrl.u32 %v1565, 16
      %v1763 = vshll.u32 %v1565, 16
      %v1765 = vrot.slane %v1763, 1
      %v1766 = vor.u32 %v1761, %v1765
      %v1768 = vshll.u32 %v1645, 16
      %v1770 = vrot.slane %v1768, 1
      %v1771 = vsel %vm1138, %v1766, %v1770
      %v1773 = vshrl.u32 %v1566, 16
      %v1775 = vshll.u32 %v1566, 16
      %v1777 = vrot.slane %v1775, 1
      %v1778 = vor.u32 %v1773, %v1777
      %v1780 = vshll.u32 %v1646, 16
      %v1782 = vrot.slane %v1780, 1
      %v1783 = vsel %vm1138, %v1778, %v1782
      %v1785 = vshrl.u32 %v1567, 16
      %v1787 = vshll.u32 %v1567, 16
      %v1789 = vrot.slane %v1787, 1
      %v1790 = vor.u32 %v1785, %v1789
      %v1792 = vshll.u32 %v1647, 16
      %v1794 = vrot.slane %v1792, 1
      %v1795 = vsel %vm1138, %v1790, %v1794
      %v1797 = vshrl.u32 %v1568, 16
      %v1799 = vshll.u32 %v1568, 16
      %v1801 = vrot.slane %v1799, 1
      %v1802 = vor.u32 %v1797, %v1801
      %v1804 = vshll.u32 %v1648, 16
      %v1806 = vrot.slane %v1804, 1
      %v1807 = vsel %vm1138, %v1802, %v1806
      %v1809 = vshrl.u32 %v1569, 16
      %v1811 = vshll.u32 %v1569, 16
      %v1813 = vrot.slane %v1811, 1
      %v1814 = vor.u32 %v1809, %v1813
      %v1816 = vshll.u32 %v1649, 16
      %v1818 = vrot.slane %v1816, 1
      %v1819 = vsel %vm1138, %v1814, %v1818
      %v1821 = vshrl.u32 %v1570, 16
      %v1823 = vshll.u32 %v1570, 16
      %v1825 = vrot.slane %v1823, 1
      %v1826 = vor.u32 %v1821, %v1825
      %v1828 = vshll.u32 %v1650, 16
      %v1830 = vrot.slane %v1828, 1
      %v1831 = vsel %vm1138, %v1826, %v1830
      %v1833 = vshrl.u32 %v1571, 16
      %v1835 = vshll.u32 %v1571, 16
      %v1837 = vrot.slane %v1835, 1
      %v1838 = vor.u32 %v1833, %v1837
      %v1840 = vshll.u32 %v1651, 16
      %v1842 = vrot.slane %v1840, 1
      %v1843 = vsel %vm1138, %v1838, %v1842
      %1844 = vrot.lane.b32.xlu0 %v1663, 16
      %v1845 = vpop.permute.xlu0 %1844
      %1846 = vrot.lane.b32.xlu0 %v1675, 16
      %v1847 = vpop.permute.xlu0 %1846
      %1848 = vrot.lane.b32.xlu0 %v1687, 16
      %v1849 = vpop.permute.xlu0 %1848
      %1850 = vrot.lane.b32.xlu0 %v1699, 16
      %v1851 = vpop.permute.xlu0 %1850
      %1852 = vrot.lane.b32.xlu0 %v1711, 16
      %v1853 = vpop.permute.xlu0 %1852
      %1854 = vrot.lane.b32.xlu0 %v1723, 16
      %v1855 = vpop.permute.xlu0 %1854
      %1856 = vrot.lane.b32.xlu0 %v1735, 16
      %v1857 = vpop.permute.xlu0 %1856
      %1858 = vrot.lane.b32.xlu0 %v1747, 16
      %v1859 = vpop.permute.xlu0 %1858
      %1860 = vrot.lane.b32.xlu0 %v1759, 16
      %v1861 = vpop.permute.xlu0 %1860
      %1862 = vrot.lane.b32.xlu0 %v1771, 16
      %v1863 = vpop.permute.xlu0 %1862
      %1864 = vrot.lane.b32.xlu0 %v1783, 16
      %v1865 = vpop.permute.xlu0 %1864
      %1866 = vrot.lane.b32.xlu0 %v1795, 16
      %v1867 = vpop.permute.xlu0 %1866
      %1868 = vrot.lane.b32.xlu0 %v1807, 16
      %v1869 = vpop.permute.xlu0 %1868
      %1870 = vrot.lane.b32.xlu0 %v1819, 16
      %v1871 = vpop.permute.xlu0 %1870
      %1872 = vrot.lane.b32.xlu0 %v1831, 16
      %v1873 = vpop.permute.xlu0 %1872
      %1874 = vrot.lane.b32.xlu0 %v1843, 16
      %v1875 = vpop.permute.xlu0 %1874
      %v1892 = vunpack.c.l.b16 %v929
      %v1893 = vunpack.c.l.b16 %v930
      %v1894 = vunpack.c.l.b16 %v931
      %v1895 = vunpack.c.l.b16 %v932
      %v1896 = vunpack.c.l.b16 %v933
      %v1897 = vunpack.c.l.b16 %v934
      %v1898 = vunpack.c.l.b16 %v935
      %v1899 = vunpack.c.l.b16 %v936
      %v1900 = vunpack.c.l.b16 %v937
      %v1901 = vunpack.c.l.b16 %v938
      %v1902 = vunpack.c.l.b16 %v939
      %v1903 = vunpack.c.l.b16 %v940
      %v1904 = vunpack.c.l.b16 %v941
      %v1905 = vunpack.c.l.b16 %v942
      %v1906 = vunpack.c.l.b16 %v943
      %v1907 = vunpack.c.l.b16 %v944
      %v1908 = vpack.c.b16 %v1525, %v1892
      %v1909 = vpack.c.b16 %v1527, %v1893
      %v1910 = vpack.c.b16 %v1529, %v1894
      %v1911 = vpack.c.b16 %v1531, %v1895
      %v1912 = vpack.c.b16 %v1533, %v1896
      %v1913 = vpack.c.b16 %v1535, %v1897
      %v1914 = vpack.c.b16 %v1537, %v1898
      %v1915 = vpack.c.b16 %v1539, %v1899
      %v1916 = vpack.c.b16 %v1541, %v1900
      %v1917 = vpack.c.b16 %v1543, %v1901
      %v1918 = vpack.c.b16 %v1545, %v1902
      %v1919 = vpack.c.b16 %v1547, %v1903
      %v1920 = vpack.c.b16 %v1549, %v1904
      %v1921 = vpack.c.b16 %v1551, %v1905
      %v1922 = vpack.c.b16 %v1553, %v1906
      %v1923 = vpack.c.b16 %v1555, %v1907
      %v1924 = vrot.slane %v1908, 1
      %v1925 = vrot.slane %v1636, 1
      %v1926 = vsel %vm1411, %v1924, %v1925
      %v1927 = vrot.slane %v1909, 1
      %v1928 = vrot.slane %v1637, 1
      %v1929 = vsel %vm1411, %v1927, %v1928
      %v1930 = vrot.slane %v1910, 1
      %v1931 = vrot.slane %v1638, 1
      %v1932 = vsel %vm1411, %v1930, %v1931
      %v1933 = vrot.slane %v1911, 1
      %v1934 = vrot.slane %v1639, 1
      %v1935 = vsel %vm1411, %v1933, %v1934
      %v1936 = vrot.slane %v1912, 1
      %v1937 = vrot.slane %v1640, 1
      %v1938 = vsel %vm1411, %v1936, %v1937
      %v1939 = vrot.slane %v1913, 1
      %v1940 = vrot.slane %v1641, 1
      %v1941 = vsel %vm1411, %v1939, %v1940
      %v1942 = vrot.slane %v1914, 1
      %v1943 = vrot.slane %v1642, 1
      %v1944 = vsel %vm1411, %v1942, %v1943
      %v1945 = vrot.slane %v1915, 1
      %v1946 = vrot.slane %v1643, 1
      %v1947 = vsel %vm1411, %v1945, %v1946
      %v1948 = vrot.slane %v1916, 1
      %v1949 = vrot.slane %v1644, 1
      %v1950 = vsel %vm1411, %v1948, %v1949
      %v1951 = vrot.slane %v1917, 1
      %v1952 = vrot.slane %v1645, 1
      %v1953 = vsel %vm1411, %v1951, %v1952
      %v1954 = vrot.slane %v1918, 1
      %v1955 = vrot.slane %v1646, 1
      %v1956 = vsel %vm1411, %v1954, %v1955
      %v1957 = vrot.slane %v1919, 1
      %v1958 = vrot.slane %v1647, 1
      %v1959 = vsel %vm1411, %v1957, %v1958
      %v1960 = vrot.slane %v1920, 1
      %v1961 = vrot.slane %v1648, 1
      %v1962 = vsel %vm1411, %v1960, %v1961
      %v1963 = vrot.slane %v1921, 1
      %v1964 = vrot.slane %v1649, 1
      %v1965 = vsel %vm1411, %v1963, %v1964
      %v1966 = vrot.slane %v1922, 1
      %v1967 = vrot.slane %v1650, 1
      %v1968 = vsel %vm1411, %v1966, %v1967
      %v1969 = vrot.slane %v1923, 1
      %v1970 = vrot.slane %v1651, 1
      %v1971 = vsel %vm1411, %v1969, %v1970
      %1972 = vrot.lane.b32.xlu0 %v1926, 20
      %v1973 = vpop.permute.xlu0 %1972
      %1974 = vrot.lane.b32.xlu0 %v1929, 20
      %v1975 = vpop.permute.xlu0 %1974
      %1976 = vrot.lane.b32.xlu0 %v1932, 20
      %v1977 = vpop.permute.xlu0 %1976
      %1978 = vrot.lane.b32.xlu0 %v1935, 20
      %v1979 = vpop.permute.xlu0 %1978
      %1980 = vrot.lane.b32.xlu0 %v1938, 20
      %v1981 = vpop.permute.xlu0 %1980
      %1982 = vrot.lane.b32.xlu0 %v1941, 20
      %v1983 = vpop.permute.xlu0 %1982
      %1984 = vrot.lane.b32.xlu0 %v1944, 20
      %v1985 = vpop.permute.xlu0 %1984
      %1986 = vrot.lane.b32.xlu0 %v1947, 20
      %v1987 = vpop.permute.xlu0 %1986
      %1988 = vrot.lane.b32.xlu0 %v1950, 20
      %v1989 = vpop.permute.xlu0 %1988
      %1990 = vrot.lane.b32.xlu0 %v1953, 20
      %v1991 = vpop.permute.xlu0 %1990
      %1992 = vrot.lane.b32.xlu0 %v1956, 20
      %v1993 = vpop.permute.xlu0 %1992
      %1994 = vrot.lane.b32.xlu0 %v1959, 20
      %v1995 = vpop.permute.xlu0 %1994
      %1996 = vrot.lane.b32.xlu0 %v1962, 20
      %v1997 = vpop.permute.xlu0 %1996
      %1998 = vrot.lane.b32.xlu0 %v1965, 20
      %v1999 = vpop.permute.xlu0 %1998
      %2000 = vrot.lane.b32.xlu0 %v1968, 20
      %v2001 = vpop.permute.xlu0 %2000
      %2002 = vrot.lane.b32.xlu0 %v1971, 20
      %v2003 = vpop.permute.xlu0 %2002
      %v2036 = vunpack.c.l.b16 %v946
      %v2037 = vunpack.c.l.b16 %v947
      %v2038 = vunpack.c.l.b16 %v948
      %v2039 = vunpack.c.l.b16 %v949
      %v2040 = vunpack.c.l.b16 %v950
      %v2041 = vunpack.c.l.b16 %v951
      %v2042 = vunpack.c.l.b16 %v952
      %v2043 = vunpack.c.l.b16 %v953
      %v2044 = vunpack.c.l.b16 %v954
      %v2045 = vunpack.c.l.b16 %v955
      %v2046 = vunpack.c.l.b16 %v956
      %v2047 = vunpack.c.l.b16 %v957
      %v2048 = vunpack.c.l.b16 %v958
      %v2049 = vunpack.c.l.b16 %v959
      %v2050 = vunpack.c.l.b16 %v960
      %v2051 = vunpack.c.l.b16 %v961
      %v2052 = vunpack.c.l.b16 %v962
      %v2053 = vunpack.c.l.b16 %v963
      %v2054 = vunpack.c.l.b16 %v964
      %v2055 = vunpack.c.l.b16 %v965
      %v2056 = vunpack.c.l.b16 %v966
      %v2057 = vunpack.c.l.b16 %v967
      %v2058 = vunpack.c.l.b16 %v968
      %v2059 = vunpack.c.l.b16 %v969
      %v2060 = vunpack.c.l.b16 %v970
      %v2061 = vunpack.c.l.b16 %v971
      %v2062 = vunpack.c.l.b16 %v972
      %v2063 = vunpack.c.l.b16 %v973
      %v2064 = vunpack.c.l.b16 %v974
      %v2065 = vunpack.c.l.b16 %v975
      %v2066 = vunpack.c.l.b16 %v976
      %v2067 = vunpack.c.l.b16 %v977
      %v2068 = vpack.c.b16 %v2037, %v2036
      %v2069 = vpack.c.b16 %v2039, %v2038
      %v2070 = vpack.c.b16 %v2041, %v2040
      %v2071 = vpack.c.b16 %v2043, %v2042
      %v2072 = vpack.c.b16 %v2045, %v2044
      %v2073 = vpack.c.b16 %v2047, %v2046
      %v2074 = vpack.c.b16 %v2049, %v2048
      %v2075 = vpack.c.b16 %v2051, %v2050
      %v2076 = vpack.c.b16 %v2053, %v2052
      %v2077 = vpack.c.b16 %v2055, %v2054
      %v2078 = vpack.c.b16 %v2057, %v2056
      %v2079 = vpack.c.b16 %v2059, %v2058
      %v2080 = vpack.c.b16 %v2061, %v2060
      %v2081 = vpack.c.b16 %v2063, %v2062
      %v2082 = vpack.c.b16 %v2065, %v2064
      %v2083 = vpack.c.b16 %v2067, %v2066
      %2084 = vrot.lane.b32.xlu0 %v2068, 24
      %v2085 = vpop.permute.xlu0 %2084
      %2086 = vrot.lane.b32.xlu0 %v2069, 24
      %v2087 = vpop.permute.xlu0 %2086
      %2088 = vrot.lane.b32.xlu0 %v2070, 24
      %v2089 = vpop.permute.xlu0 %2088
      %2090 = vrot.lane.b32.xlu0 %v2071, 24
      %v2091 = vpop.permute.xlu0 %2090
      %2092 = vrot.lane.b32.xlu0 %v2072, 24
      %v2093 = vpop.permute.xlu0 %2092
      %2094 = vrot.lane.b32.xlu0 %v2073, 24
      %v2095 = vpop.permute.xlu0 %2094
      %2096 = vrot.lane.b32.xlu0 %v2074, 24
      %v2097 = vpop.permute.xlu0 %2096
      %2098 = vrot.lane.b32.xlu0 %v2075, 24
      %v2099 = vpop.permute.xlu0 %2098
      %2100 = vrot.lane.b32.xlu0 %v2076, 24
      %v2101 = vpop.permute.xlu0 %2100
      %2102 = vrot.lane.b32.xlu0 %v2077, 24
      %v2103 = vpop.permute.xlu0 %2102
      %2104 = vrot.lane.b32.xlu0 %v2078, 24
      %v2105 = vpop.permute.xlu0 %2104
      %2106 = vrot.lane.b32.xlu0 %v2079, 24
      %v2107 = vpop.permute.xlu0 %2106
      %2108 = vrot.lane.b32.xlu0 %v2080, 24
      %v2109 = vpop.permute.xlu0 %2108
      %2110 = vrot.lane.b32.xlu0 %v2081, 24
      %v2111 = vpop.permute.xlu0 %2110
      %2112 = vrot.lane.b32.xlu0 %v2082, 24
      %v2113 = vpop.permute.xlu0 %2112
      %2114 = vrot.lane.b32.xlu0 %v2083, 24
      %v2115 = vpop.permute.xlu0 %2114
      %v2132 = vunpack.c.l.b16 %v978
      %v2133 = vunpack.c.l.b16 %v979
      %v2134 = vunpack.c.l.b16 %v980
      %v2135 = vunpack.c.l.b16 %v981
      %v2136 = vunpack.c.l.b16 %v982
      %v2137 = vunpack.c.l.b16 %v983
      %v2138 = vunpack.c.l.b16 %v984
      %v2139 = vunpack.c.l.b16 %v985
      %v2140 = vunpack.c.l.b16 %v986
      %v2141 = vunpack.c.l.b16 %v987
      %v2142 = vunpack.c.l.b16 %v988
      %v2143 = vunpack.c.l.b16 %v989
      %v2144 = vunpack.c.l.b16 %v990
      %v2145 = vunpack.c.l.b16 %v991
      %v2146 = vunpack.c.l.b16 %v992
      %v2147 = vunpack.c.l.b16 %v993
      %v2148 = vpack.c.b16 %v2132, %v2132
      %v2149 = vpack.c.b16 %v2133, %v2133
      %v2150 = vpack.c.b16 %v2134, %v2134
      %v2151 = vpack.c.b16 %v2135, %v2135
      %v2152 = vpack.c.b16 %v2136, %v2136
      %v2153 = vpack.c.b16 %v2137, %v2137
      %v2154 = vpack.c.b16 %v2138, %v2138
      %v2155 = vpack.c.b16 %v2139, %v2139
      %v2156 = vpack.c.b16 %v2140, %v2140
      %v2157 = vpack.c.b16 %v2141, %v2141
      %v2158 = vpack.c.b16 %v2142, %v2142
      %v2159 = vpack.c.b16 %v2143, %v2143
      %v2160 = vpack.c.b16 %v2144, %v2144
      %v2161 = vpack.c.b16 %v2145, %v2145
      %v2162 = vpack.c.b16 %v2146, %v2146
      %v2163 = vpack.c.b16 %v2147, %v2147
      %v2165 = vshrl.u32 %v2068, 16
      %v2167 = vshll.u32 %v2068, 16
      %v2169 = vrot.slane %v2167, 1
      %v2170 = vor.u32 %v2165, %v2169
      %v2172 = vshll.u32 %v2148, 16
      %v2174 = vrot.slane %v2172, 1
      %v2175 = vsel %vm1138, %v2170, %v2174
      %v2177 = vshrl.u32 %v2069, 16
      %v2179 = vshll.u32 %v2069, 16
      %v2181 = vrot.slane %v2179, 1
      %v2182 = vor.u32 %v2177, %v2181
      %v2184 = vshll.u32 %v2149, 16
      %v2186 = vrot.slane %v2184, 1
      %v2187 = vsel %vm1138, %v2182, %v2186
      %v2189 = vshrl.u32 %v2070, 16
      %v2191 = vshll.u32 %v2070, 16
      %v2193 = vrot.slane %v2191, 1
      %v2194 = vor.u32 %v2189, %v2193
      %v2196 = vshll.u32 %v2150, 16
      %v2198 = vrot.slane %v2196, 1
      %v2199 = vsel %vm1138, %v2194, %v2198
      %v2201 = vshrl.u32 %v2071, 16
      %v2203 = vshll.u32 %v2071, 16
      %v2205 = vrot.slane %v2203, 1
      %v2206 = vor.u32 %v2201, %v2205
      %v2208 = vshll.u32 %v2151, 16
      %v2210 = vrot.slane %v2208, 1
      %v2211 = vsel %vm1138, %v2206, %v2210
      %v2213 = vshrl.u32 %v2072, 16
      %v2215 = vshll.u32 %v2072, 16
      %v2217 = vrot.slane %v2215, 1
      %v2218 = vor.u32 %v2213, %v2217
      %v2220 = vshll.u32 %v2152, 16
      %v2222 = vrot.slane %v2220, 1
      %v2223 = vsel %vm1138, %v2218, %v2222
      %v2225 = vshrl.u32 %v2073, 16
      %v2227 = vshll.u32 %v2073, 16
      %v2229 = vrot.slane %v2227, 1
      %v2230 = vor.u32 %v2225, %v2229
      %v2232 = vshll.u32 %v2153, 16
      %v2234 = vrot.slane %v2232, 1
      %v2235 = vsel %vm1138, %v2230, %v2234
      %v2237 = vshrl.u32 %v2074, 16
      %v2239 = vshll.u32 %v2074, 16
      %v2241 = vrot.slane %v2239, 1
      %v2242 = vor.u32 %v2237, %v2241
      %v2244 = vshll.u32 %v2154, 16
      %v2246 = vrot.slane %v2244, 1
      %v2247 = vsel %vm1138, %v2242, %v2246
      %v2249 = vshrl.u32 %v2075, 16
      %v2251 = vshll.u32 %v2075, 16
      %v2253 = vrot.slane %v2251, 1
      %v2254 = vor.u32 %v2249, %v2253
      %v2256 = vshll.u32 %v2155, 16
      %v2258 = vrot.slane %v2256, 1
      %v2259 = vsel %vm1138, %v2254, %v2258
      %v2261 = vshrl.u32 %v2076, 16
      %v2263 = vshll.u32 %v2076, 16
      %v2265 = vrot.slane %v2263, 1
      %v2266 = vor.u32 %v2261, %v2265
      %v2268 = vshll.u32 %v2156, 16
      %v2270 = vrot.slane %v2268, 1
      %v2271 = vsel %vm1138, %v2266, %v2270
      %v2273 = vshrl.u32 %v2077, 16
      %v2275 = vshll.u32 %v2077, 16
      %v2277 = vrot.slane %v2275, 1
      %v2278 = vor.u32 %v2273, %v2277
      %v2280 = vshll.u32 %v2157, 16
      %v2282 = vrot.slane %v2280, 1
      %v2283 = vsel %vm1138, %v2278, %v2282
      %v2285 = vshrl.u32 %v2078, 16
      %v2287 = vshll.u32 %v2078, 16
      %v2289 = vrot.slane %v2287, 1
      %v2290 = vor.u32 %v2285, %v2289
      %v2292 = vshll.u32 %v2158, 16
      %v2294 = vrot.slane %v2292, 1
      %v2295 = vsel %vm1138, %v2290, %v2294
      %v2297 = vshrl.u32 %v2079, 16
      %v2299 = vshll.u32 %v2079, 16
      %v2301 = vrot.slane %v2299, 1
      %v2302 = vor.u32 %v2297, %v2301
      %v2304 = vshll.u32 %v2159, 16
      %v2306 = vrot.slane %v2304, 1
      %v2307 = vsel %vm1138, %v2302, %v2306
      %v2309 = vshrl.u32 %v2080, 16
      %v2311 = vshll.u32 %v2080, 16
      %v2313 = vrot.slane %v2311, 1
      %v2314 = vor.u32 %v2309, %v2313
      %v2316 = vshll.u32 %v2160, 16
      %v2318 = vrot.slane %v2316, 1
      %v2319 = vsel %vm1138, %v2314, %v2318
      %v2321 = vshrl.u32 %v2081, 16
      %v2323 = vshll.u32 %v2081, 16
      %v2325 = vrot.slane %v2323, 1
      %v2326 = vor.u32 %v2321, %v2325
      %v2328 = vshll.u32 %v2161, 16
      %v2330 = vrot.slane %v2328, 1
      %v2331 = vsel %vm1138, %v2326, %v2330
      %v2333 = vshrl.u32 %v2082, 16
      %v2335 = vshll.u32 %v2082, 16
      %v2337 = vrot.slane %v2335, 1
      %v2338 = vor.u32 %v2333, %v2337
      %v2340 = vshll.u32 %v2162, 16
      %v2342 = vrot.slane %v2340, 1
      %v2343 = vsel %vm1138, %v2338, %v2342
      %v2345 = vshrl.u32 %v2083, 16
      %v2347 = vshll.u32 %v2083, 16
      %v2349 = vrot.slane %v2347, 1
      %v2350 = vor.u32 %v2345, %v2349
      %v2352 = vshll.u32 %v2163, 16
      %v2354 = vrot.slane %v2352, 1
      %v2355 = vsel %vm1138, %v2350, %v2354
      %2356 = vrot.lane.b32.xlu0 %v2175, 28
      %v2357 = vpop.permute.xlu0 %2356
      %2358 = vrot.lane.b32.xlu0 %v2187, 28
      %v2359 = vpop.permute.xlu0 %2358
      %2360 = vrot.lane.b32.xlu0 %v2199, 28
      %v2361 = vpop.permute.xlu0 %2360
      %2362 = vrot.lane.b32.xlu0 %v2211, 28
      %v2363 = vpop.permute.xlu0 %2362
      %2364 = vrot.lane.b32.xlu0 %v2223, 28
      %v2365 = vpop.permute.xlu0 %2364
      %2366 = vrot.lane.b32.xlu0 %v2235, 28
      %v2367 = vpop.permute.xlu0 %2366
      %2368 = vrot.lane.b32.xlu0 %v2247, 28
      %v2369 = vpop.permute.xlu0 %2368
      %2370 = vrot.lane.b32.xlu0 %v2259, 28
      %v2371 = vpop.permute.xlu0 %2370
      %2372 = vrot.lane.b32.xlu0 %v2271, 28
      %v2373 = vpop.permute.xlu0 %2372
      %2374 = vrot.lane.b32.xlu0 %v2283, 28
      %v2375 = vpop.permute.xlu0 %2374
      %2376 = vrot.lane.b32.xlu0 %v2295, 28
      %v2377 = vpop.permute.xlu0 %2376
      %2378 = vrot.lane.b32.xlu0 %v2307, 28
      %v2379 = vpop.permute.xlu0 %2378
      %2380 = vrot.lane.b32.xlu0 %v2319, 28
      %v2381 = vpop.permute.xlu0 %2380
      %2382 = vrot.lane.b32.xlu0 %v2331, 28
      %v2383 = vpop.permute.xlu0 %2382
      %2384 = vrot.lane.b32.xlu0 %v2343, 28
      %v2385 = vpop.permute.xlu0 %2384
      %2386 = vrot.lane.b32.xlu0 %v2355, 28
      %v2387 = vpop.permute.xlu0 %2386
      %v2404 = vunpack.c.l.b16 %v994
      %v2405 = vunpack.c.l.b16 %v995
      %v2406 = vunpack.c.l.b16 %v996
      %v2407 = vunpack.c.l.b16 %v997
      %v2408 = vunpack.c.l.b16 %v998
      %v2409 = vunpack.c.l.b16 %v999
      %v2410 = vunpack.c.l.b16 %v1000
      %v2411 = vunpack.c.l.b16 %v1001
      %v2412 = vunpack.c.l.b16 %v1002
      %v2413 = vunpack.c.l.b16 %v1003
      %v2414 = vunpack.c.l.b16 %v1004
      %v2415 = vunpack.c.l.b16 %v1005
      %v2416 = vunpack.c.l.b16 %v1006
      %v2417 = vunpack.c.l.b16 %v1007
      %v2418 = vunpack.c.l.b16 %v1008
      %v2419 = vunpack.c.l.b16 %v1009
      %v2420 = vpack.c.b16 %v2037, %v2404
      %v2421 = vpack.c.b16 %v2039, %v2405
      %v2422 = vpack.c.b16 %v2041, %v2406
      %v2423 = vpack.c.b16 %v2043, %v2407
      %v2424 = vpack.c.b16 %v2045, %v2408
      %v2425 = vpack.c.b16 %v2047, %v2409
      %v2426 = vpack.c.b16 %v2049, %v2410
      %v2427 = vpack.c.b16 %v2051, %v2411
      %v2428 = vpack.c.b16 %v2053, %v2412
      %v2429 = vpack.c.b16 %v2055, %v2413
      %v2430 = vpack.c.b16 %v2057, %v2414
      %v2431 = vpack.c.b16 %v2059, %v2415
      %v2432 = vpack.c.b16 %v2061, %v2416
      %v2433 = vpack.c.b16 %v2063, %v2417
      %v2434 = vpack.c.b16 %v2065, %v2418
      %v2435 = vpack.c.b16 %v2067, %v2419
      %v2436 = vrot.slane %v2420, 1
      %v2437 = vrot.slane %v2148, 1
      %v2438 = vsel %vm1411, %v2436, %v2437
      %v2439 = vrot.slane %v2421, 1
      %v2440 = vrot.slane %v2149, 1
      %v2441 = vsel %vm1411, %v2439, %v2440
      %v2442 = vrot.slane %v2422, 1
      %v2443 = vrot.slane %v2150, 1
      %v2444 = vsel %vm1411, %v2442, %v2443
      %v2445 = vrot.slane %v2423, 1
      %v2446 = vrot.slane %v2151, 1
      %v2447 = vsel %vm1411, %v2445, %v2446
      %v2448 = vrot.slane %v2424, 1
      %v2449 = vrot.slane %v2152, 1
      %v2450 = vsel %vm1411, %v2448, %v2449
      %v2451 = vrot.slane %v2425, 1
      %v2452 = vrot.slane %v2153, 1
      %v2453 = vsel %vm1411, %v2451, %v2452
      %v2454 = vrot.slane %v2426, 1
      %v2455 = vrot.slane %v2154, 1
      %v2456 = vsel %vm1411, %v2454, %v2455
      %v2457 = vrot.slane %v2427, 1
      %v2458 = vrot.slane %v2155, 1
      %v2459 = vsel %vm1411, %v2457, %v2458
      %v2460 = vrot.slane %v2428, 1
      %v2461 = vrot.slane %v2156, 1
      %v2462 = vsel %vm1411, %v2460, %v2461
      %v2463 = vrot.slane %v2429, 1
      %v2464 = vrot.slane %v2157, 1
      %v2465 = vsel %vm1411, %v2463, %v2464
      %v2466 = vrot.slane %v2430, 1
      %v2467 = vrot.slane %v2158, 1
      %v2468 = vsel %vm1411, %v2466, %v2467
      %v2469 = vrot.slane %v2431, 1
      %v2470 = vrot.slane %v2159, 1
      %v2471 = vsel %vm1411, %v2469, %v2470
      %v2472 = vrot.slane %v2432, 1
      %v2473 = vrot.slane %v2160, 1
      %v2474 = vsel %vm1411, %v2472, %v2473
      %v2475 = vrot.slane %v2433, 1
      %v2476 = vrot.slane %v2161, 1
      %v2477 = vsel %vm1411, %v2475, %v2476
      %v2478 = vrot.slane %v2434, 1
      %v2479 = vrot.slane %v2162, 1
      %v2480 = vsel %vm1411, %v2478, %v2479
      %v2481 = vrot.slane %v2435, 1
      %v2482 = vrot.slane %v2163, 1
      %v2483 = vsel %vm1411, %v2481, %v2482
      %2484 = vrot.lane.b32.xlu0 %v2438, 32
      %v2485 = vpop.permute.xlu0 %2484
      %2486 = vrot.lane.b32.xlu0 %v2441, 32
      %v2487 = vpop.permute.xlu0 %2486
      %2488 = vrot.lane.b32.xlu0 %v2444, 32
      %v2489 = vpop.permute.xlu0 %2488
      %2490 = vrot.lane.b32.xlu0 %v2447, 32
      %v2491 = vpop.permute.xlu0 %2490
      %2492 = vrot.lane.b32.xlu0 %v2450, 32
      %v2493 = vpop.permute.xlu0 %2492
      %2494 = vrot.lane.b32.xlu0 %v2453, 32
      %v2495 = vpop.permute.xlu0 %2494
      %2496 = vrot.lane.b32.xlu0 %v2456, 32
      %v2497 = vpop.permute.xlu0 %2496
      %2498 = vrot.lane.b32.xlu0 %v2459, 32
      %v2499 = vpop.permute.xlu0 %2498
      %2500 = vrot.lane.b32.xlu0 %v2462, 32
      %v2501 = vpop.permute.xlu0 %2500
      %2502 = vrot.lane.b32.xlu0 %v2465, 32
      %v2503 = vpop.permute.xlu0 %2502
      %2504 = vrot.lane.b32.xlu0 %v2468, 32
      %v2505 = vpop.permute.xlu0 %2504
      %2506 = vrot.lane.b32.xlu0 %v2471, 32
      %v2507 = vpop.permute.xlu0 %2506
      %2508 = vrot.lane.b32.xlu0 %v2474, 32
      %v2509 = vpop.permute.xlu0 %2508
      %2510 = vrot.lane.b32.xlu0 %v2477, 32
      %v2511 = vpop.permute.xlu0 %2510
      %2512 = vrot.lane.b32.xlu0 %v2480, 32
      %v2513 = vpop.permute.xlu0 %2512
      %2514 = vrot.lane.b32.xlu0 %v2483, 32
      %v2515 = vpop.permute.xlu0 %2514
      %vm2516 = vcmask 31744
      %v2518 = vsel %vm2516, %v1074, %v1332
      %v2520 = vsel %vm2516, %v1075, %v1334
      %v2522 = vsel %vm2516, %v1076, %v1336
      %v2524 = vsel %vm2516, %v1077, %v1338
      %v2526 = vsel %vm2516, %v1078, %v1340
      %v2528 = vsel %vm2516, %v1079, %v1342
      %v2530 = vsel %vm2516, %v1080, %v1344
      %v2532 = vsel %vm2516, %v1081, %v1346
      %v2534 = vsel %vm2516, %v1082, %v1348
      %v2536 = vsel %vm2516, %v1083, %v1350
      %v2538 = vsel %vm2516, %v1084, %v1352
      %v2540 = vsel %vm2516, %v1085, %v1354
      %v2542 = vsel %vm2516, %v1086, %v1356
      %v2544 = vsel %vm2516, %v1087, %v1358
      %v2546 = vsel %vm2516, %v1088, %v1360
      %v2548 = vsel %vm2516, %v1089, %v1362
      %vm2549 = vcmask 64512
      %v2551 = vsel %vm2549, %v2518, %v1461
      %v2553 = vsel %vm2549, %v2520, %v1463
      %v2555 = vsel %vm2549, %v2522, %v1465
      %v2557 = vsel %vm2549, %v2524, %v1467
      %v2559 = vsel %vm2549, %v2526, %v1469
      %v2561 = vsel %vm2549, %v2528, %v1471
      %v2563 = vsel %vm2549, %v2530, %v1473
      %v2565 = vsel %vm2549, %v2532, %v1475
      %v2567 = vsel %vm2549, %v2534, %v1477
      %v2569 = vsel %vm2549, %v2536, %v1479
      %v2571 = vsel %vm2549, %v2538, %v1481
      %v2573 = vsel %vm2549, %v2540, %v1483
      %v2575 = vsel %vm2549, %v2542, %v1485
      %v2577 = vsel %vm2549, %v2544, %v1487
      %v2579 = vsel %vm2549, %v2546, %v1489
      %v2581 = vsel %vm2549, %v2548, %v1491
      %vm2582 = vcmask 97280
      %v2584 = vsel %vm2582, %v2551, %v1573
      %v2586 = vsel %vm2582, %v2553, %v1575
      %v2588 = vsel %vm2582, %v2555, %v1577
      %v2590 = vsel %vm2582, %v2557, %v1579
      %v2592 = vsel %vm2582, %v2559, %v1581
      %v2594 = vsel %vm2582, %v2561, %v1583
      %v2596 = vsel %vm2582, %v2563, %v1585
      %v2598 = vsel %vm2582, %v2565, %v1587
      %v2600 = vsel %vm2582, %v2567, %v1589
      %v2602 = vsel %vm2582, %v2569, %v1591
      %v2604 = vsel %vm2582, %v2571, %v1593
      %v2606 = vsel %vm2582, %v2573, %v1595
      %v2608 = vsel %vm2582, %v2575, %v1597
      %v2610 = vsel %vm2582, %v2577, %v1599
      %v2612 = vsel %vm2582, %v2579, %v1601
      %v2614 = vsel %vm2582, %v2581, %v1603
      %vm2615 = vcmask 130048
      %v2617 = vsel %vm2615, %v2584, %v1845
      %v2619 = vsel %vm2615, %v2586, %v1847
      %v2621 = vsel %vm2615, %v2588, %v1849
      %v2623 = vsel %vm2615, %v2590, %v1851
      %v2625 = vsel %vm2615, %v2592, %v1853
      %v2627 = vsel %vm2615, %v2594, %v1855
      %v2629 = vsel %vm2615, %v2596, %v1857
      %v2631 = vsel %vm2615, %v2598, %v1859
      %v2633 = vsel %vm2615, %v2600, %v1861
      %v2635 = vsel %vm2615, %v2602, %v1863
      %v2637 = vsel %vm2615, %v2604, %v1865
      %v2639 = vsel %vm2615, %v2606, %v1867
      %v2641 = vsel %vm2615, %v2608, %v1869
      %v2643 = vsel %vm2615, %v2610, %v1871
      %v2645 = vsel %vm2615, %v2612, %v1873
      %v2647 = vsel %vm2615, %v2614, %v1875
      %vm2648 = vcmask 162816
      %v2650 = vsel %vm2648, %v2617, %v1973
      %v2652 = vsel %vm2648, %v2619, %v1975
      %v2654 = vsel %vm2648, %v2621, %v1977
      %v2656 = vsel %vm2648, %v2623, %v1979
      %v2658 = vsel %vm2648, %v2625, %v1981
      %v2660 = vsel %vm2648, %v2627, %v1983
      %v2662 = vsel %vm2648, %v2629, %v1985
      %v2664 = vsel %vm2648, %v2631, %v1987
      %v2666 = vsel %vm2648, %v2633, %v1989
      %v2668 = vsel %vm2648, %v2635, %v1991
      %v2670 = vsel %vm2648, %v2637, %v1993
      %v2672 = vsel %vm2648, %v2639, %v1995
      %v2674 = vsel %vm2648, %v2641, %v1997
      %v2676 = vsel %vm2648, %v2643, %v1999
      %v2678 = vsel %vm2648, %v2645, %v2001
      %v2680 = vsel %vm2648, %v2647, %v2003
      %vm2681 = vcmask 195584
      %v2683 = vsel %vm2681, %v2650, %v2085
      %v2685 = vsel %vm2681, %v2652, %v2087
      %v2687 = vsel %vm2681, %v2654, %v2089
      %v2689 = vsel %vm2681, %v2656, %v2091
      %v2691 = vsel %vm2681, %v2658, %v2093
      %v2693 = vsel %vm2681, %v2660, %v2095
      %v2695 = vsel %vm2681, %v2662, %v2097
      %v2697 = vsel %vm2681, %v2664, %v2099
      %v2699 = vsel %vm2681, %v2666, %v2101
      %v2701 = vsel %vm2681, %v2668, %v2103
      %v2703 = vsel %vm2681, %v2670, %v2105
      %v2705 = vsel %vm2681, %v2672, %v2107
      %v2707 = vsel %vm2681, %v2674, %v2109
      %v2709 = vsel %vm2681, %v2676, %v2111
      %v2711 = vsel %vm2681, %v2678, %v2113
      %v2713 = vsel %vm2681, %v2680, %v2115
      %vm2714 = vcmask 228352
      %v2716 = vsel %vm2714, %v2683, %v2357
      %v2718 = vsel %vm2714, %v2685, %v2359
      %v2720 = vsel %vm2714, %v2687, %v2361
      %v2722 = vsel %vm2714, %v2689, %v2363
      %v2724 = vsel %vm2714, %v2691, %v2365
      %v2726 = vsel %vm2714, %v2693, %v2367
      %v2728 = vsel %vm2714, %v2695, %v2369
      %v2730 = vsel %vm2714, %v2697, %v2371
      %v2732 = vsel %vm2714, %v2699, %v2373
      %v2734 = vsel %vm2714, %v2701, %v2375
      %v2736 = vsel %vm2714, %v2703, %v2377
      %v2738 = vsel %vm2714, %v2705, %v2379
      %v2740 = vsel %vm2714, %v2707, %v2381
      %v2742 = vsel %vm2714, %v2709, %v2383
      %v2744 = vsel %vm2714, %v2711, %v2385
      %v2746 = vsel %vm2714, %v2713, %v2387
      %vm2747 = vcmask 261120
      %v2749 = vsel %vm2747, %v2716, %v2485
      %v2751 = vsel %vm2747, %v2718, %v2487
      %v2753 = vsel %vm2747, %v2720, %v2489
      %v2755 = vsel %vm2747, %v2722, %v2491
      %v2757 = vsel %vm2747, %v2724, %v2493
      %v2759 = vsel %vm2747, %v2726, %v2495
      %v2761 = vsel %vm2747, %v2728, %v2497
      %v2763 = vsel %vm2747, %v2730, %v2499
      %v2765 = vsel %vm2747, %v2732, %v2501
      %v2767 = vsel %vm2747, %v2734, %v2503
      %v2769 = vsel %vm2747, %v2736, %v2505
      %v2771 = vsel %vm2747, %v2738, %v2507
      %v2773 = vsel %vm2747, %v2740, %v2509
      %v2775 = vsel %vm2747, %v2742, %v2511
      %v2777 = vsel %vm2747, %v2744, %v2513
      %v2779 = vsel %vm2747, %v2746, %v2515
      %v2780 = vld [vmem:[%s1] sm:$0xf]
      %v2781 = vld [vmem:[%s1 + $0x4] sm:$0xf]
      %v2782 = vld [vmem:[%s1 + $0x8] sm:$0xf]
      %v2783 = vld [vmem:[%s1 + $0xc] sm:$0xf]
      %v2784 = vld [vmem:[%s1 + $0x10] sm:$0x3]
      %v2785 = vld [vmem:[%s2] sm:$0x1]
      %v2787 = vlaneseq
      %v2788 = vshrl.u32 %v2787, 7
      %v2789 = vsub.s32 0, %v2788
      %v2790 = vrot.slane %v2785, %v2789
      %v2797 = vunpack.c.l.b16 %v2780
      %v2798 = vunpack.c.l.b16 %v2781
      %v2799 = vunpack.c.l.b16 %v2782
      %v2800 = vunpack.c.l.b16 %v2783
      %v2801 = vunpack.c.l.b16 %v2784
      %v2802 = vpack.c.b16 %v2798, %v2797
      %v2803 = vpack.c.b16 %v2800, %v2799
      %v2804 = vpack.c.b16 %v2801, %v2801
      %vm2807 = vcmask 293888
      %v2808 = vsel %vm2807, %v2749, 0
      %v2810 = vsel %vm2807, %v2751, 0
      %v2812 = vsel %vm2807, %v2753, 0
      %v2814 = vsel %vm2807, %v2755, 0
      %v2816 = vsel %vm2807, %v2757, 0
      %v2818 = vsel %vm2807, %v2759, 0
      %v2820 = vsel %vm2807, %v2761, 0
      %v2822 = vsel %vm2807, %v2763, 0
      %v2824 = vsel %vm2807, %v2765, 0
      %v2826 = vsel %vm2807, %v2767, 0
      %v2828 = vsel %vm2807, %v2769, 0
      %v2830 = vsel %vm2807, %v2771, 0
      %v2832 = vsel %vm2807, %v2773, 0
      %v2834 = vsel %vm2807, %v2775, 0
      %v2836 = vsel %vm2807, %v2777, 0
      %v2838 = vsel %vm2807, %v2779, 0
      %vm2840 = vcmask 1041408
      %v2842 = vsel %vm2840, %v2804, 0
      %2844 = vmatprep.subr.bf16.mxu0 0
      %2845 = vmatpush1.bf16.msra.mxu0 0
      %2846 = vmatprep.subr.bf16.mxu0 0
      %2847 = vmatpush1.bf16.msra.mxu0 0
      %2848 = vmatprep.subr.bf16.mxu0 0
      %2849 = vmatpush1.bf16.msra.mxu0 0
      %2850 = vmatprep.subr.bf16.mxu0 0
      %2851 = vmatpush1.bf16.msra.mxu0 0
      %2852 = vmatprep.subr.bf16.mxu0 0
      %2853 = vmatpush1.bf16.msra.mxu0 0
      %2854 = vmatprep.subr.bf16.mxu0 0
      %2855 = vmatpush1.bf16.msra.mxu0 %v2842
      %2856 = vmatprep.subr.bf16.mxu0 0
      %2857 = vmatpush1.bf16.msra.mxu0 %v2803
      %2858 = vmatprep.subr.bf16.mxu0 0
      %2859 = vmatpush1.bf16.msra.mxu0 %v2802
      %2860 = vmatprep.subr.bf16.mxu0 0
      %2861 = vmatpush2.bf16.msra.mxu0 0
      %2862 = vmatprep.subr.bf16.mxu0 0
      %2863 = vmatpush2.bf16.msra.mxu0 0
      %2864 = vmatprep.subr.bf16.mxu0 0
      %2865 = vmatpush2.bf16.msra.mxu0 0
      %2866 = vmatprep.subr.bf16.mxu0 0
      %2867 = vmatpush2.bf16.msra.mxu0 0
      %2868 = vmatprep.subr.bf16.mxu0 0
      %2869 = vmatpush2.bf16.msra.mxu0 0
      %2870 = vmatprep.subr.bf16.mxu0 0
      %2871 = vmatpush2.bf16.msra.mxu0 0
      %2872 = vmatprep.subr.bf16.mxu0 0
      %2873 = vmatpush2.bf16.msra.mxu0 0
      %2874 = vmatprep.subr.bf16.mxu0 0
      %2875 = vmatpush2.bf16.msra.mxu0 0
      %2876 = vmatprep.mubr.bf16.mxu0 0
      %2877 = vmatmul.mubr.bf16.gmra.mxu0 %v2808
      %v2878 = vpop.f32.mrf.mxu0
      %v2879 = vadd.f32 %v2790, %v2878
      %v2880 = vpop.f32.mrf.mxu0
      %v2881 = vpop.f32.mrf.mxu0
      %v2882 = vadd.f32 %v2790, %v2881
      %v2883 = vpop.f32.mrf.mxu0
      %2884 = vmatprep.mubr.bf16.mxu0 0
      %2885 = vmatmul.mubr.bf16.gmra.mxu0 %v2810
      %v2886 = vpop.f32.mrf.mxu0
      %v2887 = vadd.f32 %v2790, %v2886
      %v2888 = vpop.f32.mrf.mxu0
      %v2889 = vpop.f32.mrf.mxu0
      %v2890 = vadd.f32 %v2790, %v2889
      %v2891 = vpop.f32.mrf.mxu0
      %2892 = vmatprep.mubr.bf16.mxu0 0
      %2893 = vmatmul.mubr.bf16.gmra.mxu0 %v2812
      %v2894 = vpop.f32.mrf.mxu0
      %v2895 = vadd.f32 %v2790, %v2894
      %v2896 = vpop.f32.mrf.mxu0
      %v2897 = vpop.f32.mrf.mxu0
      %v2898 = vadd.f32 %v2790, %v2897
      %v2899 = vpop.f32.mrf.mxu0
      %2900 = vmatprep.mubr.bf16.mxu0 0
      %2901 = vmatmul.mubr.bf16.gmra.mxu0 %v2814
      %v2902 = vpop.f32.mrf.mxu0
      %v2903 = vadd.f32 %v2790, %v2902
      %v2904 = vpop.f32.mrf.mxu0
      %v2905 = vpop.f32.mrf.mxu0
      %v2906 = vadd.f32 %v2790, %v2905
      %v2907 = vpop.f32.mrf.mxu0
      %2908 = vmatprep.mubr.bf16.mxu0 0
      %2909 = vmatmul.mubr.bf16.gmra.mxu0 %v2816
      %v2910 = vpop.f32.mrf.mxu0
      %v2911 = vadd.f32 %v2790, %v2910
      %v2912 = vpop.f32.mrf.mxu0
      %v2913 = vpop.f32.mrf.mxu0
      %v2914 = vadd.f32 %v2790, %v2913
      %v2915 = vpop.f32.mrf.mxu0
      %2916 = vmatprep.mubr.bf16.mxu0 0
      %2917 = vmatmul.mubr.bf16.gmra.mxu0 %v2818
      %v2918 = vpop.f32.mrf.mxu0
      %v2919 = vadd.f32 %v2790, %v2918
      %v2920 = vpop.f32.mrf.mxu0
      %v2921 = vpop.f32.mrf.mxu0
      %v2922 = vadd.f32 %v2790, %v2921
      %v2923 = vpop.f32.mrf.mxu0
      %2924 = vmatprep.mubr.bf16.mxu0 0
      %2925 = vmatmul.mubr.bf16.gmra.mxu0 %v2820
      %v2926 = vpop.f32.mrf.mxu0
      %v2927 = vadd.f32 %v2790, %v2926
      %v2928 = vpop.f32.mrf.mxu0
      %v2929 = vpop.f32.mrf.mxu0
      %v2930 = vadd.f32 %v2790, %v2929
      %v2931 = vpop.f32.mrf.mxu0
      %2932 = vmatprep.mubr.bf16.mxu0 0
      %2933 = vmatmul.mubr.bf16.gmra.mxu0 %v2822
      %v2934 = vpop.f32.mrf.mxu0
      %v2935 = vadd.f32 %v2790, %v2934
      %v2936 = vpop.f32.mrf.mxu0
      %v2937 = vpop.f32.mrf.mxu0
      %v2938 = vadd.f32 %v2790, %v2937
      %v2939 = vpop.f32.mrf.mxu0
      %2940 = vmatprep.mubr.bf16.mxu0 0
      %2941 = vmatmul.mubr.bf16.gmra.mxu0 %v2824
      %v2942 = vpop.f32.mrf.mxu0
      %v2943 = vadd.f32 %v2790, %v2942
      %v2944 = vpop.f32.mrf.mxu0
      %v2945 = vpop.f32.mrf.mxu0
      %v2946 = vadd.f32 %v2790, %v2945
      %v2947 = vpop.f32.mrf.mxu0
      %2948 = vmatprep.mubr.bf16.mxu0 0
      %2949 = vmatmul.mubr.bf16.gmra.mxu0 %v2826
      %v2950 = vpop.f32.mrf.mxu0
      %v2951 = vadd.f32 %v2790, %v2950
      %v2952 = vpop.f32.mrf.mxu0
      %v2953 = vpop.f32.mrf.mxu0
      %v2954 = vadd.f32 %v2790, %v2953
      %v2955 = vpop.f32.mrf.mxu0
      %2956 = vmatprep.mubr.bf16.mxu0 0
      %2957 = vmatmul.mubr.bf16.gmra.mxu0 %v2828
      %v2958 = vpop.f32.mrf.mxu0
      %v2959 = vadd.f32 %v2790, %v2958
      %v2960 = vpop.f32.mrf.mxu0
      %v2961 = vpop.f32.mrf.mxu0
      %v2962 = vadd.f32 %v2790, %v2961
      %v2963 = vpop.f32.mrf.mxu0
      %2964 = vmatprep.mubr.bf16.mxu0 0
      %2965 = vmatmul.mubr.bf16.gmra.mxu0 %v2830
      %v2966 = vpop.f32.mrf.mxu0
      %v2967 = vadd.f32 %v2790, %v2966
      %v2968 = vpop.f32.mrf.mxu0
      %v2969 = vpop.f32.mrf.mxu0
      %v2970 = vadd.f32 %v2790, %v2969
      %v2971 = vpop.f32.mrf.mxu0
      %2972 = vmatprep.mubr.bf16.mxu0 0
      %2973 = vmatmul.mubr.bf16.gmra.mxu0 %v2832
      %v2974 = vpop.f32.mrf.mxu0
      %v2975 = vadd.f32 %v2790, %v2974
      %v2976 = vpop.f32.mrf.mxu0
      %v2977 = vpop.f32.mrf.mxu0
      %v2978 = vadd.f32 %v2790, %v2977
      %v2979 = vpop.f32.mrf.mxu0
      %2980 = vmatprep.mubr.bf16.mxu0 0
      %2981 = vmatmul.mubr.bf16.gmra.mxu0 %v2834
      %v2982 = vpop.f32.mrf.mxu0
      %v2983 = vadd.f32 %v2790, %v2982
      %v2984 = vpop.f32.mrf.mxu0
      %v2985 = vpop.f32.mrf.mxu0
      %v2986 = vadd.f32 %v2790, %v2985
      %v2987 = vpop.f32.mrf.mxu0
      %2988 = vmatprep.mubr.bf16.mxu0 0
      %2989 = vmatmul.mubr.bf16.gmra.mxu0 %v2836
      %v2990 = vpop.f32.mrf.mxu0
      %v2991 = vadd.f32 %v2790, %v2990
      %v2992 = vpop.f32.mrf.mxu0
      %v2993 = vpop.f32.mrf.mxu0
      %v2994 = vadd.f32 %v2790, %v2993
      %v2995 = vpop.f32.mrf.mxu0
      %2996 = vmatprep.mubr.bf16.mxu0 0
      %2997 = vmatmul.mubr.bf16.gmra.mxu0 %v2838
      %v2998 = vpop.f32.mrf.mxu0
      %v2999 = vadd.f32 %v2790, %v2998
      %v3000 = vpop.f32.mrf.mxu0
      %v3001 = vpop.f32.mrf.mxu0
      %v3002 = vadd.f32 %v2790, %v3001
      %v3003 = vpop.f32.mrf.mxu0
      %3004 = vdwg.mxu0
      %v3005 = vmax.f32 %v2879, 0.0
      %v3006 = vmax.f32 %v2882, 0.0
      %v3007 = vmax.f32 %v2887, 0.0
      %v3008 = vmax.f32 %v2890, 0.0
      %v3009 = vmax.f32 %v2895, 0.0
      %v3010 = vmax.f32 %v2898, 0.0
      %v3011 = vmax.f32 %v2903, 0.0
      %v3012 = vmax.f32 %v2906, 0.0
      %v3013 = vmax.f32 %v2911, 0.0
      %v3014 = vmax.f32 %v2914, 0.0
      %v3015 = vmax.f32 %v2919, 0.0
      %v3016 = vmax.f32 %v2922, 0.0
      %v3017 = vmax.f32 %v2927, 0.0
      %v3018 = vmax.f32 %v2930, 0.0
      %v3019 = vmax.f32 %v2935, 0.0
      %v3020 = vmax.f32 %v2938, 0.0
      %v3021 = vmax.f32 %v2943, 0.0
      %v3022 = vmax.f32 %v2946, 0.0
      %v3023 = vmax.f32 %v2951, 0.0
      %v3024 = vmax.f32 %v2954, 0.0
      %v3025 = vmax.f32 %v2959, 0.0
      %v3026 = vmax.f32 %v2962, 0.0
      %v3027 = vmax.f32 %v2967, 0.0
      %v3028 = vmax.f32 %v2970, 0.0
      %v3029 = vmax.f32 %v2975, 0.0
      %v3030 = vmax.f32 %v2978, 0.0
      %v3031 = vmax.f32 %v2983, 0.0
      %v3032 = vmax.f32 %v2986, 0.0
      %v3033 = vmax.f32 %v2991, 0.0
      %v3034 = vmax.f32 %v2994, 0.0
      %v3035 = vmax.f32 %v2999, 0.0
      %v3036 = vmax.f32 %v3002, 0.0
      %vm3037 = vcmask 60416
      %3038 = vst.msk [vmem:[#allocation3] sm:$0xf] %vm3037, 0
      %3039 = vst.msk [vmem:[#allocation3 + $0x4] sm:$0xf] %vm3037, 0
      %vm3040 = vcmask 57344
      %3041 = vst.msk [vmem:[#allocation3 + $0x8] sm:$0x1] %vm3040, 0
      %s3042 = scalar_lea.vmem [#allocation3], 204
      %3043 = vst.msk [vmem:[%s3042] sm:$0xf] %vm3037, 0
      %3044 = vst.msk [vmem:[%s3042 + $0x4] sm:$0xf] %vm3037, 0
      %3045 = vst.msk [vmem:[%s3042 + $0x8] sm:$0x1] %vm3040, 0
      %vm3046 = vcmask 57344
      %vm3047 = vmand %vm3046, %vm236
      %v3048 = vld [vmem:[#allocation3] sm:$0x1]
      %v3049 = vsel %vm3047, 0, %v3048
      %3050 = vst [vmem:[#allocation3] sm:$0x1] %v3049
      %v3051 = vld [vmem:[#allocation3 + $0xc] sm:$0x1]
      %v3052 = vsel %vm3047, 0, %v3051
      %3053 = vst [vmem:[#allocation3 + $0xc] sm:$0x1] %v3052
      %v3054 = vld [vmem:[#allocation3 + $0x18] sm:$0x1]
      %v3055 = vsel %vm3047, 0, %v3054
      %3056 = vst [vmem:[#allocation3 + $0x18] sm:$0x1] %v3055
      %v3057 = vld [vmem:[#allocation3 + $0x24] sm:$0x1]
      %v3058 = vsel %vm3047, 0, %v3057
      %3059 = vst [vmem:[#allocation3 + $0x24] sm:$0x1] %v3058
      %v3060 = vld [vmem:[#allocation3 + $0x30] sm:$0x1]
      %v3061 = vsel %vm3047, 0, %v3060
      %3062 = vst [vmem:[#allocation3 + $0x30] sm:$0x1] %v3061
      %v3063 = vld [vmem:[#allocation3 + $0x3c] sm:$0x1]
      %v3064 = vsel %vm3047, 0, %v3063
      %3065 = vst [vmem:[#allocation3 + $0x3c] sm:$0x1] %v3064
      %v3066 = vld [vmem:[#allocation3 + $0x48] sm:$0x1]
      %v3067 = vsel %vm3047, 0, %v3066
      %3068 = vst [vmem:[#allocation3 + $0x48] sm:$0x1] %v3067
      %v3069 = vld [vmem:[#allocation3 + $0x54] sm:$0x1]
      %v3070 = vsel %vm3047, 0, %v3069
      %3071 = vst [vmem:[#allocation3 + $0x54] sm:$0x1] %v3070
      %v3072 = vld [vmem:[#allocation3 + $0x60] sm:$0x1]
      %v3073 = vsel %vm3047, 0, %v3072
      %3074 = vst [vmem:[#allocation3 + $0x60] sm:$0x1] %v3073
      %v3075 = vld [vmem:[#allocation3 + $0x6c] sm:$0x1]
      %v3076 = vsel %vm3047, 0, %v3075
      %3077 = vst [vmem:[#allocation3 + $0x6c] sm:$0x1] %v3076
      %v3078 = vld [vmem:[#allocation3 + $0x78] sm:$0x1]
      %v3079 = vsel %vm3047, 0, %v3078
      %3080 = vst [vmem:[#allocation3 + $0x78] sm:$0x1] %v3079
      %v3081 = vld [vmem:[#allocation3 + $0x84] sm:$0x1]
      %v3082 = vsel %vm3047, 0, %v3081
      %3083 = vst [vmem:[#allocation3 + $0x84] sm:$0x1] %v3082
      %v3084 = vld [vmem:[#allocation3 + $0x90] sm:$0x1]
      %v3085 = vsel %vm3047, 0, %v3084
      %3086 = vst [vmem:[#allocation3 + $0x90] sm:$0x1] %v3085
      %v3087 = vld [vmem:[#allocation3 + $0x9c] sm:$0x1]
      %v3088 = vsel %vm3047, 0, %v3087
      %3089 = vst [vmem:[#allocation3 + $0x9c] sm:$0x1] %v3088
      %v3090 = vld [vmem:[#allocation3 + $0xa8] sm:$0x1]
      %v3091 = vsel %vm3047, 0, %v3090
      %3092 = vst [vmem:[#allocation3 + $0xa8] sm:$0x1] %v3091
      %v3093 = vld [vmem:[#allocation3 + $0xb4] sm:$0x1]
      %v3094 = vsel %vm3047, 0, %v3093
      %3095 = vst [vmem:[#allocation3 + $0xb4] sm:$0x1] %v3094
      %v3096 = vld [vmem:[#allocation3 + $0xc0] sm:$0x1]
      %v3097 = vsel %vm3047, 0, %v3096
      %3098 = vst [vmem:[#allocation3 + $0xc0] sm:$0x1] %v3097
      %v3099 = vld [vmem:[#allocation3 + $0xcc] sm:$0x1]
      %v3100 = vsel %vm3047, 0, %v3099
      %3101 = vst [vmem:[#allocation3 + $0xcc] sm:$0x1] %v3100
      %vm3102 = vmand %vm3046, %vm292
      %v3103 = vld [vmem:[#allocation3 + $0x8] sm:$0x1]
      %v3104 = vsel %vm3102, 0, %v3103
      %3105 = vst [vmem:[#allocation3 + $0x8] sm:$0x1] %v3104
      %v3106 = vld [vmem:[#allocation3 + $0x14] sm:$0x1]
      %v3107 = vsel %vm3102, 0, %v3106
      %3108 = vst [vmem:[#allocation3 + $0x14] sm:$0x1] %v3107
      %v3109 = vld [vmem:[#allocation3 + $0x20] sm:$0x1]
      %v3110 = vsel %vm3102, 0, %v3109
      %3111 = vst [vmem:[#allocation3 + $0x20] sm:$0x1] %v3110
      %v3112 = vld [vmem:[#allocation3 + $0x2c] sm:$0x1]
      %v3113 = vsel %vm3102, 0, %v3112
      %3114 = vst [vmem:[#allocation3 + $0x2c] sm:$0x1] %v3113
      %v3115 = vld [vmem:[#allocation3 + $0x38] sm:$0x1]
      %v3116 = vsel %vm3102, 0, %v3115
      %3117 = vst [vmem:[#allocation3 + $0x38] sm:$0x1] %v3116
      %v3118 = vld [vmem:[#allocation3 + $0x44] sm:$0x1]
      %v3119 = vsel %vm3102, 0, %v3118
      %3120 = vst [vmem:[#allocation3 + $0x44] sm:$0x1] %v3119
      %v3121 = vld [vmem:[#allocation3 + $0x50] sm:$0x1]
      %v3122 = vsel %vm3102, 0, %v3121
      %3123 = vst [vmem:[#allocation3 + $0x50] sm:$0x1] %v3122
      %v3124 = vld [vmem:[#allocation3 + $0x5c] sm:$0x1]
      %v3125 = vsel %vm3102, 0, %v3124
      %3126 = vst [vmem:[#allocation3 + $0x5c] sm:$0x1] %v3125
      %v3127 = vld [vmem:[#allocation3 + $0x68] sm:$0x1]
      %v3128 = vsel %vm3102, 0, %v3127
      %3129 = vst [vmem:[#allocation3 + $0x68] sm:$0x1] %v3128
      %v3130 = vld [vmem:[#allocation3 + $0x74] sm:$0x1]
      %v3131 = vsel %vm3102, 0, %v3130
      %3132 = vst [vmem:[#allocation3 + $0x74] sm:$0x1] %v3131
      %v3133 = vld [vmem:[#allocation3 + $0x80] sm:$0x1]
      %v3134 = vsel %vm3102, 0, %v3133
      %3135 = vst [vmem:[#allocation3 + $0x80] sm:$0x1] %v3134
      %v3136 = vld [vmem:[#allocation3 + $0x8c] sm:$0x1]
      %v3137 = vsel %vm3102, 0, %v3136
      %3138 = vst [vmem:[#allocation3 + $0x8c] sm:$0x1] %v3137
      %v3139 = vld [vmem:[#allocation3 + $0x98] sm:$0x1]
      %v3140 = vsel %vm3102, 0, %v3139
      %3141 = vst [vmem:[#allocation3 + $0x98] sm:$0x1] %v3140
      %v3142 = vld [vmem:[#allocation3 + $0xa4] sm:$0x1]
      %v3143 = vsel %vm3102, 0, %v3142
      %3144 = vst [vmem:[#allocation3 + $0xa4] sm:$0x1] %v3143
      %v3145 = vld [vmem:[#allocation3 + $0xb0] sm:$0x1]
      %v3146 = vsel %vm3102, 0, %v3145
      %3147 = vst [vmem:[#allocation3 + $0xb0] sm:$0x1] %v3146
      %v3148 = vld [vmem:[#allocation3 + $0xbc] sm:$0x1]
      %v3149 = vsel %vm3102, 0, %v3148
      %3150 = vst [vmem:[#allocation3 + $0xbc] sm:$0x1] %v3149
      %v3151 = vld [vmem:[#allocation3 + $0xc8] sm:$0x1]
      %v3152 = vsel %vm3102, 0, %v3151
      %3153 = vst [vmem:[#allocation3 + $0xc8] sm:$0x1] %v3152
      %v3154 = vld [vmem:[#allocation3 + $0xd4] sm:$0x1]
      %v3155 = vsel %vm3102, 0, %v3154
      %3156 = vst [vmem:[#allocation3 + $0xd4] sm:$0x1] %v3155
      %v3157 = vpack.c.bf16 %v3006, %v3005
      %v3158 = vpack.c.bf16 %v3008, %v3007
      %v3159 = vpack.c.bf16 %v3010, %v3009
      %v3160 = vpack.c.bf16 %v3012, %v3011
      %v3161 = vpack.c.bf16 %v3014, %v3013
      %v3162 = vpack.c.bf16 %v3016, %v3015
      %v3163 = vpack.c.bf16 %v3018, %v3017
      %v3164 = vpack.c.bf16 %v3020, %v3019
      %v3165 = vpack.c.bf16 %v3022, %v3021
      %v3166 = vpack.c.bf16 %v3024, %v3023
      %v3167 = vpack.c.bf16 %v3026, %v3025
      %v3168 = vpack.c.bf16 %v3028, %v3027
      %v3169 = vpack.c.bf16 %v3030, %v3029
      %v3170 = vpack.c.bf16 %v3032, %v3031
      %v3171 = vpack.c.bf16 %v3034, %v3033
      %v3172 = vpack.c.bf16 %v3036, %v3035
      %v3189 = vunpack.c.l.b16 %v3157
      %v3190 = vunpack.c.h.b16 %v3157
      %v3191 = vunpack.c.l.b16 %v3158
      %v3192 = vunpack.c.h.b16 %v3158
      %v3193 = vunpack.c.l.b16 %v3159
      %v3194 = vunpack.c.h.b16 %v3159
      %v3195 = vunpack.c.l.b16 %v3160
      %v3196 = vunpack.c.h.b16 %v3160
      %v3197 = vunpack.c.l.b16 %v3161
      %v3198 = vunpack.c.h.b16 %v3161
      %v3199 = vunpack.c.l.b16 %v3162
      %v3200 = vunpack.c.h.b16 %v3162
      %v3201 = vunpack.c.l.b16 %v3163
      %v3202 = vunpack.c.h.b16 %v3163
      %v3203 = vunpack.c.l.b16 %v3164
      %v3204 = vunpack.c.h.b16 %v3164
      %v3205 = vunpack.c.l.b16 %v3165
      %v3206 = vunpack.c.h.b16 %v3165
      %v3207 = vunpack.c.l.b16 %v3166
      %v3208 = vunpack.c.h.b16 %v3166
      %v3209 = vunpack.c.l.b16 %v3167
      %v3210 = vunpack.c.h.b16 %v3167
      %v3211 = vunpack.c.l.b16 %v3168
      %v3212 = vunpack.c.h.b16 %v3168
      %v3213 = vunpack.c.l.b16 %v3169
      %v3214 = vunpack.c.h.b16 %v3169
      %v3215 = vunpack.c.l.b16 %v3170
      %v3216 = vunpack.c.h.b16 %v3170
      %v3217 = vunpack.c.l.b16 %v3171
      %v3218 = vunpack.c.h.b16 %v3171
      %v3219 = vunpack.c.l.b16 %v3172
      %v3220 = vunpack.c.h.b16 %v3172
      %v3221 = vpack.c.b16 %v3189, %v3189
      %v3222 = vpack.c.b16 %v3190, %v3190
      %v3223 = vpack.c.b16 %v3191, %v3191
      %v3224 = vpack.c.b16 %v3192, %v3192
      %v3225 = vpack.c.b16 %v3193, %v3193
      %v3226 = vpack.c.b16 %v3194, %v3194
      %v3227 = vpack.c.b16 %v3195, %v3195
      %v3228 = vpack.c.b16 %v3196, %v3196
      %v3229 = vpack.c.b16 %v3197, %v3197
      %v3230 = vpack.c.b16 %v3198, %v3198
      %v3231 = vpack.c.b16 %v3199, %v3199
      %v3232 = vpack.c.b16 %v3200, %v3200
      %v3233 = vpack.c.b16 %v3201, %v3201
      %v3234 = vpack.c.b16 %v3202, %v3202
      %v3235 = vpack.c.b16 %v3203, %v3203
      %v3236 = vpack.c.b16 %v3204, %v3204
      %v3237 = vpack.c.b16 %v3205, %v3205
      %v3238 = vpack.c.b16 %v3206, %v3206
      %v3239 = vpack.c.b16 %v3207, %v3207
      %v3240 = vpack.c.b16 %v3208, %v3208
      %v3241 = vpack.c.b16 %v3209, %v3209
      %v3242 = vpack.c.b16 %v3210, %v3210
      %v3243 = vpack.c.b16 %v3211, %v3211
      %v3244 = vpack.c.b16 %v3212, %v3212
      %v3245 = vpack.c.b16 %v3213, %v3213
      %v3246 = vpack.c.b16 %v3214, %v3214
      %v3247 = vpack.c.b16 %v3215, %v3215
      %v3248 = vpack.c.b16 %v3216, %v3216
      %v3249 = vpack.c.b16 %v3217, %v3217
      %v3250 = vpack.c.b16 %v3218, %v3218
      %v3251 = vpack.c.b16 %v3219, %v3219
      %v3252 = vpack.c.b16 %v3220, %v3220
      %v3254 = vshrl.u32 %v3221, 16
      %v3256 = vrot.slane %v3254, 7
      %v3257 = vshll.u32 %v3221, 16
      %v3259 = vor.u32 %v3256, %v3257
      %v3260 = vrot.slane %v3256, 4
      %v3262 = vshrl.u32 %v3222, 16
      %v3264 = vrot.slane %v3262, 7
      %v3265 = vshll.u32 %v3222, 16
      %v3267 = vor.u32 %v3264, %v3265
      %v3268 = vsel %vm381, %v3260, %v3267
      %v3269 = vrot.slane %v3264, 4
      %v3271 = vshrl.u32 %v3223, 16
      %v3273 = vrot.slane %v3271, 7
      %v3274 = vshll.u32 %v3223, 16
      %v3276 = vor.u32 %v3273, %v3274
      %v3277 = vrot.slane %v3273, 4
      %v3279 = vshrl.u32 %v3224, 16
      %v3281 = vrot.slane %v3279, 7
      %v3282 = vshll.u32 %v3224, 16
      %v3284 = vor.u32 %v3281, %v3282
      %v3285 = vsel %vm381, %v3277, %v3284
      %v3286 = vrot.slane %v3281, 4
      %v3288 = vshrl.u32 %v3225, 16
      %v3290 = vrot.slane %v3288, 7
      %v3291 = vshll.u32 %v3225, 16
      %v3293 = vor.u32 %v3290, %v3291
      %v3294 = vrot.slane %v3290, 4
      %v3296 = vshrl.u32 %v3226, 16
      %v3298 = vrot.slane %v3296, 7
      %v3299 = vshll.u32 %v3226, 16
      %v3301 = vor.u32 %v3298, %v3299
      %v3302 = vsel %vm381, %v3294, %v3301
      %v3303 = vrot.slane %v3298, 4
      %v3305 = vshrl.u32 %v3227, 16
      %v3307 = vrot.slane %v3305, 7
      %v3308 = vshll.u32 %v3227, 16
      %v3310 = vor.u32 %v3307, %v3308
      %v3311 = vrot.slane %v3307, 4
      %v3313 = vshrl.u32 %v3228, 16
      %v3315 = vrot.slane %v3313, 7
      %v3316 = vshll.u32 %v3228, 16
      %v3318 = vor.u32 %v3315, %v3316
      %v3319 = vsel %vm381, %v3311, %v3318
      %v3320 = vrot.slane %v3315, 4
      %v3322 = vshrl.u32 %v3229, 16
      %v3324 = vrot.slane %v3322, 7
      %v3325 = vshll.u32 %v3229, 16
      %v3327 = vor.u32 %v3324, %v3325
      %v3328 = vrot.slane %v3324, 4
      %v3330 = vshrl.u32 %v3230, 16
      %v3332 = vrot.slane %v3330, 7
      %v3333 = vshll.u32 %v3230, 16
      %v3335 = vor.u32 %v3332, %v3333
      %v3336 = vsel %vm381, %v3328, %v3335
      %v3337 = vrot.slane %v3332, 4
      %v3339 = vshrl.u32 %v3231, 16
      %v3341 = vrot.slane %v3339, 7
      %v3342 = vshll.u32 %v3231, 16
      %v3344 = vor.u32 %v3341, %v3342
      %v3345 = vrot.slane %v3341, 4
      %v3347 = vshrl.u32 %v3232, 16
      %v3349 = vrot.slane %v3347, 7
      %v3350 = vshll.u32 %v3232, 16
      %v3352 = vor.u32 %v3349, %v3350
      %v3353 = vsel %vm381, %v3345, %v3352
      %v3354 = vrot.slane %v3349, 4
      %v3356 = vshrl.u32 %v3233, 16
      %v3358 = vrot.slane %v3356, 7
      %v3359 = vshll.u32 %v3233, 16
      %v3361 = vor.u32 %v3358, %v3359
      %v3362 = vrot.slane %v3358, 4
      %v3364 = vshrl.u32 %v3234, 16
      %v3366 = vrot.slane %v3364, 7
      %v3367 = vshll.u32 %v3234, 16
      %v3369 = vor.u32 %v3366, %v3367
      %v3370 = vsel %vm381, %v3362, %v3369
      %v3371 = vrot.slane %v3366, 4
      %v3373 = vshrl.u32 %v3235, 16
      %v3375 = vrot.slane %v3373, 7
      %v3376 = vshll.u32 %v3235, 16
      %v3378 = vor.u32 %v3375, %v3376
      %v3379 = vrot.slane %v3375, 4
      %v3381 = vshrl.u32 %v3236, 16
      %v3383 = vrot.slane %v3381, 7
      %v3384 = vshll.u32 %v3236, 16
      %v3386 = vor.u32 %v3383, %v3384
      %v3387 = vsel %vm381, %v3379, %v3386
      %v3388 = vrot.slane %v3383, 4
      %v3390 = vshrl.u32 %v3237, 16
      %v3392 = vrot.slane %v3390, 7
      %v3393 = vshll.u32 %v3237, 16
      %v3395 = vor.u32 %v3392, %v3393
      %v3396 = vrot.slane %v3392, 4
      %v3398 = vshrl.u32 %v3238, 16
      %v3400 = vrot.slane %v3398, 7
      %v3401 = vshll.u32 %v3238, 16
      %v3403 = vor.u32 %v3400, %v3401
      %v3404 = vsel %vm381, %v3396, %v3403
      %v3405 = vrot.slane %v3400, 4
      %v3407 = vshrl.u32 %v3239, 16
      %v3409 = vrot.slane %v3407, 7
      %v3410 = vshll.u32 %v3239, 16
      %v3412 = vor.u32 %v3409, %v3410
      %v3413 = vrot.slane %v3409, 4
      %v3415 = vshrl.u32 %v3240, 16
      %v3417 = vrot.slane %v3415, 7
      %v3418 = vshll.u32 %v3240, 16
      %v3420 = vor.u32 %v3417, %v3418
      %v3421 = vsel %vm381, %v3413, %v3420
      %v3422 = vrot.slane %v3417, 4
      %v3424 = vshrl.u32 %v3241, 16
      %v3426 = vrot.slane %v3424, 7
      %v3427 = vshll.u32 %v3241, 16
      %v3429 = vor.u32 %v3426, %v3427
      %v3430 = vrot.slane %v3426, 4
      %v3432 = vshrl.u32 %v3242, 16
      %v3434 = vrot.slane %v3432, 7
      %v3435 = vshll.u32 %v3242, 16
      %v3437 = vor.u32 %v3434, %v3435
      %v3438 = vsel %vm381, %v3430, %v3437
      %v3439 = vrot.slane %v3434, 4
      %v3441 = vshrl.u32 %v3243, 16
      %v3443 = vrot.slane %v3441, 7
      %v3444 = vshll.u32 %v3243, 16
      %v3446 = vor.u32 %v3443, %v3444
      %v3447 = vrot.slane %v3443, 4
      %v3449 = vshrl.u32 %v3244, 16
      %v3451 = vrot.slane %v3449, 7
      %v3452 = vshll.u32 %v3244, 16
      %v3454 = vor.u32 %v3451, %v3452
      %v3455 = vsel %vm381, %v3447, %v3454
      %v3456 = vrot.slane %v3451, 4
      %v3458 = vshrl.u32 %v3245, 16
      %v3460 = vrot.slane %v3458, 7
      %v3461 = vshll.u32 %v3245, 16
      %v3463 = vor.u32 %v3460, %v3461
      %v3464 = vrot.slane %v3460, 4
      %v3466 = vshrl.u32 %v3246, 16
      %v3468 = vrot.slane %v3466, 7
      %v3469 = vshll.u32 %v3246, 16
      %v3471 = vor.u32 %v3468, %v3469
      %v3472 = vsel %vm381, %v3464, %v3471
      %v3473 = vrot.slane %v3468, 4
      %v3475 = vshrl.u32 %v3247, 16
      %v3477 = vrot.slane %v3475, 7
      %v3478 = vshll.u32 %v3247, 16
      %v3480 = vor.u32 %v3477, %v3478
      %v3481 = vrot.slane %v3477, 4
      %v3483 = vshrl.u32 %v3248, 16
      %v3485 = vrot.slane %v3483, 7
      %v3486 = vshll.u32 %v3248, 16
      %v3488 = vor.u32 %v3485, %v3486
      %v3489 = vsel %vm381, %v3481, %v3488
      %v3490 = vrot.slane %v3485, 4
      %v3492 = vshrl.u32 %v3249, 16
      %v3494 = vrot.slane %v3492, 7
      %v3495 = vshll.u32 %v3249, 16
      %v3497 = vor.u32 %v3494, %v3495
      %v3498 = vrot.slane %v3494, 4
      %v3500 = vshrl.u32 %v3250, 16
      %v3502 = vrot.slane %v3500, 7
      %v3503 = vshll.u32 %v3250, 16
      %v3505 = vor.u32 %v3502, %v3503
      %v3506 = vsel %vm381, %v3498, %v3505
      %v3507 = vrot.slane %v3502, 4
      %v3509 = vshrl.u32 %v3251, 16
      %v3511 = vrot.slane %v3509, 7
      %v3512 = vshll.u32 %v3251, 16
      %v3514 = vor.u32 %v3511, %v3512
      %v3515 = vrot.slane %v3511, 4
      %v3517 = vshrl.u32 %v3252, 16
      %v3519 = vrot.slane %v3517, 7
      %v3520 = vshll.u32 %v3252, 16
      %v3522 = vor.u32 %v3519, %v3520
      %v3523 = vsel %vm381, %v3515, %v3522
      %v3524 = vrot.slane %v3519, 4
      %s3573 = scalar_lea.vmem [#allocation3], 12
      %vm3574 = vcmask 60416
      %vm3575 = vmand %vm3574, %vm292
      %v3576 = vld [vmem:[%s3573] sm:$0xf]
      %v3577 = vsel %vm3575, %v3259, %v3576
      %3578 = vst [vmem:[%s3573] sm:$0xf] %v3577
      %3579 = vst.msk [vmem:[%s3573 + $0x4] sm:$0xf] %vm3037, %v3268
      %v3580 = vld [vmem:[%s3573 + $0x8] sm:$0x1]
      %v3581 = vsel %vm3047, %v3269, %v3580
      %3582 = vst [vmem:[%s3573 + $0x8] sm:$0x1] %v3581
      %v3583 = vld [vmem:[%s3573 + $0xc] sm:$0xf]
      %v3584 = vsel %vm3575, %v3276, %v3583
      %3585 = vst [vmem:[%s3573 + $0xc] sm:$0xf] %v3584
      %3586 = vst.msk [vmem:[%s3573 + $0x10] sm:$0xf] %vm3037, %v3285
      %v3587 = vld [vmem:[%s3573 + $0x14] sm:$0x1]
      %v3588 = vsel %vm3047, %v3286, %v3587
      %3589 = vst [vmem:[%s3573 + $0x14] sm:$0x1] %v3588
      %v3590 = vld [vmem:[%s3573 + $0x18] sm:$0xf]
      %v3591 = vsel %vm3575, %v3293, %v3590
      %3592 = vst [vmem:[%s3573 + $0x18] sm:$0xf] %v3591
      %3593 = vst.msk [vmem:[%s3573 + $0x1c] sm:$0xf] %vm3037, %v3302
      %v3594 = vld [vmem:[%s3573 + $0x20] sm:$0x1]
      %v3595 = vsel %vm3047, %v3303, %v3594
      %3596 = vst [vmem:[%s3573 + $0x20] sm:$0x1] %v3595
      %v3597 = vld [vmem:[%s3573 + $0x24] sm:$0xf]
      %v3598 = vsel %vm3575, %v3310, %v3597
      %3599 = vst [vmem:[%s3573 + $0x24] sm:$0xf] %v3598
      %3600 = vst.msk [vmem:[%s3573 + $0x28] sm:$0xf] %vm3037, %v3319
      %v3601 = vld [vmem:[%s3573 + $0x2c] sm:$0x1]
      %v3602 = vsel %vm3047, %v3320, %v3601
      %3603 = vst [vmem:[%s3573 + $0x2c] sm:$0x1] %v3602
      %v3604 = vld [vmem:[%s3573 + $0x30] sm:$0xf]
      %v3605 = vsel %vm3575, %v3327, %v3604
      %3606 = vst [vmem:[%s3573 + $0x30] sm:$0xf] %v3605
      %3607 = vst.msk [vmem:[%s3573 + $0x34] sm:$0xf] %vm3037, %v3336
      %v3608 = vld [vmem:[%s3573 + $0x38] sm:$0x1]
      %v3609 = vsel %vm3047, %v3337, %v3608
      %3610 = vst [vmem:[%s3573 + $0x38] sm:$0x1] %v3609
      %v3611 = vld [vmem:[%s3573 + $0x3c] sm:$0xf]
      %v3612 = vsel %vm3575, %v3344, %v3611
      %3613 = vst [vmem:[%s3573 + $0x3c] sm:$0xf] %v3612
      %3614 = vst.msk [vmem:[%s3573 + $0x40] sm:$0xf] %vm3037, %v3353
      %v3615 = vld [vmem:[%s3573 + $0x44] sm:$0x1]
      %v3616 = vsel %vm3047, %v3354, %v3615
      %3617 = vst [vmem:[%s3573 + $0x44] sm:$0x1] %v3616
      %v3618 = vld [vmem:[%s3573 + $0x48] sm:$0xf]
      %v3619 = vsel %vm3575, %v3361, %v3618
      %3620 = vst [vmem:[%s3573 + $0x48] sm:$0xf] %v3619
      %3621 = vst.msk [vmem:[%s3573 + $0x4c] sm:$0xf] %vm3037, %v3370
      %v3622 = vld [vmem:[%s3573 + $0x50] sm:$0x1]
      %v3623 = vsel %vm3047, %v3371, %v3622
      %3624 = vst [vmem:[%s3573 + $0x50] sm:$0x1] %v3623
      %v3625 = vld [vmem:[%s3573 + $0x54] sm:$0xf]
      %v3626 = vsel %vm3575, %v3378, %v3625
      %3627 = vst [vmem:[%s3573 + $0x54] sm:$0xf] %v3626
      %3628 = vst.msk [vmem:[%s3573 + $0x58] sm:$0xf] %vm3037, %v3387
      %v3629 = vld [vmem:[%s3573 + $0x5c] sm:$0x1]
      %v3630 = vsel %vm3047, %v3388, %v3629
      %3631 = vst [vmem:[%s3573 + $0x5c] sm:$0x1] %v3630
      %v3632 = vld [vmem:[%s3573 + $0x60] sm:$0xf]
      %v3633 = vsel %vm3575, %v3395, %v3632
      %3634 = vst [vmem:[%s3573 + $0x60] sm:$0xf] %v3633
      %3635 = vst.msk [vmem:[%s3573 + $0x64] sm:$0xf] %vm3037, %v3404
      %v3636 = vld [vmem:[%s3573 + $0x68] sm:$0x1]
      %v3637 = vsel %vm3047, %v3405, %v3636
      %3638 = vst [vmem:[%s3573 + $0x68] sm:$0x1] %v3637
      %v3639 = vld [vmem:[%s3573 + $0x6c] sm:$0xf]
      %v3640 = vsel %vm3575, %v3412, %v3639
      %3641 = vst [vmem:[%s3573 + $0x6c] sm:$0xf] %v3640
      %3642 = vst.msk [vmem:[%s3573 + $0x70] sm:$0xf] %vm3037, %v3421
      %v3643 = vld [vmem:[%s3573 + $0x74] sm:$0x1]
      %v3644 = vsel %vm3047, %v3422, %v3643
      %3645 = vst [vmem:[%s3573 + $0x74] sm:$0x1] %v3644
      %v3646 = vld [vmem:[%s3573 + $0x78] sm:$0xf]
      %v3647 = vsel %vm3575, %v3429, %v3646
      %3648 = vst [vmem:[%s3573 + $0x78] sm:$0xf] %v3647
      %3649 = vst.msk [vmem:[%s3573 + $0x7c] sm:$0xf] %vm3037, %v3438
      %v3650 = vld [vmem:[%s3573 + $0x80] sm:$0x1]
      %v3651 = vsel %vm3047, %v3439, %v3650
      %3652 = vst [vmem:[%s3573 + $0x80] sm:$0x1] %v3651
      %v3653 = vld [vmem:[%s3573 + $0x84] sm:$0xf]
      %v3654 = vsel %vm3575, %v3446, %v3653
      %3655 = vst [vmem:[%s3573 + $0x84] sm:$0xf] %v3654
      %3656 = vst.msk [vmem:[%s3573 + $0x88] sm:$0xf] %vm3037, %v3455
      %v3657 = vld [vmem:[%s3573 + $0x8c] sm:$0x1]
      %v3658 = vsel %vm3047, %v3456, %v3657
      %3659 = vst [vmem:[%s3573 + $0x8c] sm:$0x1] %v3658
      %v3660 = vld [vmem:[%s3573 + $0x90] sm:$0xf]
      %v3661 = vsel %vm3575, %v3463, %v3660
      %3662 = vst [vmem:[%s3573 + $0x90] sm:$0xf] %v3661
      %3663 = vst.msk [vmem:[%s3573 + $0x94] sm:$0xf] %vm3037, %v3472
      %v3664 = vld [vmem:[%s3573 + $0x98] sm:$0x1]
      %v3665 = vsel %vm3047, %v3473, %v3664
      %3666 = vst [vmem:[%s3573 + $0x98] sm:$0x1] %v3665
      %v3667 = vld [vmem:[%s3573 + $0x9c] sm:$0xf]
      %v3668 = vsel %vm3575, %v3480, %v3667
      %3669 = vst [vmem:[%s3573 + $0x9c] sm:$0xf] %v3668
      %3670 = vst.msk [vmem:[%s3573 + $0xa0] sm:$0xf] %vm3037, %v3489
      %v3671 = vld [vmem:[%s3573 + $0xa4] sm:$0x1]
      %v3672 = vsel %vm3047, %v3490, %v3671
      %3673 = vst [vmem:[%s3573 + $0xa4] sm:$0x1] %v3672
      %v3674 = vld [vmem:[%s3573 + $0xa8] sm:$0xf]
      %v3675 = vsel %vm3575, %v3497, %v3674
      %3676 = vst [vmem:[%s3573 + $0xa8] sm:$0xf] %v3675
      %3677 = vst.msk [vmem:[%s3573 + $0xac] sm:$0xf] %vm3037, %v3506
      %v3678 = vld [vmem:[%s3573 + $0xb0] sm:$0x1]
      %v3679 = vsel %vm3047, %v3507, %v3678
      %3680 = vst [vmem:[%s3573 + $0xb0] sm:$0x1] %v3679
      %v3681 = vld [vmem:[%s3573 + $0xb4] sm:$0xf]
      %v3682 = vsel %vm3575, %v3514, %v3681
      %3683 = vst [vmem:[%s3573 + $0xb4] sm:$0xf] %v3682
      %3684 = vst.msk [vmem:[%s3573 + $0xb8] sm:$0xf] %vm3037, %v3523
      %v3685 = vld [vmem:[%s3573 + $0xbc] sm:$0x1]
      %v3686 = vsel %vm3047, %v3524, %v3685
      %3687 = vst [vmem:[%s3573 + $0xbc] sm:$0x1] %v3686
      %v3688 = vld [vmem:[#allocation3] sm:$0xf]
      %v3689 = vld [vmem:[#allocation3 + $0x4] sm:$0xf]
      %v3690 = vld [vmem:[#allocation3 + $0xc] sm:$0xf]
      %v3691 = vld [vmem:[#allocation3 + $0x10] sm:$0xf]
      %v3692 = vld [vmem:[#allocation3 + $0x18] sm:$0xf]
      %v3693 = vld [vmem:[#allocation3 + $0x1c] sm:$0xf]
      %v3694 = vld [vmem:[#allocation3 + $0x24] sm:$0xf]
      %v3695 = vld [vmem:[#allocation3 + $0x28] sm:$0xf]
      %v3696 = vld [vmem:[#allocation3 + $0x30] sm:$0xf]
      %v3697 = vld [vmem:[#allocation3 + $0x34] sm:$0xf]
      %v3698 = vld [vmem:[#allocation3 + $0x3c] sm:$0xf]
      %v3699 = vld [vmem:[#allocation3 + $0x40] sm:$0xf]
      %v3700 = vld [vmem:[#allocation3 + $0x48] sm:$0xf]
      %v3701 = vld [vmem:[#allocation3 + $0x4c] sm:$0xf]
      %v3702 = vld [vmem:[#allocation3 + $0x54] sm:$0xf]
      %v3703 = vld [vmem:[#allocation3 + $0x58] sm:$0xf]
      %v3704 = vld [vmem:[#allocation3 + $0x60] sm:$0xf]
      %v3705 = vld [vmem:[#allocation3 + $0x64] sm:$0xf]
      %v3706 = vld [vmem:[#allocation3 + $0x6c] sm:$0xf]
      %v3707 = vld [vmem:[#allocation3 + $0x70] sm:$0xf]
      %v3708 = vld [vmem:[#allocation3 + $0x78] sm:$0xf]
      %v3709 = vld [vmem:[#allocation3 + $0x7c] sm:$0xf]
      %v3710 = vld [vmem:[#allocation3 + $0x84] sm:$0xf]
      %v3711 = vld [vmem:[#allocation3 + $0x88] sm:$0xf]
      %v3712 = vld [vmem:[#allocation3 + $0x90] sm:$0xf]
      %v3713 = vld [vmem:[#allocation3 + $0x94] sm:$0xf]
      %v3714 = vld [vmem:[#allocation3 + $0x9c] sm:$0xf]
      %v3715 = vld [vmem:[#allocation3 + $0xa0] sm:$0xf]
      %v3716 = vld [vmem:[#allocation3 + $0xa8] sm:$0xf]
      %v3717 = vld [vmem:[#allocation3 + $0xac] sm:$0xf]
      %v3718 = vld [vmem:[#allocation3 + $0xb4] sm:$0xf]
      %v3719 = vld [vmem:[#allocation3 + $0xb8] sm:$0xf]
      %v3720 = vld [vmem:[#allocation3 + $0x8] sm:$0x1]
      %v3721 = vld [vmem:[#allocation3 + $0x14] sm:$0x1]
      %v3722 = vld [vmem:[#allocation3 + $0x20] sm:$0x1]
      %v3723 = vld [vmem:[#allocation3 + $0x2c] sm:$0x1]
      %v3724 = vld [vmem:[#allocation3 + $0x38] sm:$0x1]
      %v3725 = vld [vmem:[#allocation3 + $0x44] sm:$0x1]
      %v3726 = vld [vmem:[#allocation3 + $0x50] sm:$0x1]
      %v3727 = vld [vmem:[#allocation3 + $0x5c] sm:$0x1]
      %v3728 = vld [vmem:[#allocation3 + $0x68] sm:$0x1]
      %v3729 = vld [vmem:[#allocation3 + $0x74] sm:$0x1]
      %v3730 = vld [vmem:[#allocation3 + $0x80] sm:$0x1]
      %v3731 = vld [vmem:[#allocation3 + $0x8c] sm:$0x1]
      %v3732 = vld [vmem:[#allocation3 + $0x98] sm:$0x1]
      %v3733 = vld [vmem:[#allocation3 + $0xa4] sm:$0x1]
      %v3734 = vld [vmem:[#allocation3 + $0xb0] sm:$0x1]
      %v3735 = vld [vmem:[#allocation3 + $0xbc] sm:$0x1]
      %v3736 = vld [vmem:[#allocation3] sm:$0xe]
      %v3737 = vld [vmem:[#allocation3 + $0xc] sm:$0xe]
      %v3738 = vld [vmem:[#allocation3 + $0x18] sm:$0xe]
      %v3739 = vld [vmem:[#allocation3 + $0x24] sm:$0xe]
      %v3740 = vld [vmem:[#allocation3 + $0x30] sm:$0xe]
      %v3741 = vld [vmem:[#allocation3 + $0x3c] sm:$0xe]
      %v3742 = vld [vmem:[#allocation3 + $0x48] sm:$0xe]
      %v3743 = vld [vmem:[#allocation3 + $0x54] sm:$0xe]
      %v3744 = vld [vmem:[#allocation3 + $0x60] sm:$0xe]
      %v3745 = vld [vmem:[#allocation3 + $0x6c] sm:$0xe]
      %v3746 = vld [vmem:[#allocation3 + $0x78] sm:$0xe]
      %v3747 = vld [vmem:[#allocation3 + $0x84] sm:$0xe]
      %v3748 = vld [vmem:[#allocation3 + $0x90] sm:$0xe]
      %v3749 = vld [vmem:[#allocation3 + $0x9c] sm:$0xe]
      %v3750 = vld [vmem:[#allocation3 + $0xa8] sm:$0xe]
      %v3751 = vld [vmem:[#allocation3 + $0xb4] sm:$0xe]
      %v3752 = vld [vmem:[%s3573] sm:$0xf]
      %v3753 = vld [vmem:[%s3573 + $0x4] sm:$0xf]
      %v3754 = vld [vmem:[%s3573 + $0xc] sm:$0xf]
      %v3755 = vld [vmem:[%s3573 + $0x10] sm:$0xf]
      %v3756 = vld [vmem:[%s3573 + $0x18] sm:$0xf]
      %v3757 = vld [vmem:[%s3573 + $0x1c] sm:$0xf]
      %v3758 = vld [vmem:[%s3573 + $0x24] sm:$0xf]
      %v3759 = vld [vmem:[%s3573 + $0x28] sm:$0xf]
      %v3760 = vld [vmem:[%s3573 + $0x30] sm:$0xf]
      %v3761 = vld [vmem:[%s3573 + $0x34] sm:$0xf]
      %v3762 = vld [vmem:[%s3573 + $0x3c] sm:$0xf]
      %v3763 = vld [vmem:[%s3573 + $0x40] sm:$0xf]
      %v3764 = vld [vmem:[%s3573 + $0x48] sm:$0xf]
      %v3765 = vld [vmem:[%s3573 + $0x4c] sm:$0xf]
      %v3766 = vld [vmem:[%s3573 + $0x54] sm:$0xf]
      %v3767 = vld [vmem:[%s3573 + $0x58] sm:$0xf]
      %v3768 = vld [vmem:[%s3573 + $0x60] sm:$0xf]
      %v3769 = vld [vmem:[%s3573 + $0x64] sm:$0xf]
      %v3770 = vld [vmem:[%s3573 + $0x6c] sm:$0xf]
      %v3771 = vld [vmem:[%s3573 + $0x70] sm:$0xf]
      %v3772 = vld [vmem:[%s3573 + $0x78] sm:$0xf]
      %v3773 = vld [vmem:[%s3573 + $0x7c] sm:$0xf]
      %v3774 = vld [vmem:[%s3573 + $0x84] sm:$0xf]
      %v3775 = vld [vmem:[%s3573 + $0x88] sm:$0xf]
      %v3776 = vld [vmem:[%s3573 + $0x90] sm:$0xf]
      %v3777 = vld [vmem:[%s3573 + $0x94] sm:$0xf]
      %v3778 = vld [vmem:[%s3573 + $0x9c] sm:$0xf]
      %v3779 = vld [vmem:[%s3573 + $0xa0] sm:$0xf]
      %v3780 = vld [vmem:[%s3573 + $0xa8] sm:$0xf]
      %v3781 = vld [vmem:[%s3573 + $0xac] sm:$0xf]
      %v3782 = vld [vmem:[%s3573 + $0xb4] sm:$0xf]
      %v3783 = vld [vmem:[%s3573 + $0xb8] sm:$0xf]
      %v3784 = vld [vmem:[%s3573 + $0x8] sm:$0x1]
      %v3785 = vld [vmem:[%s3573 + $0x14] sm:$0x1]
      %v3786 = vld [vmem:[%s3573 + $0x20] sm:$0x1]
      %v3787 = vld [vmem:[%s3573 + $0x2c] sm:$0x1]
      %v3788 = vld [vmem:[%s3573 + $0x38] sm:$0x1]
      %v3789 = vld [vmem:[%s3573 + $0x44] sm:$0x1]
      %v3790 = vld [vmem:[%s3573 + $0x50] sm:$0x1]
      %v3791 = vld [vmem:[%s3573 + $0x5c] sm:$0x1]
      %v3792 = vld [vmem:[%s3573 + $0x68] sm:$0x1]
      %v3793 = vld [vmem:[%s3573 + $0x74] sm:$0x1]
      %v3794 = vld [vmem:[%s3573 + $0x80] sm:$0x1]
      %v3795 = vld [vmem:[%s3573 + $0x8c] sm:$0x1]
      %v3796 = vld [vmem:[%s3573 + $0x98] sm:$0x1]
      %v3797 = vld [vmem:[%s3573 + $0xa4] sm:$0x1]
      %v3798 = vld [vmem:[%s3573 + $0xb0] sm:$0x1]
      %v3799 = vld [vmem:[%s3573 + $0xbc] sm:$0x1]
      %v3800 = vld [vmem:[%s3573] sm:$0xe]
      %v3801 = vld [vmem:[%s3573 + $0xc] sm:$0xe]
      %v3802 = vld [vmem:[%s3573 + $0x18] sm:$0xe]
      %v3803 = vld [vmem:[%s3573 + $0x24] sm:$0xe]
      %v3804 = vld [vmem:[%s3573 + $0x30] sm:$0xe]
      %v3805 = vld [vmem:[%s3573 + $0x3c] sm:$0xe]
      %v3806 = vld [vmem:[%s3573 + $0x48] sm:$0xe]
      %v3807 = vld [vmem:[%s3573 + $0x54] sm:$0xe]
      %v3808 = vld [vmem:[%s3573 + $0x60] sm:$0xe]
      %v3809 = vld [vmem:[%s3573 + $0x6c] sm:$0xe]
      %v3810 = vld [vmem:[%s3573 + $0x78] sm:$0xe]
      %v3811 = vld [vmem:[%s3573 + $0x84] sm:$0xe]
      %v3812 = vld [vmem:[%s3573 + $0x90] sm:$0xe]
      %v3813 = vld [vmem:[%s3573 + $0x9c] sm:$0xe]
      %v3814 = vld [vmem:[%s3573 + $0xa8] sm:$0xe]
      %v3815 = vld [vmem:[%s3573 + $0xb4] sm:$0xe]
      %s3816 = scalar_lea.vmem [#allocation3], 24
      %v3817 = vld [vmem:[%s3816] sm:$0xf]
      %v3818 = vld [vmem:[%s3816 + $0x4] sm:$0xf]
      %v3819 = vld [vmem:[%s3816 + $0xc] sm:$0xf]
      %v3820 = vld [vmem:[%s3816 + $0x10] sm:$0xf]
      %v3821 = vld [vmem:[%s3816 + $0x18] sm:$0xf]
      %v3822 = vld [vmem:[%s3816 + $0x1c] sm:$0xf]
      %v3823 = vld [vmem:[%s3816 + $0x24] sm:$0xf]
      %v3824 = vld [vmem:[%s3816 + $0x28] sm:$0xf]
      %v3825 = vld [vmem:[%s3816 + $0x30] sm:$0xf]
      %v3826 = vld [vmem:[%s3816 + $0x34] sm:$0xf]
      %v3827 = vld [vmem:[%s3816 + $0x3c] sm:$0xf]
      %v3828 = vld [vmem:[%s3816 + $0x40] sm:$0xf]
      %v3829 = vld [vmem:[%s3816 + $0x48] sm:$0xf]
      %v3830 = vld [vmem:[%s3816 + $0x4c] sm:$0xf]
      %v3831 = vld [vmem:[%s3816 + $0x54] sm:$0xf]
      %v3832 = vld [vmem:[%s3816 + $0x58] sm:$0xf]
      %v3833 = vld [vmem:[%s3816 + $0x60] sm:$0xf]
      %v3834 = vld [vmem:[%s3816 + $0x64] sm:$0xf]
      %v3835 = vld [vmem:[%s3816 + $0x6c] sm:$0xf]
      %v3836 = vld [vmem:[%s3816 + $0x70] sm:$0xf]
      %v3837 = vld [vmem:[%s3816 + $0x78] sm:$0xf]
      %v3838 = vld [vmem:[%s3816 + $0x7c] sm:$0xf]
      %v3839 = vld [vmem:[%s3816 + $0x84] sm:$0xf]
      %v3840 = vld [vmem:[%s3816 + $0x88] sm:$0xf]
      %v3841 = vld [vmem:[%s3816 + $0x90] sm:$0xf]
      %v3842 = vld [vmem:[%s3816 + $0x94] sm:$0xf]
      %v3843 = vld [vmem:[%s3816 + $0x9c] sm:$0xf]
      %v3844 = vld [vmem:[%s3816 + $0xa0] sm:$0xf]
      %v3845 = vld [vmem:[%s3816 + $0xa8] sm:$0xf]
      %v3846 = vld [vmem:[%s3816 + $0xac] sm:$0xf]
      %v3847 = vld [vmem:[%s3816 + $0xb4] sm:$0xf]
      %v3848 = vld [vmem:[%s3816 + $0xb8] sm:$0xf]
      %v3849 = vld [vmem:[%s3816 + $0x8] sm:$0x1]
      %v3850 = vld [vmem:[%s3816 + $0x14] sm:$0x1]
      %v3851 = vld [vmem:[%s3816 + $0x20] sm:$0x1]
      %v3852 = vld [vmem:[%s3816 + $0x2c] sm:$0x1]
      %v3853 = vld [vmem:[%s3816 + $0x38] sm:$0x1]
      %v3854 = vld [vmem:[%s3816 + $0x44] sm:$0x1]
      %v3855 = vld [vmem:[%s3816 + $0x50] sm:$0x1]
      %v3856 = vld [vmem:[%s3816 + $0x5c] sm:$0x1]
      %v3857 = vld [vmem:[%s3816 + $0x68] sm:$0x1]
      %v3858 = vld [vmem:[%s3816 + $0x74] sm:$0x1]
      %v3859 = vld [vmem:[%s3816 + $0x80] sm:$0x1]
      %v3860 = vld [vmem:[%s3816 + $0x8c] sm:$0x1]
      %v3861 = vld [vmem:[%s3816 + $0x98] sm:$0x1]
      %v3862 = vld [vmem:[%s3816 + $0xa4] sm:$0x1]
      %v3863 = vld [vmem:[%s3816 + $0xb0] sm:$0x1]
      %v3864 = vld [vmem:[%s3816 + $0xbc] sm:$0x1]
      %v3865 = vld [vmem:[%s3816] sm:$0xe]
      %v3866 = vld [vmem:[%s3816 + $0xc] sm:$0xe]
      %v3867 = vld [vmem:[%s3816 + $0x18] sm:$0xe]
      %v3868 = vld [vmem:[%s3816 + $0x24] sm:$0xe]
      %v3869 = vld [vmem:[%s3816 + $0x30] sm:$0xe]
      %v3870 = vld [vmem:[%s3816 + $0x3c] sm:$0xe]
      %v3871 = vld [vmem:[%s3816 + $0x48] sm:$0xe]
      %v3872 = vld [vmem:[%s3816 + $0x54] sm:$0xe]
      %v3873 = vld [vmem:[%s3816 + $0x60] sm:$0xe]
      %v3874 = vld [vmem:[%s3816 + $0x6c] sm:$0xe]
      %v3875 = vld [vmem:[%s3816 + $0x78] sm:$0xe]
      %v3876 = vld [vmem:[%s3816 + $0x84] sm:$0xe]
      %v3877 = vld [vmem:[%s3816 + $0x90] sm:$0xe]
      %v3878 = vld [vmem:[%s3816 + $0x9c] sm:$0xe]
      %v3879 = vld [vmem:[%s3816 + $0xa8] sm:$0xe]
      %v3880 = vld [vmem:[%s3816 + $0xb4] sm:$0xe]
      %v3913 = vunpack.c.l.b16 %v3688
      %v3914 = vunpack.c.l.b16 %v3689
      %v3915 = vunpack.c.l.b16 %v3690
      %v3916 = vunpack.c.l.b16 %v3691
      %v3917 = vunpack.c.l.b16 %v3692
      %v3918 = vunpack.c.l.b16 %v3693
      %v3919 = vunpack.c.l.b16 %v3694
      %v3920 = vunpack.c.l.b16 %v3695
      %v3921 = vunpack.c.l.b16 %v3696
      %v3922 = vunpack.c.l.b16 %v3697
      %v3923 = vunpack.c.l.b16 %v3698
      %v3924 = vunpack.c.l.b16 %v3699
      %v3925 = vunpack.c.l.b16 %v3700
      %v3926 = vunpack.c.l.b16 %v3701
      %v3927 = vunpack.c.l.b16 %v3702
      %v3928 = vunpack.c.l.b16 %v3703
      %v3929 = vunpack.c.l.b16 %v3704
      %v3930 = vunpack.c.l.b16 %v3705
      %v3931 = vunpack.c.l.b16 %v3706
      %v3932 = vunpack.c.l.b16 %v3707
      %v3933 = vunpack.c.l.b16 %v3708
      %v3934 = vunpack.c.l.b16 %v3709
      %v3935 = vunpack.c.l.b16 %v3710
      %v3936 = vunpack.c.l.b16 %v3711
      %v3937 = vunpack.c.l.b16 %v3712
      %v3938 = vunpack.c.l.b16 %v3713
      %v3939 = vunpack.c.l.b16 %v3714
      %v3940 = vunpack.c.l.b16 %v3715
      %v3941 = vunpack.c.l.b16 %v3716
      %v3942 = vunpack.c.l.b16 %v3717
      %v3943 = vunpack.c.l.b16 %v3718
      %v3944 = vunpack.c.l.b16 %v3719
      %v3945 = vpack.c.b16 %v3914, %v3913
      %v3946 = vpack.c.b16 %v3916, %v3915
      %v3947 = vpack.c.b16 %v3918, %v3917
      %v3948 = vpack.c.b16 %v3920, %v3919
      %v3949 = vpack.c.b16 %v3922, %v3921
      %v3950 = vpack.c.b16 %v3924, %v3923
      %v3951 = vpack.c.b16 %v3926, %v3925
      %v3952 = vpack.c.b16 %v3928, %v3927
      %v3953 = vpack.c.b16 %v3930, %v3929
      %v3954 = vpack.c.b16 %v3932, %v3931
      %v3955 = vpack.c.b16 %v3934, %v3933
      %v3956 = vpack.c.b16 %v3936, %v3935
      %v3957 = vpack.c.b16 %v3938, %v3937
      %v3958 = vpack.c.b16 %v3940, %v3939
      %v3959 = vpack.c.b16 %v3942, %v3941
      %v3960 = vpack.c.b16 %v3944, %v3943
      %v3977 = vunpack.c.l.b16 %v3720
      %v3978 = vunpack.c.l.b16 %v3721
      %v3979 = vunpack.c.l.b16 %v3722
      %v3980 = vunpack.c.l.b16 %v3723
      %v3981 = vunpack.c.l.b16 %v3724
      %v3982 = vunpack.c.l.b16 %v3725
      %v3983 = vunpack.c.l.b16 %v3726
      %v3984 = vunpack.c.l.b16 %v3727
      %v3985 = vunpack.c.l.b16 %v3728
      %v3986 = vunpack.c.l.b16 %v3729
      %v3987 = vunpack.c.l.b16 %v3730
      %v3988 = vunpack.c.l.b16 %v3731
      %v3989 = vunpack.c.l.b16 %v3732
      %v3990 = vunpack.c.l.b16 %v3733
      %v3991 = vunpack.c.l.b16 %v3734
      %v3992 = vunpack.c.l.b16 %v3735
      %v3993 = vpack.c.b16 %v3977, %v3977
      %v3994 = vpack.c.b16 %v3978, %v3978
      %v3995 = vpack.c.b16 %v3979, %v3979
      %v3996 = vpack.c.b16 %v3980, %v3980
      %v3997 = vpack.c.b16 %v3981, %v3981
      %v3998 = vpack.c.b16 %v3982, %v3982
      %v3999 = vpack.c.b16 %v3983, %v3983
      %v4000 = vpack.c.b16 %v3984, %v3984
      %v4001 = vpack.c.b16 %v3985, %v3985
      %v4002 = vpack.c.b16 %v3986, %v3986
      %v4003 = vpack.c.b16 %v3987, %v3987
      %v4004 = vpack.c.b16 %v3988, %v3988
      %v4005 = vpack.c.b16 %v3989, %v3989
      %v4006 = vpack.c.b16 %v3990, %v3990
      %v4007 = vpack.c.b16 %v3991, %v3991
      %v4008 = vpack.c.b16 %v3992, %v3992
      %v4010 = vshrl.u32 %v3945, 16
      %v4012 = vshll.u32 %v3945, 16
      %v4014 = vrot.slane %v4012, 1
      %v4015 = vor.u32 %v4010, %v4014
      %v4017 = vshll.u32 %v3993, 16
      %v4019 = vrot.slane %v4017, 1
      %v4020 = vsel %vm1138, %v4015, %v4019
      %v4022 = vshrl.u32 %v3946, 16
      %v4024 = vshll.u32 %v3946, 16
      %v4026 = vrot.slane %v4024, 1
      %v4027 = vor.u32 %v4022, %v4026
      %v4029 = vshll.u32 %v3994, 16
      %v4031 = vrot.slane %v4029, 1
      %v4032 = vsel %vm1138, %v4027, %v4031
      %v4034 = vshrl.u32 %v3947, 16
      %v4036 = vshll.u32 %v3947, 16
      %v4038 = vrot.slane %v4036, 1
      %v4039 = vor.u32 %v4034, %v4038
      %v4041 = vshll.u32 %v3995, 16
      %v4043 = vrot.slane %v4041, 1
      %v4044 = vsel %vm1138, %v4039, %v4043
      %v4046 = vshrl.u32 %v3948, 16
      %v4048 = vshll.u32 %v3948, 16
      %v4050 = vrot.slane %v4048, 1
      %v4051 = vor.u32 %v4046, %v4050
      %v4053 = vshll.u32 %v3996, 16
      %v4055 = vrot.slane %v4053, 1
      %v4056 = vsel %vm1138, %v4051, %v4055
      %v4058 = vshrl.u32 %v3949, 16
      %v4060 = vshll.u32 %v3949, 16
      %v4062 = vrot.slane %v4060, 1
      %v4063 = vor.u32 %v4058, %v4062
      %v4065 = vshll.u32 %v3997, 16
      %v4067 = vrot.slane %v4065, 1
      %v4068 = vsel %vm1138, %v4063, %v4067
      %v4070 = vshrl.u32 %v3950, 16
      %v4072 = vshll.u32 %v3950, 16
      %v4074 = vrot.slane %v4072, 1
      %v4075 = vor.u32 %v4070, %v4074
      %v4077 = vshll.u32 %v3998, 16
      %v4079 = vrot.slane %v4077, 1
      %v4080 = vsel %vm1138, %v4075, %v4079
      %v4082 = vshrl.u32 %v3951, 16
      %v4084 = vshll.u32 %v3951, 16
      %v4086 = vrot.slane %v4084, 1
      %v4087 = vor.u32 %v4082, %v4086
      %v4089 = vshll.u32 %v3999, 16
      %v4091 = vrot.slane %v4089, 1
      %v4092 = vsel %vm1138, %v4087, %v4091
      %v4094 = vshrl.u32 %v3952, 16
      %v4096 = vshll.u32 %v3952, 16
      %v4098 = vrot.slane %v4096, 1
      %v4099 = vor.u32 %v4094, %v4098
      %v4101 = vshll.u32 %v4000, 16
      %v4103 = vrot.slane %v4101, 1
      %v4104 = vsel %vm1138, %v4099, %v4103
      %v4106 = vshrl.u32 %v3953, 16
      %v4108 = vshll.u32 %v3953, 16
      %v4110 = vrot.slane %v4108, 1
      %v4111 = vor.u32 %v4106, %v4110
      %v4113 = vshll.u32 %v4001, 16
      %v4115 = vrot.slane %v4113, 1
      %v4116 = vsel %vm1138, %v4111, %v4115
      %v4118 = vshrl.u32 %v3954, 16
      %v4120 = vshll.u32 %v3954, 16
      %v4122 = vrot.slane %v4120, 1
      %v4123 = vor.u32 %v4118, %v4122
      %v4125 = vshll.u32 %v4002, 16
      %v4127 = vrot.slane %v4125, 1
      %v4128 = vsel %vm1138, %v4123, %v4127
      %v4130 = vshrl.u32 %v3955, 16
      %v4132 = vshll.u32 %v3955, 16
      %v4134 = vrot.slane %v4132, 1
      %v4135 = vor.u32 %v4130, %v4134
      %v4137 = vshll.u32 %v4003, 16
      %v4139 = vrot.slane %v4137, 1
      %v4140 = vsel %vm1138, %v4135, %v4139
      %v4142 = vshrl.u32 %v3956, 16
      %v4144 = vshll.u32 %v3956, 16
      %v4146 = vrot.slane %v4144, 1
      %v4147 = vor.u32 %v4142, %v4146
      %v4149 = vshll.u32 %v4004, 16
      %v4151 = vrot.slane %v4149, 1
      %v4152 = vsel %vm1138, %v4147, %v4151
      %v4154 = vshrl.u32 %v3957, 16
      %v4156 = vshll.u32 %v3957, 16
      %v4158 = vrot.slane %v4156, 1
      %v4159 = vor.u32 %v4154, %v4158
      %v4161 = vshll.u32 %v4005, 16
      %v4163 = vrot.slane %v4161, 1
      %v4164 = vsel %vm1138, %v4159, %v4163
      %v4166 = vshrl.u32 %v3958, 16
      %v4168 = vshll.u32 %v3958, 16
      %v4170 = vrot.slane %v4168, 1
      %v4171 = vor.u32 %v4166, %v4170
      %v4173 = vshll.u32 %v4006, 16
      %v4175 = vrot.slane %v4173, 1
      %v4176 = vsel %vm1138, %v4171, %v4175
      %v4178 = vshrl.u32 %v3959, 16
      %v4180 = vshll.u32 %v3959, 16
      %v4182 = vrot.slane %v4180, 1
      %v4183 = vor.u32 %v4178, %v4182
      %v4185 = vshll.u32 %v4007, 16
      %v4187 = vrot.slane %v4185, 1
      %v4188 = vsel %vm1138, %v4183, %v4187
      %v4190 = vshrl.u32 %v3960, 16
      %v4192 = vshll.u32 %v3960, 16
      %v4194 = vrot.slane %v4192, 1
      %v4195 = vor.u32 %v4190, %v4194
      %v4197 = vshll.u32 %v4008, 16
      %v4199 = vrot.slane %v4197, 1
      %v4200 = vsel %vm1138, %v4195, %v4199
      %4201 = vrot.lane.b32.xlu0 %v4020, 8
      %v4202 = vpop.permute.xlu0 %4201
      %4203 = vrot.lane.b32.xlu0 %v4032, 8
      %v4204 = vpop.permute.xlu0 %4203
      %4205 = vrot.lane.b32.xlu0 %v4044, 8
      %v4206 = vpop.permute.xlu0 %4205
      %4207 = vrot.lane.b32.xlu0 %v4056, 8
      %v4208 = vpop.permute.xlu0 %4207
      %4209 = vrot.lane.b32.xlu0 %v4068, 8
      %v4210 = vpop.permute.xlu0 %4209
      %4211 = vrot.lane.b32.xlu0 %v4080, 8
      %v4212 = vpop.permute.xlu0 %4211
      %4213 = vrot.lane.b32.xlu0 %v4092, 8
      %v4214 = vpop.permute.xlu0 %4213
      %4215 = vrot.lane.b32.xlu0 %v4104, 8
      %v4216 = vpop.permute.xlu0 %4215
      %4217 = vrot.lane.b32.xlu0 %v4116, 8
      %v4218 = vpop.permute.xlu0 %4217
      %4219 = vrot.lane.b32.xlu0 %v4128, 8
      %v4220 = vpop.permute.xlu0 %4219
      %4221 = vrot.lane.b32.xlu0 %v4140, 8
      %v4222 = vpop.permute.xlu0 %4221
      %4223 = vrot.lane.b32.xlu0 %v4152, 8
      %v4224 = vpop.permute.xlu0 %4223
      %4225 = vrot.lane.b32.xlu0 %v4164, 8
      %v4226 = vpop.permute.xlu0 %4225
      %4227 = vrot.lane.b32.xlu0 %v4176, 8
      %v4228 = vpop.permute.xlu0 %4227
      %4229 = vrot.lane.b32.xlu0 %v4188, 8
      %v4230 = vpop.permute.xlu0 %4229
      %4231 = vrot.lane.b32.xlu0 %v4200, 8
      %v4232 = vpop.permute.xlu0 %4231
      %v4249 = vunpack.c.l.b16 %v3736
      %v4250 = vunpack.c.l.b16 %v3737
      %v4251 = vunpack.c.l.b16 %v3738
      %v4252 = vunpack.c.l.b16 %v3739
      %v4253 = vunpack.c.l.b16 %v3740
      %v4254 = vunpack.c.l.b16 %v3741
      %v4255 = vunpack.c.l.b16 %v3742
      %v4256 = vunpack.c.l.b16 %v3743
      %v4257 = vunpack.c.l.b16 %v3744
      %v4258 = vunpack.c.l.b16 %v3745
      %v4259 = vunpack.c.l.b16 %v3746
      %v4260 = vunpack.c.l.b16 %v3747
      %v4261 = vunpack.c.l.b16 %v3748
      %v4262 = vunpack.c.l.b16 %v3749
      %v4263 = vunpack.c.l.b16 %v3750
      %v4264 = vunpack.c.l.b16 %v3751
      %v4265 = vpack.c.b16 %v3914, %v4249
      %v4266 = vpack.c.b16 %v3916, %v4250
      %v4267 = vpack.c.b16 %v3918, %v4251
      %v4268 = vpack.c.b16 %v3920, %v4252
      %v4269 = vpack.c.b16 %v3922, %v4253
      %v4270 = vpack.c.b16 %v3924, %v4254
      %v4271 = vpack.c.b16 %v3926, %v4255
      %v4272 = vpack.c.b16 %v3928, %v4256
      %v4273 = vpack.c.b16 %v3930, %v4257
      %v4274 = vpack.c.b16 %v3932, %v4258
      %v4275 = vpack.c.b16 %v3934, %v4259
      %v4276 = vpack.c.b16 %v3936, %v4260
      %v4277 = vpack.c.b16 %v3938, %v4261
      %v4278 = vpack.c.b16 %v3940, %v4262
      %v4279 = vpack.c.b16 %v3942, %v4263
      %v4280 = vpack.c.b16 %v3944, %v4264
      %v4281 = vrot.slane %v4265, 1
      %v4282 = vrot.slane %v3993, 1
      %v4283 = vsel %vm1411, %v4281, %v4282
      %v4284 = vrot.slane %v4266, 1
      %v4285 = vrot.slane %v3994, 1
      %v4286 = vsel %vm1411, %v4284, %v4285
      %v4287 = vrot.slane %v4267, 1
      %v4288 = vrot.slane %v3995, 1
      %v4289 = vsel %vm1411, %v4287, %v4288
      %v4290 = vrot.slane %v4268, 1
      %v4291 = vrot.slane %v3996, 1
      %v4292 = vsel %vm1411, %v4290, %v4291
      %v4293 = vrot.slane %v4269, 1
      %v4294 = vrot.slane %v3997, 1
      %v4295 = vsel %vm1411, %v4293, %v4294
      %v4296 = vrot.slane %v4270, 1
      %v4297 = vrot.slane %v3998, 1
      %v4298 = vsel %vm1411, %v4296, %v4297
      %v4299 = vrot.slane %v4271, 1
      %v4300 = vrot.slane %v3999, 1
      %v4301 = vsel %vm1411, %v4299, %v4300
      %v4302 = vrot.slane %v4272, 1
      %v4303 = vrot.slane %v4000, 1
      %v4304 = vsel %vm1411, %v4302, %v4303
      %v4305 = vrot.slane %v4273, 1
      %v4306 = vrot.slane %v4001, 1
      %v4307 = vsel %vm1411, %v4305, %v4306
      %v4308 = vrot.slane %v4274, 1
      %v4309 = vrot.slane %v4002, 1
      %v4310 = vsel %vm1411, %v4308, %v4309
      %v4311 = vrot.slane %v4275, 1
      %v4312 = vrot.slane %v4003, 1
      %v4313 = vsel %vm1411, %v4311, %v4312
      %v4314 = vrot.slane %v4276, 1
      %v4315 = vrot.slane %v4004, 1
      %v4316 = vsel %vm1411, %v4314, %v4315
      %v4317 = vrot.slane %v4277, 1
      %v4318 = vrot.slane %v4005, 1
      %v4319 = vsel %vm1411, %v4317, %v4318
      %v4320 = vrot.slane %v4278, 1
      %v4321 = vrot.slane %v4006, 1
      %v4322 = vsel %vm1411, %v4320, %v4321
      %v4323 = vrot.slane %v4279, 1
      %v4324 = vrot.slane %v4007, 1
      %v4325 = vsel %vm1411, %v4323, %v4324
      %v4326 = vrot.slane %v4280, 1
      %v4327 = vrot.slane %v4008, 1
      %v4328 = vsel %vm1411, %v4326, %v4327
      %4329 = vrot.lane.b32.xlu0 %v4283, 16
      %v4330 = vpop.permute.xlu0 %4329
      %4331 = vrot.lane.b32.xlu0 %v4286, 16
      %v4332 = vpop.permute.xlu0 %4331
      %4333 = vrot.lane.b32.xlu0 %v4289, 16
      %v4334 = vpop.permute.xlu0 %4333
      %4335 = vrot.lane.b32.xlu0 %v4292, 16
      %v4336 = vpop.permute.xlu0 %4335
      %4337 = vrot.lane.b32.xlu0 %v4295, 16
      %v4338 = vpop.permute.xlu0 %4337
      %4339 = vrot.lane.b32.xlu0 %v4298, 16
      %v4340 = vpop.permute.xlu0 %4339
      %4341 = vrot.lane.b32.xlu0 %v4301, 16
      %v4342 = vpop.permute.xlu0 %4341
      %4343 = vrot.lane.b32.xlu0 %v4304, 16
      %v4344 = vpop.permute.xlu0 %4343
      %4345 = vrot.lane.b32.xlu0 %v4307, 16
      %v4346 = vpop.permute.xlu0 %4345
      %4347 = vrot.lane.b32.xlu0 %v4310, 16
      %v4348 = vpop.permute.xlu0 %4347
      %4349 = vrot.lane.b32.xlu0 %v4313, 16
      %v4350 = vpop.permute.xlu0 %4349
      %4351 = vrot.lane.b32.xlu0 %v4316, 16
      %v4352 = vpop.permute.xlu0 %4351
      %4353 = vrot.lane.b32.xlu0 %v4319, 16
      %v4354 = vpop.permute.xlu0 %4353
      %4355 = vrot.lane.b32.xlu0 %v4322, 16
      %v4356 = vpop.permute.xlu0 %4355
      %4357 = vrot.lane.b32.xlu0 %v4325, 16
      %v4358 = vpop.permute.xlu0 %4357
      %4359 = vrot.lane.b32.xlu0 %v4328, 16
      %v4360 = vpop.permute.xlu0 %4359
      %v4393 = vunpack.c.l.b16 %v3752
      %v4394 = vunpack.c.l.b16 %v3753
      %v4395 = vunpack.c.l.b16 %v3754
      %v4396 = vunpack.c.l.b16 %v3755
      %v4397 = vunpack.c.l.b16 %v3756
      %v4398 = vunpack.c.l.b16 %v3757
      %v4399 = vunpack.c.l.b16 %v3758
      %v4400 = vunpack.c.l.b16 %v3759
      %v4401 = vunpack.c.l.b16 %v3760
      %v4402 = vunpack.c.l.b16 %v3761
      %v4403 = vunpack.c.l.b16 %v3762
      %v4404 = vunpack.c.l.b16 %v3763
      %v4405 = vunpack.c.l.b16 %v3764
      %v4406 = vunpack.c.l.b16 %v3765
      %v4407 = vunpack.c.l.b16 %v3766
      %v4408 = vunpack.c.l.b16 %v3767
      %v4409 = vunpack.c.l.b16 %v3768
      %v4410 = vunpack.c.l.b16 %v3769
      %v4411 = vunpack.c.l.b16 %v3770
      %v4412 = vunpack.c.l.b16 %v3771
      %v4413 = vunpack.c.l.b16 %v3772
      %v4414 = vunpack.c.l.b16 %v3773
      %v4415 = vunpack.c.l.b16 %v3774
      %v4416 = vunpack.c.l.b16 %v3775
      %v4417 = vunpack.c.l.b16 %v3776
      %v4418 = vunpack.c.l.b16 %v3777
      %v4419 = vunpack.c.l.b16 %v3778
      %v4420 = vunpack.c.l.b16 %v3779
      %v4421 = vunpack.c.l.b16 %v3780
      %v4422 = vunpack.c.l.b16 %v3781
      %v4423 = vunpack.c.l.b16 %v3782
      %v4424 = vunpack.c.l.b16 %v3783
      %v4425 = vpack.c.b16 %v4394, %v4393
      %v4426 = vpack.c.b16 %v4396, %v4395
      %v4427 = vpack.c.b16 %v4398, %v4397
      %v4428 = vpack.c.b16 %v4400, %v4399
      %v4429 = vpack.c.b16 %v4402, %v4401
      %v4430 = vpack.c.b16 %v4404, %v4403
      %v4431 = vpack.c.b16 %v4406, %v4405
      %v4432 = vpack.c.b16 %v4408, %v4407
      %v4433 = vpack.c.b16 %v4410, %v4409
      %v4434 = vpack.c.b16 %v4412, %v4411
      %v4435 = vpack.c.b16 %v4414, %v4413
      %v4436 = vpack.c.b16 %v4416, %v4415
      %v4437 = vpack.c.b16 %v4418, %v4417
      %v4438 = vpack.c.b16 %v4420, %v4419
      %v4439 = vpack.c.b16 %v4422, %v4421
      %v4440 = vpack.c.b16 %v4424, %v4423
      %4441 = vrot.lane.b32.xlu0 %v4425, 24
      %v4442 = vpop.permute.xlu0 %4441
      %4443 = vrot.lane.b32.xlu0 %v4426, 24
      %v4444 = vpop.permute.xlu0 %4443
      %4445 = vrot.lane.b32.xlu0 %v4427, 24
      %v4446 = vpop.permute.xlu0 %4445
      %4447 = vrot.lane.b32.xlu0 %v4428, 24
      %v4448 = vpop.permute.xlu0 %4447
      %4449 = vrot.lane.b32.xlu0 %v4429, 24
      %v4450 = vpop.permute.xlu0 %4449
      %4451 = vrot.lane.b32.xlu0 %v4430, 24
      %v4452 = vpop.permute.xlu0 %4451
      %4453 = vrot.lane.b32.xlu0 %v4431, 24
      %v4454 = vpop.permute.xlu0 %4453
      %4455 = vrot.lane.b32.xlu0 %v4432, 24
      %v4456 = vpop.permute.xlu0 %4455
      %4457 = vrot.lane.b32.xlu0 %v4433, 24
      %v4458 = vpop.permute.xlu0 %4457
      %4459 = vrot.lane.b32.xlu0 %v4434, 24
      %v4460 = vpop.permute.xlu0 %4459
      %4461 = vrot.lane.b32.xlu0 %v4435, 24
      %v4462 = vpop.permute.xlu0 %4461
      %4463 = vrot.lane.b32.xlu0 %v4436, 24
      %v4464 = vpop.permute.xlu0 %4463
      %4465 = vrot.lane.b32.xlu0 %v4437, 24
      %v4466 = vpop.permute.xlu0 %4465
      %4467 = vrot.lane.b32.xlu0 %v4438, 24
      %v4468 = vpop.permute.xlu0 %4467
      %4469 = vrot.lane.b32.xlu0 %v4439, 24
      %v4470 = vpop.permute.xlu0 %4469
      %4471 = vrot.lane.b32.xlu0 %v4440, 24
      %v4472 = vpop.permute.xlu0 %4471
      %v4489 = vunpack.c.l.b16 %v3784
      %v4490 = vunpack.c.l.b16 %v3785
      %v4491 = vunpack.c.l.b16 %v3786
      %v4492 = vunpack.c.l.b16 %v3787
      %v4493 = vunpack.c.l.b16 %v3788
      %v4494 = vunpack.c.l.b16 %v3789
      %v4495 = vunpack.c.l.b16 %v3790
      %v4496 = vunpack.c.l.b16 %v3791
      %v4497 = vunpack.c.l.b16 %v3792
      %v4498 = vunpack.c.l.b16 %v3793
      %v4499 = vunpack.c.l.b16 %v3794
      %v4500 = vunpack.c.l.b16 %v3795
      %v4501 = vunpack.c.l.b16 %v3796
      %v4502 = vunpack.c.l.b16 %v3797
      %v4503 = vunpack.c.l.b16 %v3798
      %v4504 = vunpack.c.l.b16 %v3799
      %v4505 = vpack.c.b16 %v4489, %v4489
      %v4506 = vpack.c.b16 %v4490, %v4490
      %v4507 = vpack.c.b16 %v4491, %v4491
      %v4508 = vpack.c.b16 %v4492, %v4492
      %v4509 = vpack.c.b16 %v4493, %v4493
      %v4510 = vpack.c.b16 %v4494, %v4494
      %v4511 = vpack.c.b16 %v4495, %v4495
      %v4512 = vpack.c.b16 %v4496, %v4496
      %v4513 = vpack.c.b16 %v4497, %v4497
      %v4514 = vpack.c.b16 %v4498, %v4498
      %v4515 = vpack.c.b16 %v4499, %v4499
      %v4516 = vpack.c.b16 %v4500, %v4500
      %v4517 = vpack.c.b16 %v4501, %v4501
      %v4518 = vpack.c.b16 %v4502, %v4502
      %v4519 = vpack.c.b16 %v4503, %v4503
      %v4520 = vpack.c.b16 %v4504, %v4504
      %v4522 = vshrl.u32 %v4425, 16
      %v4524 = vshll.u32 %v4425, 16
      %v4526 = vrot.slane %v4524, 1
      %v4527 = vor.u32 %v4522, %v4526
      %v4529 = vshll.u32 %v4505, 16
      %v4531 = vrot.slane %v4529, 1
      %v4532 = vsel %vm1138, %v4527, %v4531
      %v4534 = vshrl.u32 %v4426, 16
      %v4536 = vshll.u32 %v4426, 16
      %v4538 = vrot.slane %v4536, 1
      %v4539 = vor.u32 %v4534, %v4538
      %v4541 = vshll.u32 %v4506, 16
      %v4543 = vrot.slane %v4541, 1
      %v4544 = vsel %vm1138, %v4539, %v4543
      %v4546 = vshrl.u32 %v4427, 16
      %v4548 = vshll.u32 %v4427, 16
      %v4550 = vrot.slane %v4548, 1
      %v4551 = vor.u32 %v4546, %v4550
      %v4553 = vshll.u32 %v4507, 16
      %v4555 = vrot.slane %v4553, 1
      %v4556 = vsel %vm1138, %v4551, %v4555
      %v4558 = vshrl.u32 %v4428, 16
      %v4560 = vshll.u32 %v4428, 16
      %v4562 = vrot.slane %v4560, 1
      %v4563 = vor.u32 %v4558, %v4562
      %v4565 = vshll.u32 %v4508, 16
      %v4567 = vrot.slane %v4565, 1
      %v4568 = vsel %vm1138, %v4563, %v4567
      %v4570 = vshrl.u32 %v4429, 16
      %v4572 = vshll.u32 %v4429, 16
      %v4574 = vrot.slane %v4572, 1
      %v4575 = vor.u32 %v4570, %v4574
      %v4577 = vshll.u32 %v4509, 16
      %v4579 = vrot.slane %v4577, 1
      %v4580 = vsel %vm1138, %v4575, %v4579
      %v4582 = vshrl.u32 %v4430, 16
      %v4584 = vshll.u32 %v4430, 16
      %v4586 = vrot.slane %v4584, 1
      %v4587 = vor.u32 %v4582, %v4586
      %v4589 = vshll.u32 %v4510, 16
      %v4591 = vrot.slane %v4589, 1
      %v4592 = vsel %vm1138, %v4587, %v4591
      %v4594 = vshrl.u32 %v4431, 16
      %v4596 = vshll.u32 %v4431, 16
      %v4598 = vrot.slane %v4596, 1
      %v4599 = vor.u32 %v4594, %v4598
      %v4601 = vshll.u32 %v4511, 16
      %v4603 = vrot.slane %v4601, 1
      %v4604 = vsel %vm1138, %v4599, %v4603
      %v4606 = vshrl.u32 %v4432, 16
      %v4608 = vshll.u32 %v4432, 16
      %v4610 = vrot.slane %v4608, 1
      %v4611 = vor.u32 %v4606, %v4610
      %v4613 = vshll.u32 %v4512, 16
      %v4615 = vrot.slane %v4613, 1
      %v4616 = vsel %vm1138, %v4611, %v4615
      %v4618 = vshrl.u32 %v4433, 16
      %v4620 = vshll.u32 %v4433, 16
      %v4622 = vrot.slane %v4620, 1
      %v4623 = vor.u32 %v4618, %v4622
      %v4625 = vshll.u32 %v4513, 16
      %v4627 = vrot.slane %v4625, 1
      %v4628 = vsel %vm1138, %v4623, %v4627
      %v4630 = vshrl.u32 %v4434, 16
      %v4632 = vshll.u32 %v4434, 16
      %v4634 = vrot.slane %v4632, 1
      %v4635 = vor.u32 %v4630, %v4634
      %v4637 = vshll.u32 %v4514, 16
      %v4639 = vrot.slane %v4637, 1
      %v4640 = vsel %vm1138, %v4635, %v4639
      %v4642 = vshrl.u32 %v4435, 16
      %v4644 = vshll.u32 %v4435, 16
      %v4646 = vrot.slane %v4644, 1
      %v4647 = vor.u32 %v4642, %v4646
      %v4649 = vshll.u32 %v4515, 16
      %v4651 = vrot.slane %v4649, 1
      %v4652 = vsel %vm1138, %v4647, %v4651
      %v4654 = vshrl.u32 %v4436, 16
      %v4656 = vshll.u32 %v4436, 16
      %v4658 = vrot.slane %v4656, 1
      %v4659 = vor.u32 %v4654, %v4658
      %v4661 = vshll.u32 %v4516, 16
      %v4663 = vrot.slane %v4661, 1
      %v4664 = vsel %vm1138, %v4659, %v4663
      %v4666 = vshrl.u32 %v4437, 16
      %v4668 = vshll.u32 %v4437, 16
      %v4670 = vrot.slane %v4668, 1
      %v4671 = vor.u32 %v4666, %v4670
      %v4673 = vshll.u32 %v4517, 16
      %v4675 = vrot.slane %v4673, 1
      %v4676 = vsel %vm1138, %v4671, %v4675
      %v4678 = vshrl.u32 %v4438, 16
      %v4680 = vshll.u32 %v4438, 16
      %v4682 = vrot.slane %v4680, 1
      %v4683 = vor.u32 %v4678, %v4682
      %v4685 = vshll.u32 %v4518, 16
      %v4687 = vrot.slane %v4685, 1
      %v4688 = vsel %vm1138, %v4683, %v4687
      %v4690 = vshrl.u32 %v4439, 16
      %v4692 = vshll.u32 %v4439, 16
      %v4694 = vrot.slane %v4692, 1
      %v4695 = vor.u32 %v4690, %v4694
      %v4697 = vshll.u32 %v4519, 16
      %v4699 = vrot.slane %v4697, 1
      %v4700 = vsel %vm1138, %v4695, %v4699
      %v4702 = vshrl.u32 %v4440, 16
      %v4704 = vshll.u32 %v4440, 16
      %v4706 = vrot.slane %v4704, 1
      %v4707 = vor.u32 %v4702, %v4706
      %v4709 = vshll.u32 %v4520, 16
      %v4711 = vrot.slane %v4709, 1
      %v4712 = vsel %vm1138, %v4707, %v4711
      %4713 = vrot.lane.b32.xlu0 %v4532, 32
      %v4714 = vpop.permute.xlu0 %4713
      %4715 = vrot.lane.b32.xlu0 %v4544, 32
      %v4716 = vpop.permute.xlu0 %4715
      %4717 = vrot.lane.b32.xlu0 %v4556, 32
      %v4718 = vpop.permute.xlu0 %4717
      %4719 = vrot.lane.b32.xlu0 %v4568, 32
      %v4720 = vpop.permute.xlu0 %4719
      %4721 = vrot.lane.b32.xlu0 %v4580, 32
      %v4722 = vpop.permute.xlu0 %4721
      %4723 = vrot.lane.b32.xlu0 %v4592, 32
      %v4724 = vpop.permute.xlu0 %4723
      %4725 = vrot.lane.b32.xlu0 %v4604, 32
      %v4726 = vpop.permute.xlu0 %4725
      %4727 = vrot.lane.b32.xlu0 %v4616, 32
      %v4728 = vpop.permute.xlu0 %4727
      %4729 = vrot.lane.b32.xlu0 %v4628, 32
      %v4730 = vpop.permute.xlu0 %4729
      %4731 = vrot.lane.b32.xlu0 %v4640, 32
      %v4732 = vpop.permute.xlu0 %4731
      %4733 = vrot.lane.b32.xlu0 %v4652, 32
      %v4734 = vpop.permute.xlu0 %4733
      %4735 = vrot.lane.b32.xlu0 %v4664, 32
      %v4736 = vpop.permute.xlu0 %4735
      %4737 = vrot.lane.b32.xlu0 %v4676, 32
      %v4738 = vpop.permute.xlu0 %4737
      %4739 = vrot.lane.b32.xlu0 %v4688, 32
      %v4740 = vpop.permute.xlu0 %4739
      %4741 = vrot.lane.b32.xlu0 %v4700, 32
      %v4742 = vpop.permute.xlu0 %4741
      %4743 = vrot.lane.b32.xlu0 %v4712, 32
      %v4744 = vpop.permute.xlu0 %4743
      %v4761 = vunpack.c.l.b16 %v3800
      %v4762 = vunpack.c.l.b16 %v3801
      %v4763 = vunpack.c.l.b16 %v3802
      %v4764 = vunpack.c.l.b16 %v3803
      %v4765 = vunpack.c.l.b16 %v3804
      %v4766 = vunpack.c.l.b16 %v3805
      %v4767 = vunpack.c.l.b16 %v3806
      %v4768 = vunpack.c.l.b16 %v3807
      %v4769 = vunpack.c.l.b16 %v3808
      %v4770 = vunpack.c.l.b16 %v3809
      %v4771 = vunpack.c.l.b16 %v3810
      %v4772 = vunpack.c.l.b16 %v3811
      %v4773 = vunpack.c.l.b16 %v3812
      %v4774 = vunpack.c.l.b16 %v3813
      %v4775 = vunpack.c.l.b16 %v3814
      %v4776 = vunpack.c.l.b16 %v3815
      %v4777 = vpack.c.b16 %v4394, %v4761
      %v4778 = vpack.c.b16 %v4396, %v4762
      %v4779 = vpack.c.b16 %v4398, %v4763
      %v4780 = vpack.c.b16 %v4400, %v4764
      %v4781 = vpack.c.b16 %v4402, %v4765
      %v4782 = vpack.c.b16 %v4404, %v4766
      %v4783 = vpack.c.b16 %v4406, %v4767
      %v4784 = vpack.c.b16 %v4408, %v4768
      %v4785 = vpack.c.b16 %v4410, %v4769
      %v4786 = vpack.c.b16 %v4412, %v4770
      %v4787 = vpack.c.b16 %v4414, %v4771
      %v4788 = vpack.c.b16 %v4416, %v4772
      %v4789 = vpack.c.b16 %v4418, %v4773
      %v4790 = vpack.c.b16 %v4420, %v4774
      %v4791 = vpack.c.b16 %v4422, %v4775
      %v4792 = vpack.c.b16 %v4424, %v4776
      %v4793 = vrot.slane %v4777, 1
      %v4794 = vrot.slane %v4505, 1
      %v4795 = vsel %vm1411, %v4793, %v4794
      %v4796 = vrot.slane %v4778, 1
      %v4797 = vrot.slane %v4506, 1
      %v4798 = vsel %vm1411, %v4796, %v4797
      %v4799 = vrot.slane %v4779, 1
      %v4800 = vrot.slane %v4507, 1
      %v4801 = vsel %vm1411, %v4799, %v4800
      %v4802 = vrot.slane %v4780, 1
      %v4803 = vrot.slane %v4508, 1
      %v4804 = vsel %vm1411, %v4802, %v4803
      %v4805 = vrot.slane %v4781, 1
      %v4806 = vrot.slane %v4509, 1
      %v4807 = vsel %vm1411, %v4805, %v4806
      %v4808 = vrot.slane %v4782, 1
      %v4809 = vrot.slane %v4510, 1
      %v4810 = vsel %vm1411, %v4808, %v4809
      %v4811 = vrot.slane %v4783, 1
      %v4812 = vrot.slane %v4511, 1
      %v4813 = vsel %vm1411, %v4811, %v4812
      %v4814 = vrot.slane %v4784, 1
      %v4815 = vrot.slane %v4512, 1
      %v4816 = vsel %vm1411, %v4814, %v4815
      %v4817 = vrot.slane %v4785, 1
      %v4818 = vrot.slane %v4513, 1
      %v4819 = vsel %vm1411, %v4817, %v4818
      %v4820 = vrot.slane %v4786, 1
      %v4821 = vrot.slane %v4514, 1
      %v4822 = vsel %vm1411, %v4820, %v4821
      %v4823 = vrot.slane %v4787, 1
      %v4824 = vrot.slane %v4515, 1
      %v4825 = vsel %vm1411, %v4823, %v4824
      %v4826 = vrot.slane %v4788, 1
      %v4827 = vrot.slane %v4516, 1
      %v4828 = vsel %vm1411, %v4826, %v4827
      %v4829 = vrot.slane %v4789, 1
      %v4830 = vrot.slane %v4517, 1
      %v4831 = vsel %vm1411, %v4829, %v4830
      %v4832 = vrot.slane %v4790, 1
      %v4833 = vrot.slane %v4518, 1
      %v4834 = vsel %vm1411, %v4832, %v4833
      %v4835 = vrot.slane %v4791, 1
      %v4836 = vrot.slane %v4519, 1
      %v4837 = vsel %vm1411, %v4835, %v4836
      %v4838 = vrot.slane %v4792, 1
      %v4839 = vrot.slane %v4520, 1
      %v4840 = vsel %vm1411, %v4838, %v4839
      %4841 = vrot.lane.b32.xlu0 %v4795, 40
      %v4842 = vpop.permute.xlu0 %4841
      %4843 = vrot.lane.b32.xlu0 %v4798, 40
      %v4844 = vpop.permute.xlu0 %4843
      %4845 = vrot.lane.b32.xlu0 %v4801, 40
      %v4846 = vpop.permute.xlu0 %4845
      %4847 = vrot.lane.b32.xlu0 %v4804, 40
      %v4848 = vpop.permute.xlu0 %4847
      %4849 = vrot.lane.b32.xlu0 %v4807, 40
      %v4850 = vpop.permute.xlu0 %4849
      %4851 = vrot.lane.b32.xlu0 %v4810, 40
      %v4852 = vpop.permute.xlu0 %4851
      %4853 = vrot.lane.b32.xlu0 %v4813, 40
      %v4854 = vpop.permute.xlu0 %4853
      %4855 = vrot.lane.b32.xlu0 %v4816, 40
      %v4856 = vpop.permute.xlu0 %4855
      %4857 = vrot.lane.b32.xlu0 %v4819, 40
      %v4858 = vpop.permute.xlu0 %4857
      %4859 = vrot.lane.b32.xlu0 %v4822, 40
      %v4860 = vpop.permute.xlu0 %4859
      %4861 = vrot.lane.b32.xlu0 %v4825, 40
      %v4862 = vpop.permute.xlu0 %4861
      %4863 = vrot.lane.b32.xlu0 %v4828, 40
      %v4864 = vpop.permute.xlu0 %4863
      %4865 = vrot.lane.b32.xlu0 %v4831, 40
      %v4866 = vpop.permute.xlu0 %4865
      %4867 = vrot.lane.b32.xlu0 %v4834, 40
      %v4868 = vpop.permute.xlu0 %4867
      %4869 = vrot.lane.b32.xlu0 %v4837, 40
      %v4870 = vpop.permute.xlu0 %4869
      %4871 = vrot.lane.b32.xlu0 %v4840, 40
      %v4872 = vpop.permute.xlu0 %4871
      %v4905 = vunpack.c.l.b16 %v3817
      %v4906 = vunpack.c.l.b16 %v3818
      %v4907 = vunpack.c.l.b16 %v3819
      %v4908 = vunpack.c.l.b16 %v3820
      %v4909 = vunpack.c.l.b16 %v3821
      %v4910 = vunpack.c.l.b16 %v3822
      %v4911 = vunpack.c.l.b16 %v3823
      %v4912 = vunpack.c.l.b16 %v3824
      %v4913 = vunpack.c.l.b16 %v3825
      %v4914 = vunpack.c.l.b16 %v3826
      %v4915 = vunpack.c.l.b16 %v3827
      %v4916 = vunpack.c.l.b16 %v3828
      %v4917 = vunpack.c.l.b16 %v3829
      %v4918 = vunpack.c.l.b16 %v3830
      %v4919 = vunpack.c.l.b16 %v3831
      %v4920 = vunpack.c.l.b16 %v3832
      %v4921 = vunpack.c.l.b16 %v3833
      %v4922 = vunpack.c.l.b16 %v3834
      %v4923 = vunpack.c.l.b16 %v3835
      %v4924 = vunpack.c.l.b16 %v3836
      %v4925 = vunpack.c.l.b16 %v3837
      %v4926 = vunpack.c.l.b16 %v3838
      %v4927 = vunpack.c.l.b16 %v3839
      %v4928 = vunpack.c.l.b16 %v3840
      %v4929 = vunpack.c.l.b16 %v3841
      %v4930 = vunpack.c.l.b16 %v3842
      %v4931 = vunpack.c.l.b16 %v3843
      %v4932 = vunpack.c.l.b16 %v3844
      %v4933 = vunpack.c.l.b16 %v3845
      %v4934 = vunpack.c.l.b16 %v3846
      %v4935 = vunpack.c.l.b16 %v3847
      %v4936 = vunpack.c.l.b16 %v3848
      %v4937 = vpack.c.b16 %v4906, %v4905
      %v4938 = vpack.c.b16 %v4908, %v4907
      %v4939 = vpack.c.b16 %v4910, %v4909
      %v4940 = vpack.c.b16 %v4912, %v4911
      %v4941 = vpack.c.b16 %v4914, %v4913
      %v4942 = vpack.c.b16 %v4916, %v4915
      %v4943 = vpack.c.b16 %v4918, %v4917
      %v4944 = vpack.c.b16 %v4920, %v4919
      %v4945 = vpack.c.b16 %v4922, %v4921
      %v4946 = vpack.c.b16 %v4924, %v4923
      %v4947 = vpack.c.b16 %v4926, %v4925
      %v4948 = vpack.c.b16 %v4928, %v4927
      %v4949 = vpack.c.b16 %v4930, %v4929
      %v4950 = vpack.c.b16 %v4932, %v4931
      %v4951 = vpack.c.b16 %v4934, %v4933
      %v4952 = vpack.c.b16 %v4936, %v4935
      %4953 = vrot.lane.b32.xlu0 %v4937, 48
      %v4954 = vpop.permute.xlu0 %4953
      %4955 = vrot.lane.b32.xlu0 %v4938, 48
      %v4956 = vpop.permute.xlu0 %4955
      %4957 = vrot.lane.b32.xlu0 %v4939, 48
      %v4958 = vpop.permute.xlu0 %4957
      %4959 = vrot.lane.b32.xlu0 %v4940, 48
      %v4960 = vpop.permute.xlu0 %4959
      %4961 = vrot.lane.b32.xlu0 %v4941, 48
      %v4962 = vpop.permute.xlu0 %4961
      %4963 = vrot.lane.b32.xlu0 %v4942, 48
      %v4964 = vpop.permute.xlu0 %4963
      %4965 = vrot.lane.b32.xlu0 %v4943, 48
      %v4966 = vpop.permute.xlu0 %4965
      %4967 = vrot.lane.b32.xlu0 %v4944, 48
      %v4968 = vpop.permute.xlu0 %4967
      %4969 = vrot.lane.b32.xlu0 %v4945, 48
      %v4970 = vpop.permute.xlu0 %4969
      %4971 = vrot.lane.b32.xlu0 %v4946, 48
      %v4972 = vpop.permute.xlu0 %4971
      %4973 = vrot.lane.b32.xlu0 %v4947, 48
      %v4974 = vpop.permute.xlu0 %4973
      %4975 = vrot.lane.b32.xlu0 %v4948, 48
      %v4976 = vpop.permute.xlu0 %4975
      %4977 = vrot.lane.b32.xlu0 %v4949, 48
      %v4978 = vpop.permute.xlu0 %4977
      %4979 = vrot.lane.b32.xlu0 %v4950, 48
      %v4980 = vpop.permute.xlu0 %4979
      %4981 = vrot.lane.b32.xlu0 %v4951, 48
      %v4982 = vpop.permute.xlu0 %4981
      %4983 = vrot.lane.b32.xlu0 %v4952, 48
      %v4984 = vpop.permute.xlu0 %4983
      %v5001 = vunpack.c.l.b16 %v3849
      %v5002 = vunpack.c.l.b16 %v3850
      %v5003 = vunpack.c.l.b16 %v3851
      %v5004 = vunpack.c.l.b16 %v3852
      %v5005 = vunpack.c.l.b16 %v3853
      %v5006 = vunpack.c.l.b16 %v3854
      %v5007 = vunpack.c.l.b16 %v3855
      %v5008 = vunpack.c.l.b16 %v3856
      %v5009 = vunpack.c.l.b16 %v3857
      %v5010 = vunpack.c.l.b16 %v3858
      %v5011 = vunpack.c.l.b16 %v3859
      %v5012 = vunpack.c.l.b16 %v3860
      %v5013 = vunpack.c.l.b16 %v3861
      %v5014 = vunpack.c.l.b16 %v3862
      %v5015 = vunpack.c.l.b16 %v3863
      %v5016 = vunpack.c.l.b16 %v3864
      %v5017 = vpack.c.b16 %v5001, %v5001
      %v5018 = vpack.c.b16 %v5002, %v5002
      %v5019 = vpack.c.b16 %v5003, %v5003
      %v5020 = vpack.c.b16 %v5004, %v5004
      %v5021 = vpack.c.b16 %v5005, %v5005
      %v5022 = vpack.c.b16 %v5006, %v5006
      %v5023 = vpack.c.b16 %v5007, %v5007
      %v5024 = vpack.c.b16 %v5008, %v5008
      %v5025 = vpack.c.b16 %v5009, %v5009
      %v5026 = vpack.c.b16 %v5010, %v5010
      %v5027 = vpack.c.b16 %v5011, %v5011
      %v5028 = vpack.c.b16 %v5012, %v5012
      %v5029 = vpack.c.b16 %v5013, %v5013
      %v5030 = vpack.c.b16 %v5014, %v5014
      %v5031 = vpack.c.b16 %v5015, %v5015
      %v5032 = vpack.c.b16 %v5016, %v5016
      %v5034 = vshrl.u32 %v4937, 16
      %v5036 = vshll.u32 %v4937, 16
      %v5038 = vrot.slane %v5036, 1
      %v5039 = vor.u32 %v5034, %v5038
      %v5041 = vshll.u32 %v5017, 16
      %v5043 = vrot.slane %v5041, 1
      %v5044 = vsel %vm1138, %v5039, %v5043
      %v5046 = vshrl.u32 %v4938, 16
      %v5048 = vshll.u32 %v4938, 16
      %v5050 = vrot.slane %v5048, 1
      %v5051 = vor.u32 %v5046, %v5050
      %v5053 = vshll.u32 %v5018, 16
      %v5055 = vrot.slane %v5053, 1
      %v5056 = vsel %vm1138, %v5051, %v5055
      %v5058 = vshrl.u32 %v4939, 16
      %v5060 = vshll.u32 %v4939, 16
      %v5062 = vrot.slane %v5060, 1
      %v5063 = vor.u32 %v5058, %v5062
      %v5065 = vshll.u32 %v5019, 16
      %v5067 = vrot.slane %v5065, 1
      %v5068 = vsel %vm1138, %v5063, %v5067
      %v5070 = vshrl.u32 %v4940, 16
      %v5072 = vshll.u32 %v4940, 16
      %v5074 = vrot.slane %v5072, 1
      %v5075 = vor.u32 %v5070, %v5074
      %v5077 = vshll.u32 %v5020, 16
      %v5079 = vrot.slane %v5077, 1
      %v5080 = vsel %vm1138, %v5075, %v5079
      %v5082 = vshrl.u32 %v4941, 16
      %v5084 = vshll.u32 %v4941, 16
      %v5086 = vrot.slane %v5084, 1
      %v5087 = vor.u32 %v5082, %v5086
      %v5089 = vshll.u32 %v5021, 16
      %v5091 = vrot.slane %v5089, 1
      %v5092 = vsel %vm1138, %v5087, %v5091
      %v5094 = vshrl.u32 %v4942, 16
      %v5096 = vshll.u32 %v4942, 16
      %v5098 = vrot.slane %v5096, 1
      %v5099 = vor.u32 %v5094, %v5098
      %v5101 = vshll.u32 %v5022, 16
      %v5103 = vrot.slane %v5101, 1
      %v5104 = vsel %vm1138, %v5099, %v5103
      %v5106 = vshrl.u32 %v4943, 16
      %v5108 = vshll.u32 %v4943, 16
      %v5110 = vrot.slane %v5108, 1
      %v5111 = vor.u32 %v5106, %v5110
      %v5113 = vshll.u32 %v5023, 16
      %v5115 = vrot.slane %v5113, 1
      %v5116 = vsel %vm1138, %v5111, %v5115
      %v5118 = vshrl.u32 %v4944, 16
      %v5120 = vshll.u32 %v4944, 16
      %v5122 = vrot.slane %v5120, 1
      %v5123 = vor.u32 %v5118, %v5122
      %v5125 = vshll.u32 %v5024, 16
      %v5127 = vrot.slane %v5125, 1
      %v5128 = vsel %vm1138, %v5123, %v5127
      %v5130 = vshrl.u32 %v4945, 16
      %v5132 = vshll.u32 %v4945, 16
      %v5134 = vrot.slane %v5132, 1
      %v5135 = vor.u32 %v5130, %v5134
      %v5137 = vshll.u32 %v5025, 16
      %v5139 = vrot.slane %v5137, 1
      %v5140 = vsel %vm1138, %v5135, %v5139
      %v5142 = vshrl.u32 %v4946, 16
      %v5144 = vshll.u32 %v4946, 16
      %v5146 = vrot.slane %v5144, 1
      %v5147 = vor.u32 %v5142, %v5146
      %v5149 = vshll.u32 %v5026, 16
      %v5151 = vrot.slane %v5149, 1
      %v5152 = vsel %vm1138, %v5147, %v5151
      %v5154 = vshrl.u32 %v4947, 16
      %v5156 = vshll.u32 %v4947, 16
      %v5158 = vrot.slane %v5156, 1
      %v5159 = vor.u32 %v5154, %v5158
      %v5161 = vshll.u32 %v5027, 16
      %v5163 = vrot.slane %v5161, 1
      %v5164 = vsel %vm1138, %v5159, %v5163
      %v5166 = vshrl.u32 %v4948, 16
      %v5168 = vshll.u32 %v4948, 16
      %v5170 = vrot.slane %v5168, 1
      %v5171 = vor.u32 %v5166, %v5170
      %v5173 = vshll.u32 %v5028, 16
      %v5175 = vrot.slane %v5173, 1
      %v5176 = vsel %vm1138, %v5171, %v5175
      %v5178 = vshrl.u32 %v4949, 16
      %v5180 = vshll.u32 %v4949, 16
      %v5182 = vrot.slane %v5180, 1
      %v5183 = vor.u32 %v5178, %v5182
      %v5185 = vshll.u32 %v5029, 16
      %v5187 = vrot.slane %v5185, 1
      %v5188 = vsel %vm1138, %v5183, %v5187
      %v5190 = vshrl.u32 %v4950, 16
      %v5192 = vshll.u32 %v4950, 16
      %v5194 = vrot.slane %v5192, 1
      %v5195 = vor.u32 %v5190, %v5194
      %v5197 = vshll.u32 %v5030, 16
      %v5199 = vrot.slane %v5197, 1
      %v5200 = vsel %vm1138, %v5195, %v5199
      %v5202 = vshrl.u32 %v4951, 16
      %v5204 = vshll.u32 %v4951, 16
      %v5206 = vrot.slane %v5204, 1
      %v5207 = vor.u32 %v5202, %v5206
      %v5209 = vshll.u32 %v5031, 16
      %v5211 = vrot.slane %v5209, 1
      %v5212 = vsel %vm1138, %v5207, %v5211
      %v5214 = vshrl.u32 %v4952, 16
      %v5216 = vshll.u32 %v4952, 16
      %v5218 = vrot.slane %v5216, 1
      %v5219 = vor.u32 %v5214, %v5218
      %v5221 = vshll.u32 %v5032, 16
      %v5223 = vrot.slane %v5221, 1
      %v5224 = vsel %vm1138, %v5219, %v5223
      %5225 = vrot.lane.b32.xlu0 %v5044, 56
      %v5226 = vpop.permute.xlu0 %5225
      %5227 = vrot.lane.b32.xlu0 %v5056, 56
      %v5228 = vpop.permute.xlu0 %5227
      %5229 = vrot.lane.b32.xlu0 %v5068, 56
      %v5230 = vpop.permute.xlu0 %5229
      %5231 = vrot.lane.b32.xlu0 %v5080, 56
      %v5232 = vpop.permute.xlu0 %5231
      %5233 = vrot.lane.b32.xlu0 %v5092, 56
      %v5234 = vpop.permute.xlu0 %5233
      %5235 = vrot.lane.b32.xlu0 %v5104, 56
      %v5236 = vpop.permute.xlu0 %5235
      %5237 = vrot.lane.b32.xlu0 %v5116, 56
      %v5238 = vpop.permute.xlu0 %5237
      %5239 = vrot.lane.b32.xlu0 %v5128, 56
      %v5240 = vpop.permute.xlu0 %5239
      %5241 = vrot.lane.b32.xlu0 %v5140, 56
      %v5242 = vpop.permute.xlu0 %5241
      %5243 = vrot.lane.b32.xlu0 %v5152, 56
      %v5244 = vpop.permute.xlu0 %5243
      %5245 = vrot.lane.b32.xlu0 %v5164, 56
      %v5246 = vpop.permute.xlu0 %5245
      %5247 = vrot.lane.b32.xlu0 %v5176, 56
      %v5248 = vpop.permute.xlu0 %5247
      %5249 = vrot.lane.b32.xlu0 %v5188, 56
      %v5250 = vpop.permute.xlu0 %5249
      %5251 = vrot.lane.b32.xlu0 %v5200, 56
      %v5252 = vpop.permute.xlu0 %5251
      %5253 = vrot.lane.b32.xlu0 %v5212, 56
      %v5254 = vpop.permute.xlu0 %5253
      %5255 = vrot.lane.b32.xlu0 %v5224, 56
      %v5256 = vpop.permute.xlu0 %5255
      %v5273 = vunpack.c.l.b16 %v3865
      %v5274 = vunpack.c.l.b16 %v3866
      %v5275 = vunpack.c.l.b16 %v3867
      %v5276 = vunpack.c.l.b16 %v3868
      %v5277 = vunpack.c.l.b16 %v3869
      %v5278 = vunpack.c.l.b16 %v3870
      %v5279 = vunpack.c.l.b16 %v3871
      %v5280 = vunpack.c.l.b16 %v3872
      %v5281 = vunpack.c.l.b16 %v3873
      %v5282 = vunpack.c.l.b16 %v3874
      %v5283 = vunpack.c.l.b16 %v3875
      %v5284 = vunpack.c.l.b16 %v3876
      %v5285 = vunpack.c.l.b16 %v3877
      %v5286 = vunpack.c.l.b16 %v3878
      %v5287 = vunpack.c.l.b16 %v3879
      %v5288 = vunpack.c.l.b16 %v3880
      %v5289 = vpack.c.b16 %v4906, %v5273
      %v5290 = vpack.c.b16 %v4908, %v5274
      %v5291 = vpack.c.b16 %v4910, %v5275
      %v5292 = vpack.c.b16 %v4912, %v5276
      %v5293 = vpack.c.b16 %v4914, %v5277
      %v5294 = vpack.c.b16 %v4916, %v5278
      %v5295 = vpack.c.b16 %v4918, %v5279
      %v5296 = vpack.c.b16 %v4920, %v5280
      %v5297 = vpack.c.b16 %v4922, %v5281
      %v5298 = vpack.c.b16 %v4924, %v5282
      %v5299 = vpack.c.b16 %v4926, %v5283
      %v5300 = vpack.c.b16 %v4928, %v5284
      %v5301 = vpack.c.b16 %v4930, %v5285
      %v5302 = vpack.c.b16 %v4932, %v5286
      %v5303 = vpack.c.b16 %v4934, %v5287
      %v5304 = vpack.c.b16 %v4936, %v5288
      %v5305 = vrot.slane %v5289, 1
      %v5306 = vrot.slane %v5017, 1
      %v5307 = vsel %vm1411, %v5305, %v5306
      %v5308 = vrot.slane %v5290, 1
      %v5309 = vrot.slane %v5018, 1
      %v5310 = vsel %vm1411, %v5308, %v5309
      %v5311 = vrot.slane %v5291, 1
      %v5312 = vrot.slane %v5019, 1
      %v5313 = vsel %vm1411, %v5311, %v5312
      %v5314 = vrot.slane %v5292, 1
      %v5315 = vrot.slane %v5020, 1
      %v5316 = vsel %vm1411, %v5314, %v5315
      %v5317 = vrot.slane %v5293, 1
      %v5318 = vrot.slane %v5021, 1
      %v5319 = vsel %vm1411, %v5317, %v5318
      %v5320 = vrot.slane %v5294, 1
      %v5321 = vrot.slane %v5022, 1
      %v5322 = vsel %vm1411, %v5320, %v5321
      %v5323 = vrot.slane %v5295, 1
      %v5324 = vrot.slane %v5023, 1
      %v5325 = vsel %vm1411, %v5323, %v5324
      %v5326 = vrot.slane %v5296, 1
      %v5327 = vrot.slane %v5024, 1
      %v5328 = vsel %vm1411, %v5326, %v5327
      %v5329 = vrot.slane %v5297, 1
      %v5330 = vrot.slane %v5025, 1
      %v5331 = vsel %vm1411, %v5329, %v5330
      %v5332 = vrot.slane %v5298, 1
      %v5333 = vrot.slane %v5026, 1
      %v5334 = vsel %vm1411, %v5332, %v5333
      %v5335 = vrot.slane %v5299, 1
      %v5336 = vrot.slane %v5027, 1
      %v5337 = vsel %vm1411, %v5335, %v5336
      %v5338 = vrot.slane %v5300, 1
      %v5339 = vrot.slane %v5028, 1
      %v5340 = vsel %vm1411, %v5338, %v5339
      %v5341 = vrot.slane %v5301, 1
      %v5342 = vrot.slane %v5029, 1
      %v5343 = vsel %vm1411, %v5341, %v5342
      %v5344 = vrot.slane %v5302, 1
      %v5345 = vrot.slane %v5030, 1
      %v5346 = vsel %vm1411, %v5344, %v5345
      %v5347 = vrot.slane %v5303, 1
      %v5348 = vrot.slane %v5031, 1
      %v5349 = vsel %vm1411, %v5347, %v5348
      %v5350 = vrot.slane %v5304, 1
      %v5351 = vrot.slane %v5032, 1
      %v5352 = vsel %vm1411, %v5350, %v5351
      %5353 = vrot.lane.b32.xlu0 %v5307, 64
      %v5354 = vpop.permute.xlu0 %5353
      %5355 = vrot.lane.b32.xlu0 %v5310, 64
      %v5356 = vpop.permute.xlu0 %5355
      %5357 = vrot.lane.b32.xlu0 %v5313, 64
      %v5358 = vpop.permute.xlu0 %5357
      %5359 = vrot.lane.b32.xlu0 %v5316, 64
      %v5360 = vpop.permute.xlu0 %5359
      %5361 = vrot.lane.b32.xlu0 %v5319, 64
      %v5362 = vpop.permute.xlu0 %5361
      %5363 = vrot.lane.b32.xlu0 %v5322, 64
      %v5364 = vpop.permute.xlu0 %5363
      %5365 = vrot.lane.b32.xlu0 %v5325, 64
      %v5366 = vpop.permute.xlu0 %5365
      %5367 = vrot.lane.b32.xlu0 %v5328, 64
      %v5368 = vpop.permute.xlu0 %5367
      %5369 = vrot.lane.b32.xlu0 %v5331, 64
      %v5370 = vpop.permute.xlu0 %5369
      %5371 = vrot.lane.b32.xlu0 %v5334, 64
      %v5372 = vpop.permute.xlu0 %5371
      %5373 = vrot.lane.b32.xlu0 %v5337, 64
      %v5374 = vpop.permute.xlu0 %5373
      %5375 = vrot.lane.b32.xlu0 %v5340, 64
      %v5376 = vpop.permute.xlu0 %5375
      %5377 = vrot.lane.b32.xlu0 %v5343, 64
      %v5378 = vpop.permute.xlu0 %5377
      %5379 = vrot.lane.b32.xlu0 %v5346, 64
      %v5380 = vpop.permute.xlu0 %5379
      %5381 = vrot.lane.b32.xlu0 %v5349, 64
      %v5382 = vpop.permute.xlu0 %5381
      %5383 = vrot.lane.b32.xlu0 %v5352, 64
      %v5384 = vpop.permute.xlu0 %5383
      %v5386 = vsel %vm2549, %v3945, %v4202
      %v5388 = vsel %vm2549, %v3946, %v4204
      %v5390 = vsel %vm2549, %v3947, %v4206
      %v5392 = vsel %vm2549, %v3948, %v4208
      %v5394 = vsel %vm2549, %v3949, %v4210
      %v5396 = vsel %vm2549, %v3950, %v4212
      %v5398 = vsel %vm2549, %v3951, %v4214
      %v5400 = vsel %vm2549, %v3952, %v4216
      %v5402 = vsel %vm2549, %v3953, %v4218
      %v5404 = vsel %vm2549, %v3954, %v4220
      %v5406 = vsel %vm2549, %v3955, %v4222
      %v5408 = vsel %vm2549, %v3956, %v4224
      %v5410 = vsel %vm2549, %v3957, %v4226
      %v5412 = vsel %vm2549, %v3958, %v4228
      %v5414 = vsel %vm2549, %v3959, %v4230
      %v5416 = vsel %vm2549, %v3960, %v4232
      %v5418 = vsel %vm2615, %v5386, %v4330
      %v5420 = vsel %vm2615, %v5388, %v4332
      %v5422 = vsel %vm2615, %v5390, %v4334
      %v5424 = vsel %vm2615, %v5392, %v4336
      %v5426 = vsel %vm2615, %v5394, %v4338
      %v5428 = vsel %vm2615, %v5396, %v4340
      %v5430 = vsel %vm2615, %v5398, %v4342
      %v5432 = vsel %vm2615, %v5400, %v4344
      %v5434 = vsel %vm2615, %v5402, %v4346
      %v5436 = vsel %vm2615, %v5404, %v4348
      %v5438 = vsel %vm2615, %v5406, %v4350
      %v5440 = vsel %vm2615, %v5408, %v4352
      %v5442 = vsel %vm2615, %v5410, %v4354
      %v5444 = vsel %vm2615, %v5412, %v4356
      %v5446 = vsel %vm2615, %v5414, %v4358
      %v5448 = vsel %vm2615, %v5416, %v4360
      %v5450 = vsel %vm2681, %v5418, %v4442
      %v5452 = vsel %vm2681, %v5420, %v4444
      %v5454 = vsel %vm2681, %v5422, %v4446
      %v5456 = vsel %vm2681, %v5424, %v4448
      %v5458 = vsel %vm2681, %v5426, %v4450
      %v5460 = vsel %vm2681, %v5428, %v4452
      %v5462 = vsel %vm2681, %v5430, %v4454
      %v5464 = vsel %vm2681, %v5432, %v4456
      %v5466 = vsel %vm2681, %v5434, %v4458
      %v5468 = vsel %vm2681, %v5436, %v4460
      %v5470 = vsel %vm2681, %v5438, %v4462
      %v5472 = vsel %vm2681, %v5440, %v4464
      %v5474 = vsel %vm2681, %v5442, %v4466
      %v5476 = vsel %vm2681, %v5444, %v4468
      %v5478 = vsel %vm2681, %v5446, %v4470
      %v5480 = vsel %vm2681, %v5448, %v4472
      %v5482 = vsel %vm2747, %v5450, %v4714
      %v5484 = vsel %vm2747, %v5452, %v4716
      %v5486 = vsel %vm2747, %v5454, %v4718
      %v5488 = vsel %vm2747, %v5456, %v4720
      %v5490 = vsel %vm2747, %v5458, %v4722
      %v5492 = vsel %vm2747, %v5460, %v4724
      %v5494 = vsel %vm2747, %v5462, %v4726
      %v5496 = vsel %vm2747, %v5464, %v4728
      %v5498 = vsel %vm2747, %v5466, %v4730
      %v5500 = vsel %vm2747, %v5468, %v4732
      %v5502 = vsel %vm2747, %v5470, %v4734
      %v5504 = vsel %vm2747, %v5472, %v4736
      %v5506 = vsel %vm2747, %v5474, %v4738
      %v5508 = vsel %vm2747, %v5476, %v4740
      %v5510 = vsel %vm2747, %v5478, %v4742
      %v5512 = vsel %vm2747, %v5480, %v4744
      %vm5513 = vcmask 326656
      %v5515 = vsel %vm5513, %v5482, %v4842
      %v5517 = vsel %vm5513, %v5484, %v4844
      %v5519 = vsel %vm5513, %v5486, %v4846
      %v5521 = vsel %vm5513, %v5488, %v4848
      %v5523 = vsel %vm5513, %v5490, %v4850
      %v5525 = vsel %vm5513, %v5492, %v4852
      %v5527 = vsel %vm5513, %v5494, %v4854
      %v5529 = vsel %vm5513, %v5496, %v4856
      %v5531 = vsel %vm5513, %v5498, %v4858
      %v5533 = vsel %vm5513, %v5500, %v4860
      %v5535 = vsel %vm5513, %v5502, %v4862
      %v5537 = vsel %vm5513, %v5504, %v4864
      %v5539 = vsel %vm5513, %v5506, %v4866
      %v5541 = vsel %vm5513, %v5508, %v4868
      %v5543 = vsel %vm5513, %v5510, %v4870
      %v5545 = vsel %vm5513, %v5512, %v4872
      %vm5546 = vcmask 392192
      %v5548 = vsel %vm5546, %v5515, %v4954
      %v5550 = vsel %vm5546, %v5517, %v4956
      %v5552 = vsel %vm5546, %v5519, %v4958
      %v5554 = vsel %vm5546, %v5521, %v4960
      %v5556 = vsel %vm5546, %v5523, %v4962
      %v5558 = vsel %vm5546, %v5525, %v4964
      %v5560 = vsel %vm5546, %v5527, %v4966
      %v5562 = vsel %vm5546, %v5529, %v4968
      %v5564 = vsel %vm5546, %v5531, %v4970
      %v5566 = vsel %vm5546, %v5533, %v4972
      %v5568 = vsel %vm5546, %v5535, %v4974
      %v5570 = vsel %vm5546, %v5537, %v4976
      %v5572 = vsel %vm5546, %v5539, %v4978
      %v5574 = vsel %vm5546, %v5541, %v4980
      %v5576 = vsel %vm5546, %v5543, %v4982
      %v5578 = vsel %vm5546, %v5545, %v4984
      %vm5579 = vcmask 457728
      %v5581 = vsel %vm5579, %v5548, %v5226
      %v5583 = vsel %vm5579, %v5550, %v5228
      %v5585 = vsel %vm5579, %v5552, %v5230
      %v5587 = vsel %vm5579, %v5554, %v5232
      %v5589 = vsel %vm5579, %v5556, %v5234
      %v5591 = vsel %vm5579, %v5558, %v5236
      %v5593 = vsel %vm5579, %v5560, %v5238
      %v5595 = vsel %vm5579, %v5562, %v5240
      %v5597 = vsel %vm5579, %v5564, %v5242
      %v5599 = vsel %vm5579, %v5566, %v5244
      %v5601 = vsel %vm5579, %v5568, %v5246
      %v5603 = vsel %vm5579, %v5570, %v5248
      %v5605 = vsel %vm5579, %v5572, %v5250
      %v5607 = vsel %vm5579, %v5574, %v5252
      %v5609 = vsel %vm5579, %v5576, %v5254
      %v5611 = vsel %vm5579, %v5578, %v5256
      %vm5612 = vcmask 523264
      %v5614 = vsel %vm5612, %v5581, %v5354
      %v5616 = vsel %vm5612, %v5583, %v5356
      %v5618 = vsel %vm5612, %v5585, %v5358
      %v5620 = vsel %vm5612, %v5587, %v5360
      %v5622 = vsel %vm5612, %v5589, %v5362
      %v5624 = vsel %vm5612, %v5591, %v5364
      %v5626 = vsel %vm5612, %v5593, %v5366
      %v5628 = vsel %vm5612, %v5595, %v5368
      %v5630 = vsel %vm5612, %v5597, %v5370
      %v5632 = vsel %vm5612, %v5599, %v5372
      %v5634 = vsel %vm5612, %v5601, %v5374
      %v5636 = vsel %vm5612, %v5603, %v5376
      %v5638 = vsel %vm5612, %v5605, %v5378
      %v5640 = vsel %vm5612, %v5607, %v5380
      %v5642 = vsel %vm5612, %v5609, %v5382
      %v5644 = vsel %vm5612, %v5611, %v5384
      %v5645 = vld [vmem:[%s3] sm:$0xf]
      %v5646 = vld [vmem:[%s3 + $0x4] sm:$0xf]
      %v5647 = vld [vmem:[%s3 + $0x8] sm:$0xf]
      %v5648 = vld [vmem:[%s3 + $0xc] sm:$0xf]
      %v5649 = vld [vmem:[%s3 + $0x10] sm:$0xf]
      %v5650 = vld [vmem:[%s3 + $0x14] sm:$0xf]
      %v5651 = vld [vmem:[%s3 + $0x18] sm:$0xf]
      %v5652 = vld [vmem:[%s3 + $0x1c] sm:$0xf]
      %v5653 = vld [vmem:[%s3 + $0x20] sm:$0xf]
      %v5654 = vld [vmem:[%s4] sm:$0x1]
      %v5656 = vlaneseq
      %v5657 = vshrl.u32 %v5656, 7
      %v5658 = vsub.s32 0, %v5657
      %v5659 = vrot.slane %v5654, %v5658
      %v5670 = vunpack.c.l.b16 %v5645
      %v5671 = vunpack.c.l.b16 %v5646
      %v5672 = vunpack.c.l.b16 %v5647
      %v5673 = vunpack.c.l.b16 %v5648
      %v5674 = vunpack.c.l.b16 %v5649
      %v5675 = vunpack.c.l.b16 %v5650
      %v5676 = vunpack.c.l.b16 %v5651
      %v5677 = vunpack.c.l.b16 %v5652
      %v5678 = vunpack.c.l.b16 %v5653
      %v5679 = vpack.c.b16 %v5671, %v5670
      %v5680 = vpack.c.b16 %v5673, %v5672
      %v5681 = vpack.c.b16 %v5675, %v5674
      %v5682 = vpack.c.b16 %v5677, %v5676
      %v5683 = vpack.c.b16 %v5678, %v5678
      %vm5688 = vcmask 588800
      %v5689 = vsel %vm5688, %v5614, 0
      %v5691 = vsel %vm5688, %v5616, 0
      %v5693 = vsel %vm5688, %v5618, 0
      %v5695 = vsel %vm5688, %v5620, 0
      %v5697 = vsel %vm5688, %v5622, 0
      %v5699 = vsel %vm5688, %v5624, 0
      %v5701 = vsel %vm5688, %v5626, 0
      %v5703 = vsel %vm5688, %v5628, 0
      %v5705 = vsel %vm5688, %v5630, 0
      %v5707 = vsel %vm5688, %v5632, 0
      %v5709 = vsel %vm5688, %v5634, 0
      %v5711 = vsel %vm5688, %v5636, 0
      %v5713 = vsel %vm5688, %v5638, 0
      %v5715 = vsel %vm5688, %v5640, 0
      %v5717 = vsel %vm5688, %v5642, 0
      %v5719 = vsel %vm5688, %v5644, 0
      %vm5721 = vcmask 1043456
      %v5723 = vsel %vm5721, %v5683, 0
      %5725 = vmatprep.subr.bf16.mxu0 0
      %5726 = vmatpush1.bf16.msra.mxu0 0
      %5727 = vmatprep.subr.bf16.mxu0 0
      %5728 = vmatpush1.bf16.msra.mxu0 0
      %5729 = vmatprep.subr.bf16.mxu0 0
      %5730 = vmatpush1.bf16.msra.mxu0 0
      %5731 = vmatprep.subr.bf16.mxu0 0
      %5732 = vmatpush1.bf16.msra.mxu0 %v5723
      %5733 = vmatprep.subr.bf16.mxu0 0
      %5734 = vmatpush1.bf16.msra.mxu0 %v5682
      %5735 = vmatprep.subr.bf16.mxu0 0
      %5736 = vmatpush1.bf16.msra.mxu0 %v5681
      %5737 = vmatprep.subr.bf16.mxu0 0
      %5738 = vmatpush1.bf16.msra.mxu0 %v5680
      %5739 = vmatprep.subr.bf16.mxu0 0
      %5740 = vmatpush1.bf16.msra.mxu0 %v5679
      %5741 = vmatprep.subr.bf16.mxu0 0
      %5742 = vmatpush2.bf16.msra.mxu0 0
      %5743 = vmatprep.subr.bf16.mxu0 0
      %5744 = vmatpush2.bf16.msra.mxu0 0
      %5745 = vmatprep.subr.bf16.mxu0 0
      %5746 = vmatpush2.bf16.msra.mxu0 0
      %5747 = vmatprep.subr.bf16.mxu0 0
      %5748 = vmatpush2.bf16.msra.mxu0 0
      %5749 = vmatprep.subr.bf16.mxu0 0
      %5750 = vmatpush2.bf16.msra.mxu0 0
      %5751 = vmatprep.subr.bf16.mxu0 0
      %5752 = vmatpush2.bf16.msra.mxu0 0
      %5753 = vmatprep.subr.bf16.mxu0 0
      %5754 = vmatpush2.bf16.msra.mxu0 0
      %5755 = vmatprep.subr.bf16.mxu0 0
      %5756 = vmatpush2.bf16.msra.mxu0 0
      %5757 = vmatprep.mubr.bf16.mxu0 0
      %5758 = vmatmul.mubr.bf16.gmra.mxu0 %v5689
      %v5759 = vpop.f32.mrf.mxu0
      %v5760 = vadd.f32 %v5659, %v5759
      %v5761 = vpop.f32.mrf.mxu0
      %v5762 = vpop.f32.mrf.mxu0
      %v5763 = vadd.f32 %v5659, %v5762
      %v5764 = vpop.f32.mrf.mxu0
      %5765 = vmatprep.mubr.bf16.mxu0 0
      %5766 = vmatmul.mubr.bf16.gmra.mxu0 %v5691
      %v5767 = vpop.f32.mrf.mxu0
      %v5768 = vadd.f32 %v5659, %v5767
      %v5769 = vpop.f32.mrf.mxu0
      %v5770 = vpop.f32.mrf.mxu0
      %v5771 = vadd.f32 %v5659, %v5770
      %v5772 = vpop.f32.mrf.mxu0
      %5773 = vmatprep.mubr.bf16.mxu0 0
      %5774 = vmatmul.mubr.bf16.gmra.mxu0 %v5693
      %v5775 = vpop.f32.mrf.mxu0
      %v5776 = vadd.f32 %v5659, %v5775
      %v5777 = vpop.f32.mrf.mxu0
      %v5778 = vpop.f32.mrf.mxu0
      %v5779 = vadd.f32 %v5659, %v5778
      %v5780 = vpop.f32.mrf.mxu0
      %5781 = vmatprep.mubr.bf16.mxu0 0
      %5782 = vmatmul.mubr.bf16.gmra.mxu0 %v5695
      %v5783 = vpop.f32.mrf.mxu0
      %v5784 = vadd.f32 %v5659, %v5783
      %v5785 = vpop.f32.mrf.mxu0
      %v5786 = vpop.f32.mrf.mxu0
      %v5787 = vadd.f32 %v5659, %v5786
      %v5788 = vpop.f32.mrf.mxu0
      %5789 = vmatprep.mubr.bf16.mxu0 0
      %5790 = vmatmul.mubr.bf16.gmra.mxu0 %v5697
      %v5791 = vpop.f32.mrf.mxu0
      %v5792 = vadd.f32 %v5659, %v5791
      %v5793 = vpop.f32.mrf.mxu0
      %v5794 = vpop.f32.mrf.mxu0
      %v5795 = vadd.f32 %v5659, %v5794
      %v5796 = vpop.f32.mrf.mxu0
      %5797 = vmatprep.mubr.bf16.mxu0 0
      %5798 = vmatmul.mubr.bf16.gmra.mxu0 %v5699
      %v5799 = vpop.f32.mrf.mxu0
      %v5800 = vadd.f32 %v5659, %v5799
      %v5801 = vpop.f32.mrf.mxu0
      %v5802 = vpop.f32.mrf.mxu0
      %v5803 = vadd.f32 %v5659, %v5802
      %v5804 = vpop.f32.mrf.mxu0
      %5805 = vmatprep.mubr.bf16.mxu0 0
      %5806 = vmatmul.mubr.bf16.gmra.mxu0 %v5701
      %v5807 = vpop.f32.mrf.mxu0
      %v5808 = vadd.f32 %v5659, %v5807
      %v5809 = vpop.f32.mrf.mxu0
      %v5810 = vpop.f32.mrf.mxu0
      %v5811 = vadd.f32 %v5659, %v5810
      %v5812 = vpop.f32.mrf.mxu0
      %5813 = vmatprep.mubr.bf16.mxu0 0
      %5814 = vmatmul.mubr.bf16.gmra.mxu0 %v5703
      %v5815 = vpop.f32.mrf.mxu0
      %v5816 = vadd.f32 %v5659, %v5815
      %v5817 = vpop.f32.mrf.mxu0
      %v5818 = vpop.f32.mrf.mxu0
      %v5819 = vadd.f32 %v5659, %v5818
      %v5820 = vpop.f32.mrf.mxu0
      %5821 = vmatprep.mubr.bf16.mxu0 0
      %5822 = vmatmul.mubr.bf16.gmra.mxu0 %v5705
      %v5823 = vpop.f32.mrf.mxu0
      %v5824 = vadd.f32 %v5659, %v5823
      %v5825 = vpop.f32.mrf.mxu0
      %v5826 = vpop.f32.mrf.mxu0
      %v5827 = vadd.f32 %v5659, %v5826
      %v5828 = vpop.f32.mrf.mxu0
      %5829 = vmatprep.mubr.bf16.mxu0 0
      %5830 = vmatmul.mubr.bf16.gmra.mxu0 %v5707
      %v5831 = vpop.f32.mrf.mxu0
      %v5832 = vadd.f32 %v5659, %v5831
      %v5833 = vpop.f32.mrf.mxu0
      %v5834 = vpop.f32.mrf.mxu0
      %v5835 = vadd.f32 %v5659, %v5834
      %v5836 = vpop.f32.mrf.mxu0
      %5837 = vmatprep.mubr.bf16.mxu0 0
      %5838 = vmatmul.mubr.bf16.gmra.mxu0 %v5709
      %v5839 = vpop.f32.mrf.mxu0
      %v5840 = vadd.f32 %v5659, %v5839
      %v5841 = vpop.f32.mrf.mxu0
      %v5842 = vpop.f32.mrf.mxu0
      %v5843 = vadd.f32 %v5659, %v5842
      %v5844 = vpop.f32.mrf.mxu0
      %5845 = vmatprep.mubr.bf16.mxu0 0
      %5846 = vmatmul.mubr.bf16.gmra.mxu0 %v5711
      %v5847 = vpop.f32.mrf.mxu0
      %v5848 = vadd.f32 %v5659, %v5847
      %v5849 = vpop.f32.mrf.mxu0
      %v5850 = vpop.f32.mrf.mxu0
      %v5851 = vadd.f32 %v5659, %v5850
      %v5852 = vpop.f32.mrf.mxu0
      %5853 = vmatprep.mubr.bf16.mxu0 0
      %5854 = vmatmul.mubr.bf16.gmra.mxu0 %v5713
      %v5855 = vpop.f32.mrf.mxu0
      %v5856 = vadd.f32 %v5659, %v5855
      %v5857 = vpop.f32.mrf.mxu0
      %v5858 = vpop.f32.mrf.mxu0
      %v5859 = vadd.f32 %v5659, %v5858
      %v5860 = vpop.f32.mrf.mxu0
      %5861 = vmatprep.mubr.bf16.mxu0 0
      %5862 = vmatmul.mubr.bf16.gmra.mxu0 %v5715
      %v5863 = vpop.f32.mrf.mxu0
      %v5864 = vadd.f32 %v5659, %v5863
      %v5865 = vpop.f32.mrf.mxu0
      %v5866 = vpop.f32.mrf.mxu0
      %v5867 = vadd.f32 %v5659, %v5866
      %v5868 = vpop.f32.mrf.mxu0
      %5869 = vmatprep.mubr.bf16.mxu0 0
      %5870 = vmatmul.mubr.bf16.gmra.mxu0 %v5717
      %v5871 = vpop.f32.mrf.mxu0
      %v5872 = vadd.f32 %v5659, %v5871
      %v5873 = vpop.f32.mrf.mxu0
      %v5874 = vpop.f32.mrf.mxu0
      %v5875 = vadd.f32 %v5659, %v5874
      %v5876 = vpop.f32.mrf.mxu0
      %5877 = vmatprep.mubr.bf16.mxu0 0
      %5878 = vmatmul.mubr.bf16.gmra.mxu0 %v5719
      %v5879 = vpop.f32.mrf.mxu0
      %v5880 = vadd.f32 %v5659, %v5879
      %v5881 = vpop.f32.mrf.mxu0
      %v5882 = vpop.f32.mrf.mxu0
      %v5883 = vadd.f32 %v5659, %v5882
      %v5884 = vpop.f32.mrf.mxu0
      %5885 = vdwg.mxu0
      %v5886 = vmax.f32 %v5760, 0.0
      %v5887 = vmax.f32 %v5763, 0.0
      %v5888 = vmax.f32 %v5768, 0.0
      %v5889 = vmax.f32 %v5771, 0.0
      %v5890 = vmax.f32 %v5776, 0.0
      %v5891 = vmax.f32 %v5779, 0.0
      %v5892 = vmax.f32 %v5784, 0.0
      %v5893 = vmax.f32 %v5787, 0.0
      %v5894 = vmax.f32 %v5792, 0.0
      %v5895 = vmax.f32 %v5795, 0.0
      %v5896 = vmax.f32 %v5800, 0.0
      %v5897 = vmax.f32 %v5803, 0.0
      %v5898 = vmax.f32 %v5808, 0.0
      %v5899 = vmax.f32 %v5811, 0.0
      %v5900 = vmax.f32 %v5816, 0.0
      %v5901 = vmax.f32 %v5819, 0.0
      %v5902 = vmax.f32 %v5824, 0.0
      %v5903 = vmax.f32 %v5827, 0.0
      %v5904 = vmax.f32 %v5832, 0.0
      %v5905 = vmax.f32 %v5835, 0.0
      %v5906 = vmax.f32 %v5840, 0.0
      %v5907 = vmax.f32 %v5843, 0.0
      %v5908 = vmax.f32 %v5848, 0.0
      %v5909 = vmax.f32 %v5851, 0.0
      %v5910 = vmax.f32 %v5856, 0.0
      %v5911 = vmax.f32 %v5859, 0.0
      %v5912 = vmax.f32 %v5864, 0.0
      %v5913 = vmax.f32 %v5867, 0.0
      %v5914 = vmax.f32 %v5872, 0.0
      %v5915 = vmax.f32 %v5875, 0.0
      %v5916 = vmax.f32 %v5880, 0.0
      %v5917 = vmax.f32 %v5883, 0.0
      %5918 = vst [vmem:[%s224] sm:$0xff] %v5886
      %5919 = vst [vmem:[%s224 + $0x8] sm:$0xff] %v5887
      %5920 = vst [vmem:[%s224 + $0x10] sm:$0xff] %v5888
      %5921 = vst [vmem:[%s224 + $0x18] sm:$0xff] %v5889
      %5922 = vst [vmem:[%s224 + $0x20] sm:$0xff] %v5890
      %5923 = vst [vmem:[%s224 + $0x28] sm:$0xff] %v5891
      %5924 = vst [vmem:[%s224 + $0x30] sm:$0xff] %v5892
      %5925 = vst [vmem:[%s224 + $0x38] sm:$0xff] %v5893
      %5926 = vst [vmem:[%s224 + $0x40] sm:$0xff] %v5894
      %5927 = vst [vmem:[%s224 + $0x48] sm:$0xff] %v5895
      %5928 = vst [vmem:[%s224 + $0x50] sm:$0xff] %v5896
      %5929 = vst [vmem:[%s224 + $0x58] sm:$0xff] %v5897
      %5930 = vst [vmem:[%s224 + $0x60] sm:$0xff] %v5898
      %5931 = vst [vmem:[%s224 + $0x68] sm:$0xff] %v5899
      %5932 = vst [vmem:[%s224 + $0x70] sm:$0xff] %v5900
      %5933 = vst [vmem:[%s224 + $0x78] sm:$0xff] %v5901
      %5934 = vst [vmem:[%s224 + $0x80] sm:$0xff] %v5902
      %5935 = vst [vmem:[%s224 + $0x88] sm:$0xff] %v5903
      %5936 = vst [vmem:[%s224 + $0x90] sm:$0xff] %v5904
      %5937 = vst [vmem:[%s224 + $0x98] sm:$0xff] %v5905
      %5938 = vst [vmem:[%s224 + $0xa0] sm:$0xff] %v5906
      %5939 = vst [vmem:[%s224 + $0xa8] sm:$0xff] %v5907
      %5940 = vst [vmem:[%s224 + $0xb0] sm:$0xff] %v5908
      %5941 = vst [vmem:[%s224 + $0xb8] sm:$0xff] %v5909
      %5942 = vst [vmem:[%s224 + $0xc0] sm:$0xff] %v5910
      %5943 = vst [vmem:[%s224 + $0xc8] sm:$0xff] %v5911
      %5944 = vst [vmem:[%s224 + $0xd0] sm:$0xff] %v5912
      %5945 = vst [vmem:[%s224 + $0xd8] sm:$0xff] %v5913
      %5946 = vst [vmem:[%s224 + $0xe0] sm:$0xff] %v5914
      %5947 = vst [vmem:[%s224 + $0xe8] sm:$0xff] %v5915
      %5948 = vst [vmem:[%s224 + $0xf0] sm:$0xff] %v5916
      %5949 = vst [vmem:[%s224 + $0xf8] sm:$0xff] %v5917
      %p5950 = scmp.lt.s32.totalorder %s16, 1
      %s5951 = scalar_select %p5950, %s16, 1
      %s5952 = smul.addr %s5951, 32
      %s5953 = smul.addr %s5952, 8
      %s5954 = scalar_lea.vmem %s5, %s5953
      // Predicated region
      $region41: #{double_conv_forward.1} parent=39 // pred_check
        %p5955 = pneg %p144
      $region42: #{double_conv_forward.1} parent=39 // pred_check_branch
        %5957 = sbr.rel (%p5955) target = $region44
      $region43: #{double_conv_forward.1} parent=39 // pred_region
        _
      $region44: #{double_conv_forward.1} parent=39 // pred_fallthru
        _
    $region40: #{double_conv_forward.1} parent=5 // pred_fallthru
      _
    %p5958 = scmp.le.s32.totalorder 2, %s11
    // Predicated region
    $region45: #{double_conv_forward.1} parent=5 // pred_check
      %p5959 = pneg %p5958
    $region46: #{double_conv_forward.1} parent=5 // pred_check_branch
      %5961 = sbr.rel (%p5959) target = $region48
    $region47: #{double_conv_forward.1} parent=5 // pred_region
      %s5962 = ssub.s32 %s11, 2
      // Predicated region
      $region49: #{double_conv_forward.1} parent=47 // pred_check
        %p5963 = pneg %p150
      $region50: #{double_conv_forward.1} parent=47 // pred_check_branch
        %5965 = sbr.rel (%p5963) target = $region52
      $region51: #{double_conv_forward.1} parent=47 // pred_region
        %p5966 = scmp.lt.s32.totalorder %s17, 1
        %s5967 = scalar_select %p5966, %s17, 1
        %s5968 = smul.addr %s5967, 32
        %s5969 = smul.addr %s5968, 8
        %s5970 = scalar_lea.vmem %s5, %s5969
      $region52: #{double_conv_forward.1} parent=47 // pred_fallthru
        _
    $region48: #{double_conv_forward.1} parent=5 // pred_fallthru
      _
  $region6: #{double_conv_forward.1} parent=0 // loop_footer
    %s15 = sadd.s32 1, %s11
  $region7: #{double_conv_forward.1} parent=0 // loop_footer_branch
    %10 = sbr.rel target = $region3
  $region8: #{double_conv_forward.1} parent=0 // loop_exit
    _

</llo_original>
